<compile_context>
chip_gen: v5e
topology: v5e:2x2
jax: 0.10.0
libtpu: 0.0.40
codegen_flags: <defaults>
</compile_context>

<pallas_src>
import math
import functools

import numpy as np
import jax
import jax.numpy as jnp
from jax.experimental import pallas as pl
from jax.experimental.pallas import tpu as pltpu

LN_EPS = 1e-12  # espnet LayerNorm eps (not torch.nn.LayerNorm's 1e-5 default)


# ------------------------------ in-kernel helpers ------------------------------

def _ln(x, g, b):
    mean = jnp.mean(x, axis=-1, keepdims=True)
    var = jnp.mean(jnp.square(x - mean), axis=-1, keepdims=True)
    return (x - mean) * jax.lax.rsqrt(var + LN_EPS) * g + b


# ------------------------------- Pallas kernels --------------------------------

def _decoder_stack_kernel(x_ref, m_ref,
                          g1_ref, bln1_ref, wqkv_ref, bqkv_ref, wo_ref, bo_ref,
                          g2_ref, bln2_ref, w1_ref, b1_ref, w2_ref, b2_ref,
                          o_ref, *, heads, scale):
    """One decoder layer per grid step; layer axis is the last ('arbitrary') grid dim.

    The output block (same index across the layer axis) is the resident accumulator
    holding the running activation for this batch tile.
    """
    l = pl.program_id(1)

    @pl.when(l == 0)
    def _():
        o_ref[...] = x_ref[...]

    Bb, T, D = o_ref.shape
    dk = D // heads

    x = o_ref[...].reshape(Bb * T, D)          # leading-dim merge only (no lane move)
    mask = m_ref[...] > 0.0                    # (Bb, T, T)

    # ---- pre-norm self-attention with fused QKV projection (batch-flattened) ----
    y = _ln(x, g1_ref[0], bln1_ref[0])
    qkv = jnp.dot(y, wqkv_ref[0], preferred_element_type=jnp.float32) + bqkv_ref[0]

    neg = jnp.float32(jnp.finfo(jnp.float32).min)
    attn_out = jnp.zeros((Bb * T, D), jnp.float32)
    for h in range(heads):                     # static unroll over heads
        qh = qkv[:, h * dk:(h + 1) * dk].reshape(Bb, T, dk)
        kh = qkv[:, D + h * dk:D + (h + 1) * dk].reshape(Bb, T, dk)
        vh = qkv[:, 2 * D + h * dk:2 * D + (h + 1) * dk].reshape(Bb, T, dk)
        s = jnp.einsum('btd,bsd->bts', qh, kh,
                       preferred_element_type=jnp.float32) * scale
        s = jnp.where(mask, s, neg)
        s = s - jnp.max(s, axis=-1, keepdims=True)
        p = jnp.exp(s)
        # NOTE: assumes every query row has >=1 unmasked key (true for causal masks);
        # espnet zeroes masked attention weights after softmax, matched here.
        p = p / jnp.sum(p, axis=-1, keepdims=True)
        p = jnp.where(mask, p, 0.0)
        ctx = jnp.einsum('bts,bsd->btd', p, vh,
                         preferred_element_type=jnp.float32).reshape(Bb * T, dk)
        # per-head output projection accumulate (avoids lane-axis concat)
        attn_out = attn_out + jnp.dot(ctx, wo_ref[0, h * dk:(h + 1) * dk, :],
                                      preferred_element_type=jnp.float32)
    x = x + attn_out + bo_ref[0]

    # ---- pre-norm position-wise feed-forward (batch-flattened) ----
    y = _ln(x, g2_ref[0], bln2_ref[0])
    hdn = jnp.dot(y, w1_ref[0], preferred_element_type=jnp.float32) + b1_ref[0]
    hdn = jnp.maximum(hdn, 0.0)
    x = x + jnp.dot(hdn, w2_ref[0], preferred_element_type=jnp.float32) + b2_ref[0]

    o_ref[...] = x.reshape(Bb, T, D)


def _joint_tail_kernel(dec_ref, mem_ref, g_ref, b_ref, wdec_ref,
                       wenc_ref, benc_ref, wout_ref, bout_ref, o_ref):
    """after_norm -> lin_dec, lin_enc, joint tanh, lin_out — fused, one Tin tile."""
    dec = dec_ref[0]                                       # (Tout, D)
    mem = mem_ref[0]                                       # (tile, D)

    dproj = jnp.dot(_ln(dec, g_ref[...], b_ref[...]), wdec_ref[...],
                    preferred_element_type=jnp.float32)    # (Tout, J)
    eproj = jnp.dot(mem, wenc_ref[...],
                    preferred_element_type=jnp.float32) + benc_ref[...]  # (tile, J)

    tile, J = eproj.shape
    Tout = dproj.shape[0]
    h = jnp.tanh(eproj[:, None, :] + dproj[None, :, :])    # (tile, Tout, J)
    h2 = h.reshape(tile * Tout, J)                         # leading-dim merge only
    z = jnp.dot(h2, wout_ref[...],
                preferred_element_type=jnp.float32) + bout_ref[...]      # (tile*Tout, odim)
    o_ref[0] = z.reshape(tile, Tout, -1)


# --------------------------------- wrappers ------------------------------------

def _choose_tile(n, max_tile=128):
    if n <= max_tile:
        return n
    for t in range(max_tile, 0, -1):
        if n % t == 0 and t % 8 == 0:
            return t
    return n


def decoder_stack(x, mask_f, P, heads):
    """All decoder blocks in one pallas_call: grid=(batch_tiles, nblocks)."""
    B, T, D = x.shape
    L = P["wqkv_t"].shape[0]
    U = P["w1_t"].shape[2]
    Bb = B                      # whole (small) batch per block; tile for larger B
    nbt = B // Bb
    scale = 1.0 / math.sqrt(D // heads)

    def lw(shape):              # layer-stacked weight: block (1, *shape), index by l
        return pl.BlockSpec((1,) + shape, lambda bt, l: (l,) + (0,) * len(shape))

    kernel = functools.partial(_decoder_stack_kernel, heads=heads, scale=scale)
    return pl.pallas_call(
        kernel,
        out_shape=jax.ShapeDtypeStruct((B, T, D), jnp.float32),
        grid=(nbt, L),
        in_specs=[
            pl.BlockSpec((Bb, T, D), lambda bt, l: (bt, 0, 0)),   # x (loaded at l==0)
            pl.BlockSpec((Bb, T, T), lambda bt, l: (bt, 0, 0)),   # mask (reused)
            lw((1, D)), lw((1, D)),                                # ln1 gamma/beta
            lw((D, 3 * D)), lw((1, 3 * D)),                        # fused QKV w/b
            lw((D, D)), lw((1, D)),                                # output proj w/b
            lw((1, D)), lw((1, D)),                                # ln2 gamma/beta
            lw((D, U)), lw((1, U)),                                # FFN w1/b1
            lw((U, D)), lw((1, D)),                                # FFN w2/b2
        ],
        out_specs=pl.BlockSpec((Bb, T, D), lambda bt, l: (bt, 0, 0)),
        compiler_params=pltpu.CompilerParams(
            dimension_semantics=("parallel", "arbitrary")),
    )(x, mask_f,
      P["ln1_g"], P["ln1_b"], P["wqkv_t"], P["bqkv"], P["wo_t"], P["bo"],
      P["ln2_g"], P["ln2_b"], P["w1_t"], P["b1"], P["w2_t"], P["b2"])


def joint_tail(dec_x, memory, P):
    """after_norm + lin_dec + lin_enc + joint + lin_out in one pallas_call."""
    B, Tout, D = dec_x.shape
    Tin = memory.shape[1]
    J = P["w_dec_t"].shape[1]
    odim = P["w_out_t"].shape[1]
    tile = _choose_tile(Tin, 128)
    nt = Tin // tile
    return pl.pallas_call(
        _joint_tail_kernel,
        out_shape=jax.ShapeDtypeStruct((B, Tin, Tout, odim), jnp.float32),
        grid=(B, nt),
        in_specs=[
            pl.BlockSpec((1, Tout, D), lambda b, t: (b, 0, 0)),   # decoder output
            pl.BlockSpec((1, tile, D), lambda b, t: (b, t, 0)),   # memory tile
            pl.BlockSpec((1, D), lambda b, t: (0, 0)),            # after_norm gamma
            pl.BlockSpec((1, D), lambda b, t: (0, 0)),            # after_norm beta
            pl.BlockSpec((D, J), lambda b, t: (0, 0)),            # lin_dec W^T
            pl.BlockSpec((D, J), lambda b, t: (0, 0)),            # lin_enc W^T
            pl.BlockSpec((1, J), lambda b, t: (0, 0)),            # lin_enc bias
            pl.BlockSpec((J, odim), lambda b, t: (0, 0)),         # lin_out W^T (no pad)
            pl.BlockSpec((1, odim), lambda b, t: (0, 0)),         # lin_out bias
        ],
        out_specs=pl.BlockSpec((1, tile, Tout, odim), lambda b, t: (b, t, 0, 0)),
        compiler_params=pltpu.CompilerParams(
            dimension_semantics=("parallel", "parallel")),
    )(dec_x, memory.astype(jnp.float32), P["after_g"], P["after_b"],
      P["w_dec_t"], P["w_enc_t"], P["b_enc"], P["w_out_t"], P["b_out"])


# ------------------------------ model definition -------------------------------

def positional_encoding(max_len, d):
    position = np.arange(max_len, dtype=np.float32)[:, None]
    div_term = np.exp(np.arange(0, d, 2, dtype=np.float32) * -(math.log(10000.0) / d))
    pe = np.zeros((max_len, d), dtype=np.float32)
    pe[:, 0::2] = np.sin(position * div_term)
    pe[:, 1::2] = np.cos(position * div_term)[:, : pe[:, 1::2].shape[1]]  # odd-d safe
    return jnp.asarray(pe)


def init_params(key, odim, jdim, adim, units, nblocks):
    """Parameters in torch Linear layout: weight (out, in), bias (out,)."""
    def lin(k, out_d, in_d, scale=0.1):
        kw, kb = jax.random.split(k)
        return (jax.random.normal(kw, (out_d, in_d), jnp.float32) * scale,
                jax.random.normal(kb, (out_d,), jnp.float32) * scale)

    keys = jax.random.split(key, nblocks + 4)
    params = {"embed": jax.random.normal(keys[0], (odim, adim), jnp.float32) * 0.1}
    layers = []
    for i in range(nblocks):
        lk = jax.random.split(keys[1 + i], 6)
        wq, bq = lin(lk[0], adim, adim)
        wk, bk = lin(lk[1], adim, adim)
        wv, bv = lin(lk[2], adim, adim)
        wo, bo = lin(lk[3], adim, adim)
        w1, b1 = lin(lk[4], units, adim)
        w2, b2 = lin(lk[5], adim, units)
        layers.append(dict(wq=wq, bq=bq, wk=wk, bk=bk, wv=wv, bv=bv, wo=wo, bo=bo,
                           w1=w1, b1=b1, w2=w2, b2=b2,
                           ln1_g=jnp.ones((adim,), jnp.float32),
                           ln1_b=jnp.zeros((adim,), jnp.float32),
                           ln2_g=jnp.ones((adim,), jnp.float32),
                           ln2_b=jnp.zeros((adim,), jnp.float32)))
    params["layers"] = layers
    params["after_g"] = jnp.ones((adim,), jnp.float32)
    params["after_b"] = jnp.zeros((adim,), jnp.float32)
    params["w_enc"], params["b_enc"] = lin(keys[nblocks + 1], jdim, adim)
    params["w_dec"], _ = lin(keys[nblocks + 2], jdim, adim)      # lin_dec bias=False
    params["w_out"], params["b_out"] = lin(keys[nblocks + 3], odim, jdim)
    return params


def prepare_params(p, max_len=512):
    """One-time prep: pre-transpose, fuse QKV, stack per-layer weights, build PE."""
    D = p["embed"].shape[1]
    per = []
    for lp in p["layers"]:
        U = lp["w1"].shape[0]
        wqkv = jnp.concatenate([lp["wq"], lp["wk"], lp["wv"]], axis=0)   # (3D, D)
        per.append(dict(
            wqkv_t=jnp.transpose(wqkv),                                  # (D, 3D)
            bqkv=jnp.concatenate([lp["bq"], lp["bk"], lp["bv"]]).reshape(1, 3 * D),
            wo_t=jnp.transpose(lp["wo"]), bo=lp["bo"].reshape(1, D),
            w1_t=jnp.transpose(lp["w1"]), b1=lp["b1"].reshape(1, U),
            w2_t=jnp.transpose(lp["w2"]), b2=lp["b2"].reshape(1, D),
            ln1_g=lp["ln1_g"].reshape(1, D), ln1_b=lp["ln1_b"].reshape(1, D),
            ln2_g=lp["ln2_g"].reshape(1, D), ln2_b=lp["ln2_b"].reshape(1, D)))
    out = {"embed": p["embed"],
           "pe": positional_encoding(max_len, D),
           "after_g": p["after_g"].reshape(1, D),
           "after_b": p["after_b"].reshape(1, D),
           "w_enc_t": jnp.transpose(p["w_enc"]),            # (D, J)
           "b_enc": p["b_enc"].reshape(1, -1),
           "w_dec_t": jnp.transpose(p["w_dec"]),            # (D, J)
           "w_out_t": jnp.transpose(p["w_out"]),            # (J, odim) — true odim, no pad
           "b_out": p["b_out"].reshape(1, -1)}
    for key in per[0]:                                      # stack layers: (L, ...)
        out[key] = jnp.stack([lp[key] for lp in per], axis=0)
    return out


def decoder_forward(params, tgt_ids, tgt_mask, memory, *, heads):
    """Equivalent of Decoder.forward (inference: dropout = identity)."""
    adim = params["embed"].shape[1]
    T = tgt_ids.shape[1]

    # embed + positional encoding (gather + add stay as XLA glue)
    x = jnp.take(params["embed"], tgt_ids, axis=0)                        # (B, T, adim)
    x = x * math.sqrt(adim) + params["pe"][:T][None]

    mask_f = tgt_mask.astype(jnp.float32)                                 # (B, T, T)
    x = decoder_stack(x, mask_f, params, heads)                           # fused stack
    z = joint_tail(x, memory, params)                                     # fused tail
    return z, tgt_mask


# TODO(synk): recognize / recognize_beam / forward_one_step are host-side search loops
# (data-dependent Python control flow) and are not expressed as Pallas kernels.

# ------------------------------------ main --------------------------------------

if __name__ == "__main__":
    B, maxlen_out, maxlen_in = 2, 8, 12
    odim, jdim, adim, heads, units, nblocks = 20, 16, 32, 4, 64, 2

    key = jax.random.PRNGKey(0)
    kp, kt, km = jax.random.split(key, 3)

    params = prepare_params(init_params(kp, odim, jdim, adim, units, nblocks),
                            max_len=maxlen_out)

    tgt = jax.random.randint(kt, (B, maxlen_out), 0, odim, dtype=jnp.int32)
    memory = jax.random.normal(km, (B, maxlen_in, adim), jnp.float32)
    tgt_mask = jnp.tril(jnp.ones((maxlen_out, maxlen_out), dtype=bool))[None]
    tgt_mask = jnp.broadcast_to(tgt_mask, (B, maxlen_out, maxlen_out))

    fwd = jax.jit(functools.partial(decoder_forward, heads=heads))
    z, mask_out = fwd(params, tgt, tgt_mask, memory)
    jax.block_until_ready(z)

    assert z.shape == (B, maxlen_in, maxlen_out, odim)
    assert z.dtype == jnp.float32
    assert mask_out.shape == (B, maxlen_out, maxlen_out)
    assert bool(jnp.all(jnp.isfinite(z)))
    print("KERNEL_OK")
</pallas_src>

<mosaic_0001>
module attributes {stable_mosaic.version = 11 : i64} {
  func.func @_joint_tail_kernel(%arg0: i32, %arg1: i32, %arg2: memref<1x8x32xf32, #tpu.memory_space<vmem>>, %arg3: memref<1x12x32xf32, #tpu.memory_space<vmem>>, %arg4: memref<1x32xf32, #tpu.memory_space<vmem>>, %arg5: memref<1x32xf32, #tpu.memory_space<vmem>>, %arg6: memref<32x16xf32, #tpu.memory_space<vmem>>, %arg7: memref<32x16xf32, #tpu.memory_space<vmem>>, %arg8: memref<1x16xf32, #tpu.memory_space<vmem>>, %arg9: memref<16x20xf32, #tpu.memory_space<vmem>>, %arg10: memref<1x20xf32, #tpu.memory_space<vmem>>, %arg11: memref<1x12x8x20xf32, #tpu.memory_space<vmem>>) attributes {dimension_semantics = [#tpu.dimension_semantics<parallel>, #tpu.dimension_semantics<parallel>], iteration_bounds = array<i64: 2, 1>, scalar_prefetch = 0 : i64, scratch_operands = 0 : i64, tpu.core_type = #tpu.core_type<tc>, window_params = [{transform_indices = @transform_0, window_bounds = array<i64: 1, 8, 32>}, {transform_indices = @transform_1, window_bounds = array<i64: 1, 12, 32>}, {pipeline_mode = #tpu.pipeline_mode<synchronous>, transform_indices = @transform_2, window_bounds = array<i64: 1, 32>}, {pipeline_mode = #tpu.pipeline_mode<synchronous>, transform_indices = @transform_3, window_bounds = array<i64: 1, 32>}, {pipeline_mode = #tpu.pipeline_mode<synchronous>, transform_indices = @transform_4, window_bounds = array<i64: 32, 16>}, {pipeline_mode = #tpu.pipeline_mode<synchronous>, transform_indices = @transform_5, window_bounds = array<i64: 32, 16>}, {pipeline_mode = #tpu.pipeline_mode<synchronous>, transform_indices = @transform_6, window_bounds = array<i64: 1, 16>}, {pipeline_mode = #tpu.pipeline_mode<synchronous>, transform_indices = @transform_7, window_bounds = array<i64: 16, 20>}, {pipeline_mode = #tpu.pipeline_mode<synchronous>, transform_indices = @transform_8, window_bounds = array<i64: 1, 20>}, {transform_indices = @transform_9, window_bounds = array<i64: 1, 12, 8, 20>}]} {
    %c0 = arith.constant 0 : index
    %c0_0 = arith.constant 0 : index
    %c0_1 = arith.constant 0 : index
    %0 = vector.load %arg2[%c0, %c0_0, %c0_1] : memref<1x8x32xf32, #tpu.memory_space<vmem>>, vector<1x8x32xf32>
    %1 = vector.shape_cast %0 : vector<1x8x32xf32> to vector<8x32xf32>
    %c0_2 = arith.constant 0 : index
    %c0_3 = arith.constant 0 : index
    %c0_4 = arith.constant 0 : index
    %2 = vector.load %arg3[%c0_2, %c0_3, %c0_4] : memref<1x12x32xf32, #tpu.memory_space<vmem>>, vector<1x12x32xf32>
    %3 = vector.shape_cast %2 : vector<1x12x32xf32> to vector<12x32xf32>
    %c0_5 = arith.constant 0 : index
    %c0_6 = arith.constant 0 : index
    %4 = vector.load %arg4[%c0_5, %c0_6] : memref<1x32xf32, #tpu.memory_space<vmem>>, vector<1x32xf32>
    %c0_7 = arith.constant 0 : index
    %c0_8 = arith.constant 0 : index
    %5 = vector.load %arg5[%c0_7, %c0_8] : memref<1x32xf32, #tpu.memory_space<vmem>>, vector<1x32xf32>
    %cst = arith.constant dense<0.000000e+00> : vector<8xf32>
    %6 = vector.multi_reduction <add>, %1, %cst [1] : vector<8x32xf32> to vector<8xf32>
    %7 = vector.shape_cast %6 : vector<8xf32> to vector<8x1xf32>
    %cst_9 = arith.constant 3.200000e+01 : f32
    %8 = vector.broadcast %cst_9 : f32 to vector<8x1xf32>
    %9 = arith.divf %7, %8 : vector<8x1xf32>
    %10 = vector.broadcast %9 : vector<8x1xf32> to vector<8x32xf32>
    %11 = arith.subf %1, %10 : vector<8x32xf32>
    %12 = arith.mulf %11, %11 : vector<8x32xf32>
    %cst_10 = arith.constant dense<0.000000e+00> : vector<8xf32>
    %13 = vector.multi_reduction <add>, %12, %cst_10 [1] : vector<8x32xf32> to vector<8xf32>
    %14 = vector.shape_cast %13 : vector<8xf32> to vector<8x1xf32>
    %cst_11 = arith.constant 3.200000e+01 : f32
    %15 = vector.broadcast %cst_11 : f32 to vector<8x1xf32>
    %16 = arith.divf %14, %15 : vector<8x1xf32>
    %17 = vector.broadcast %9 : vector<8x1xf32> to vector<8x32xf32>
    %18 = arith.subf %1, %17 : vector<8x32xf32>
    %cst_12 = arith.constant 9.99999996E-13 : f32
    %19 = vector.broadcast %cst_12 : f32 to vector<8x1xf32>
    %20 = arith.addf %16, %19 : vector<8x1xf32>
    %21 = math.rsqrt %20 : vector<8x1xf32>
    %22 = vector.broadcast %21 : vector<8x1xf32> to vector<8x32xf32>
    %23 = arith.mulf %18, %22 : vector<8x32xf32>
    %24 = vector.broadcast %4 : vector<1x32xf32> to vector<8x32xf32>
    %25 = arith.mulf %23, %24 : vector<8x32xf32>
    %26 = vector.broadcast %5 : vector<1x32xf32> to vector<8x32xf32>
    %27 = arith.addf %25, %26 : vector<8x32xf32>
    %c0_13 = arith.constant 0 : index
    %c0_14 = arith.constant 0 : index
    %28 = vector.load %arg6[%c0_13, %c0_14] : memref<32x16xf32, #tpu.memory_space<vmem>>, vector<32x16xf32>
    %cst_15 = arith.constant dense<0.000000e+00> : vector<8x16xf32>
    %29 = tpu.matmul %27, %28, %cst_15 {dimension_numbers = #tpu.dot_dimension_numbers<[1], [0], [0], [1], [0, 0, 1, 1], [], []>} : vector<8x32xf32>, vector<32x16xf32>, vector<8x16xf32> -> vector<8x16xf32>
    %c0_16 = arith.constant 0 : index
    %c0_17 = arith.constant 0 : index
    %30 = vector.load %arg7[%c0_16, %c0_17] : memref<32x16xf32, #tpu.memory_space<vmem>>, vector<32x16xf32>
    %cst_18 = arith.constant dense<0.000000e+00> : vector<12x16xf32>
    %31 = tpu.matmul %3, %30, %cst_18 {dimension_numbers = #tpu.dot_dimension_numbers<[1], [0], [0], [1], [0, 0, 1, 1], [], []>} : vector<12x32xf32>, vector<32x16xf32>, vector<12x16xf32> -> vector<12x16xf32>
    %c0_19 = arith.constant 0 : index
    %c0_20 = arith.constant 0 : index
    %32 = vector.load %arg8[%c0_19, %c0_20] : memref<1x16xf32, #tpu.memory_space<vmem>>, vector<1x16xf32>
    %33 = vector.broadcast %32 : vector<1x16xf32> to vector<12x16xf32>
    %34 = arith.addf %31, %33 : vector<12x16xf32>
    %35 = vector.shape_cast %34 : vector<12x16xf32> to vector<12x1x16xf32>
    %36 = vector.shape_cast %29 : vector<8x16xf32> to vector<1x8x16xf32>
    %37 = vector.broadcast %35 : vector<12x1x16xf32> to vector<12x8x16xf32>
    %38 = vector.broadcast %36 : vector<1x8x16xf32> to vector<12x8x16xf32>
    %39 = arith.addf %37, %38 : vector<12x8x16xf32>
    %40 = math.tanh %39 : vector<12x8x16xf32>
    %41 = vector.shape_cast %40 : vector<12x8x16xf32> to vector<96x16xf32>
    %c0_21 = arith.constant 0 : index
    %c0_22 = arith.constant 0 : index
    %42 = vector.load %arg9[%c0_21, %c0_22] : memref<16x20xf32, #tpu.memory_space<vmem>>, vector<16x20xf32>
    %cst_23 = arith.constant dense<0.000000e+00> : vector<96x20xf32>
    %43 = tpu.matmul %41, %42, %cst_23 {dimension_numbers = #tpu.dot_dimension_numbers<[1], [0], [0], [1], [0, 0, 1, 1], [], []>} : vector<96x16xf32>, vector<16x20xf32>, vector<96x20xf32> -> vector<96x20xf32>
    %c0_24 = arith.constant 0 : index
    %c0_25 = arith.constant 0 : index
    %44 = vector.load %arg10[%c0_24, %c0_25] : memref<1x20xf32, #tpu.memory_space<vmem>>, vector<1x20xf32>
    %45 = vector.broadcast %44 : vector<1x20xf32> to vector<96x20xf32>
    %46 = arith.addf %43, %45 : vector<96x20xf32>
    %47 = vector.shape_cast %46 : vector<96x20xf32> to vector<12x8x20xf32>
    %c0_26 = arith.constant 0 : index
    %c0_27 = arith.constant 0 : index
    %c0_28 = arith.constant 0 : index
    %c0_29 = arith.constant 0 : index
    %48 = vector.load %arg11[%c0_26, %c0_27, %c0_28, %c0_29] : memref<1x12x8x20xf32, #tpu.memory_space<vmem>>, vector<1x12x8x20xf32>
    %49 = vector.shape_cast %48 : vector<1x12x8x20xf32> to vector<12x8x20xf32>
    %50 = vector.shape_cast %47 : vector<12x8x20xf32> to vector<1x12x8x20xf32>
    tpu.vector_store %arg11[%c0_26, %c0_27, %c0_28, %c0_29], %50 {strides = array<i32>} : memref<1x12x8x20xf32, #tpu.memory_space<vmem>>, vector<1x12x8x20xf32>,
    return
  }
  func.func @transform_0(%arg0: i32, %arg1: i32) -> (i32, i32, i32) {
    %c0_i32 = arith.constant 0 : i32
    %c0_i32_0 = arith.constant 0 : i32
    %c0_i32_1 = arith.constant 0 : i32
    return %arg0, %c0_i32, %c0_i32_0 : i32, i32, i32
  }
  func.func @transform_1(%arg0: i32, %arg1: i32) -> (i32, i32, i32) {
    %c0_i32 = arith.constant 0 : i32
    %c0_i32_0 = arith.constant 0 : i32
    return %arg0, %arg1, %c0_i32 : i32, i32, i32
  }
  func.func @transform_2(%arg0: i32, %arg1: i32) -> (i32, i32) {
    %c0_i32 = arith.constant 0 : i32
    %c0_i32_0 = arith.constant 0 : i32
    %c0_i32_1 = arith.constant 0 : i32
    return %c0_i32, %c0_i32_0 : i32, i32
  }
  func.func @transform_3(%arg0: i32, %arg1: i32) -> (i32, i32) {
    %c0_i32 = arith.constant 0 : i32
    %c0_i32_0 = arith.constant 0 : i32
    %c0_i32_1 = arith.constant 0 : i32
    return %c0_i32, %c0_i32_0 : i32, i32
  }
  func.func @transform_4(%arg0: i32, %arg1: i32) -> (i32, i32) {
    %c0_i32 = arith.constant 0 : i32
    %c0_i32_0 = arith.constant 0 : i32
    %c0_i32_1 = arith.constant 0 : i32
    return %c0_i32, %c0_i32_0 : i32, i32
  }
  func.func @transform_5(%arg0: i32, %arg1: i32) -> (i32, i32) {
    %c0_i32 = arith.constant 0 : i32
    %c0_i32_0 = arith.constant 0 : i32
    %c0_i32_1 = arith.constant 0 : i32
    return %c0_i32, %c0_i32_0 : i32, i32
  }
  func.func @transform_6(%arg0: i32, %arg1: i32) -> (i32, i32) {
    %c0_i32 = arith.constant 0 : i32
    %c0_i32_0 = arith.constant 0 : i32
    %c0_i32_1 = arith.constant 0 : i32
    return %c0_i32, %c0_i32_0 : i32, i32
  }
  func.func @transform_7(%arg0: i32, %arg1: i32) -> (i32, i32) {
    %c0_i32 = arith.constant 0 : i32
    %c0_i32_0 = arith.constant 0 : i32
    %c0_i32_1 = arith.constant 0 : i32
    return %c0_i32, %c0_i32_0 : i32, i32
  }
  func.func @transform_8(%arg0: i32, %arg1: i32) -> (i32, i32) {
    %c0_i32 = arith.constant 0 : i32
    %c0_i32_0 = arith.constant 0 : i32
    %c0_i32_1 = arith.constant 0 : i32
    return %c0_i32, %c0_i32_0 : i32, i32
  }
  func.func @transform_9(%arg0: i32, %arg1: i32) -> (i32, i32, i32, i32) {
    %c0_i32 = arith.constant 0 : i32
    %c0_i32_0 = arith.constant 0 : i32
    %c0_i32_1 = arith.constant 0 : i32
    return %arg0, %arg1, %c0_i32, %c0_i32_0 : i32, i32, i32, i32
  }
}

module attributes {stable_mosaic.version = 11 : i64} {
  func.func @_decoder_stack_kernel(%arg0: i32, %arg1: i32, %arg2: memref<2x8x32xf32, #tpu.memory_space<vmem>>, %arg3: memref<2x8x8xf32, #tpu.memory_space<vmem>>, %arg4: memref<1x1x32xf32, #tpu.memory_space<vmem>>, %arg5: memref<1x1x32xf32, #tpu.memory_space<vmem>>, %arg6: memref<1x32x96xf32, #tpu.memory_space<vmem>>, %arg7: memref<1x1x96xf32, #tpu.memory_space<vmem>>, %arg8: memref<1x32x32xf32, #tpu.memory_space<vmem>>, %arg9: memref<1x1x32xf32, #tpu.memory_space<vmem>>, %arg10: memref<1x1x32xf32, #tpu.memory_space<vmem>>, %arg11: memref<1x1x32xf32, #tpu.memory_space<vmem>>, %arg12: memref<1x32x64xf32, #tpu.memory_space<vmem>>, %arg13: memref<1x1x64xf32, #tpu.memory_space<vmem>>, %arg14: memref<1x64x32xf32, #tpu.memory_space<vmem>>, %arg15: memref<1x1x32xf32, #tpu.memory_space<vmem>>, %arg16: memref<2x8x32xf32, #tpu.memory_space<vmem>>) attributes {dimension_semantics = [#tpu.dimension_semantics<parallel>, #tpu.dimension_semantics<arbitrary>], iteration_bounds = array<i64: 1, 2>, scalar_prefetch = 0 : i64, scratch_operands = 0 : i64, tpu.core_type = #tpu.core_type<tc>, window_params = [{transform_indices = @transform_0, window_bounds = array<i64: 2, 8, 32>}, {transform_indices = @transform_1, window_bounds = array<i64: 2, 8, 8>}, {transform_indices = @transform_2, window_bounds = array<i64: 1, 1, 32>}, {transform_indices = @transform_3, window_bounds = array<i64: 1, 1, 32>}, {transform_indices = @transform_4, window_bounds = array<i64: 1, 32, 96>}, {transform_indices = @transform_5, window_bounds = array<i64: 1, 1, 96>}, {transform_indices = @transform_6, window_bounds = array<i64: 1, 32, 32>}, {transform_indices = @transform_7, window_bounds = array<i64: 1, 1, 32>}, {transform_indices = @transform_8, window_bounds = array<i64: 1, 1, 32>}, {transform_indices = @transform_9, window_bounds = array<i64: 1, 1, 32>}, {transform_indices = @transform_10, window_bounds = array<i64: 1, 32, 64>}, {transform_indices = @transform_11, window_bounds = array<i64: 1, 1, 64>}, {transform_indices = @transform_12, window_bounds = array<i64: 1, 64, 32>}, {transform_indices = @transform_13, window_bounds = array<i64: 1, 1, 32>}, {transform_indices = @transform_14, window_bounds = array<i64: 2, 8, 32>}]} {
    %c0_i32 = arith.constant 0 : i32
    %0 = arith.cmpi eq, %arg1, %c0_i32 : i32
    %1 = arith.extui %0 : i1 to i32
    %c0_i32_0 = arith.constant 0 : i32
    %2 = arith.cmpi ne, %1, %c0_i32_0 : i32
    scf.if %2 {
      %c0_98 = arith.constant 0 : index
      %c0_99 = arith.constant 0 : index
      %c0_100 = arith.constant 0 : index
      %204 = vector.load %arg2[%c0_98, %c0_99, %c0_100] : memref<2x8x32xf32, #tpu.memory_space<vmem>>, vector<2x8x32xf32>
      %c0_101 = arith.constant 0 : index
      %c0_102 = arith.constant 0 : index
      %c0_103 = arith.constant 0 : index
      %205 = vector.load %arg16[%c0_101, %c0_102, %c0_103] : memref<2x8x32xf32, #tpu.memory_space<vmem>>, vector<2x8x32xf32>
      tpu.vector_store %arg16[%c0_101, %c0_102, %c0_103], %204 {strides = array<i32>} : memref<2x8x32xf32, #tpu.memory_space<vmem>>, vector<2x8x32xf32>,
    } else {
    }
    %c0 = arith.constant 0 : index
    %c0_1 = arith.constant 0 : index
    %c0_2 = arith.constant 0 : index
    %3 = vector.load %arg16[%c0, %c0_1, %c0_2] : memref<2x8x32xf32, #tpu.memory_space<vmem>>, vector<2x8x32xf32>
    %4 = vector.shape_cast %3 : vector<2x8x32xf32> to vector<16x32xf32>
    %c0_3 = arith.constant 0 : index
    %c0_4 = arith.constant 0 : index
    %c0_5 = arith.constant 0 : index
    %5 = vector.load %arg3[%c0_3, %c0_4, %c0_5] : memref<2x8x8xf32, #tpu.memory_space<vmem>>, vector<2x8x8xf32>
    %cst = arith.constant 0.000000e+00 : f32
    %6 = vector.broadcast %cst : f32 to vector<2x8x8xf32>
    %7 = arith.cmpf ogt, %5, %6 : vector<2x8x8xf32>
    %c0_6 = arith.constant 0 : index
    %c0_7 = arith.constant 0 : index
    %c0_8 = arith.constant 0 : index
    %8 = vector.load %arg4[%c0_6, %c0_7, %c0_8] : memref<1x1x32xf32, #tpu.memory_space<vmem>>, vector<1x1x32xf32>
    %9 = vector.shape_cast %8 : vector<1x1x32xf32> to vector<1x32xf32>
    %c0_9 = arith.constant 0 : index
    %c0_10 = arith.constant 0 : index
    %c0_11 = arith.constant 0 : index
    %10 = vector.load %arg5[%c0_9, %c0_10, %c0_11] : memref<1x1x32xf32, #tpu.memory_space<vmem>>, vector<1x1x32xf32>
    %11 = vector.shape_cast %10 : vector<1x1x32xf32> to vector<1x32xf32>
    %cst_12 = arith.constant dense<0.000000e+00> : vector<16xf32>
    %12 = vector.multi_reduction <add>, %4, %cst_12 [1] : vector<16x32xf32> to vector<16xf32>
    %13 = vector.shape_cast %12 : vector<16xf32> to vector<16x1xf32>
    %cst_13 = arith.constant 3.200000e+01 : f32
    %14 = vector.broadcast %cst_13 : f32 to vector<16x1xf32>
    %15 = arith.divf %13, %14 : vector<16x1xf32>
    %16 = vector.broadcast %15 : vector<16x1xf32> to vector<16x32xf32>
    %17 = arith.subf %4, %16 : vector<16x32xf32>
    %18 = arith.mulf %17, %17 : vector<16x32xf32>
    %cst_14 = arith.constant dense<0.000000e+00> : vector<16xf32>
    %19 = vector.multi_reduction <add>, %18, %cst_14 [1] : vector<16x32xf32> to vector<16xf32>
    %20 = vector.shape_cast %19 : vector<16xf32> to vector<16x1xf32>
    %cst_15 = arith.constant 3.200000e+01 : f32
    %21 = vector.broadcast %cst_15 : f32 to vector<16x1xf32>
    %22 = arith.divf %20, %21 : vector<16x1xf32>
    %23 = vector.broadcast %15 : vector<16x1xf32> to vector<16x32xf32>
    %24 = arith.subf %4, %23 : vector<16x32xf32>
    %cst_16 = arith.constant 9.99999996E-13 : f32
    %25 = vector.broadcast %cst_16 : f32 to vector<16x1xf32>
    %26 = arith.addf %22, %25 : vector<16x1xf32>
    %27 = math.rsqrt %26 : vector<16x1xf32>
    %28 = vector.broadcast %27 : vector<16x1xf32> to vector<16x32xf32>
    %29 = arith.mulf %24, %28 : vector<16x32xf32>
    %30 = vector.broadcast %9 : vector<1x32xf32> to vector<16x32xf32>
    %31 = arith.mulf %29, %30 : vector<16x32xf32>
    %32 = vector.broadcast %11 : vector<1x32xf32> to vector<16x32xf32>
    %33 = arith.addf %31, %32 : vector<16x32xf32>
    %c0_17 = arith.constant 0 : index
    %c0_18 = arith.constant 0 : index
    %c0_19 = arith.constant 0 : index
    %34 = vector.load %arg6[%c0_17, %c0_18, %c0_19] : memref<1x32x96xf32, #tpu.memory_space<vmem>>, vector<1x32x96xf32>
    %35 = vector.shape_cast %34 : vector<1x32x96xf32> to vector<32x96xf32>
    %cst_20 = arith.constant dense<0.000000e+00> : vector<16x96xf32>
    %36 = tpu.matmul %33, %35, %cst_20 {dimension_numbers = #tpu.dot_dimension_numbers<[1], [0], [0], [1], [0, 0, 1, 1], [], []>} : vector<16x32xf32>, vector<32x96xf32>, vector<16x96xf32> -> vector<16x96xf32>
    %c0_21 = arith.constant 0 : index
    %c0_22 = arith.constant 0 : index
    %c0_23 = arith.constant 0 : index
    %37 = vector.load %arg7[%c0_21, %c0_22, %c0_23] : memref<1x1x96xf32, #tpu.memory_space<vmem>>, vector<1x1x96xf32>
    %38 = vector.shape_cast %37 : vector<1x1x96xf32> to vector<1x96xf32>
    %39 = vector.broadcast %38 : vector<1x96xf32> to vector<16x96xf32>
    %40 = arith.addf %36, %39 : vector<16x96xf32>
    %cst_24 = arith.constant 0.000000e+00 : f32
    %41 = vector.broadcast %cst_24 : f32 to vector<16x32xf32>
    %42 = vector.extract_strided_slice %40 {offsets = [0, 0], sizes = [16, 8], strides = [1, 1]} : vector<16x96xf32> to vector<16x8xf32>
    %43 = vector.shape_cast %42 : vector<16x8xf32> to vector<2x8x8xf32>
    %44 = vector.extract_strided_slice %40 {offsets = [0, 32], sizes = [16, 8], strides = [1, 1]} : vector<16x96xf32> to vector<16x8xf32>
    %45 = vector.shape_cast %44 : vector<16x8xf32> to vector<2x8x8xf32>
    %46 = vector.extract_strided_slice %40 {offsets = [0, 64], sizes = [16, 8], strides = [1, 1]} : vector<16x96xf32> to vector<16x8xf32>
    %47 = vector.shape_cast %46 : vector<16x8xf32> to vector<2x8x8xf32>
    "tpu.trace_start"() <{level = 10 : i32, message = "btd,bsd->bts"}> : () -> ()
    %cst_25 = arith.constant dense<0.000000e+00> : vector<2x8x8xf32>
    %48 = tpu.matmul %43, %45, %cst_25 {dimension_numbers = #tpu.dot_dimension_numbers<[2], [2], [1], [1], [0, 0, 0, 1, 1, 1], [0], [0]>} : vector<2x8x8xf32>, vector<2x8x8xf32>, vector<2x8x8xf32> -> vector<2x8x8xf32>
    "tpu.trace_stop"() : () -> ()
    %cst_26 = arith.constant 0.353553385 : f32
    %49 = vector.broadcast %cst_26 : f32 to vector<2x8x8xf32>
    %50 = arith.mulf %48, %49 : vector<2x8x8xf32>
    %cst_27 = arith.constant -3.40282347E+38 : f32
    %51 = vector.broadcast %cst_27 : f32 to vector<2x8x8xf32>
    %52 = arith.select %7, %50, %51 : vector<2x8x8xi1>, vector<2x8x8xf32>
    %cst_28 = arith.constant dense<0xFF800000> : vector<2x8xf32>
    %53 = vector.multi_reduction <maximumf>, %52, %cst_28 [2] : vector<2x8x8xf32> to vector<2x8xf32>
    %54 = vector.shape_cast %53 : vector<2x8xf32> to vector<2x8x1xf32>
    %55 = vector.broadcast %54 : vector<2x8x1xf32> to vector<2x8x8xf32>
    %56 = arith.subf %52, %55 : vector<2x8x8xf32>
    %57 = math.exp %56 : vector<2x8x8xf32>
    %cst_29 = arith.constant dense<0.000000e+00> : vector<2x8xf32>
    %58 = vector.multi_reduction <add>, %57, %cst_29 [2] : vector<2x8x8xf32> to vector<2x8xf32>
    %59 = vector.shape_cast %58 : vector<2x8xf32> to vector<2x8x1xf32>
    %60 = vector.broadcast %59 : vector<2x8x1xf32> to vector<2x8x8xf32>
    %61 = arith.divf %57, %60 : vector<2x8x8xf32>
    %cst_30 = arith.constant 0.000000e+00 : f32
    %62 = vector.broadcast %cst_30 : f32 to vector<2x8x8xf32>
    %63 = arith.select %7, %61, %62 : vector<2x8x8xi1>, vector<2x8x8xf32>
    "tpu.trace_start"() <{level = 10 : i32, message = "bts,bsd->btd"}> : () -> ()
    %cst_31 = arith.constant dense<0.000000e+00> : vector<2x8x8xf32>
    %64 = tpu.matmul %63, %47, %cst_31 {dimension_numbers = #tpu.dot_dimension_numbers<[2], [1], [1], [2], [0, 0, 0, 1, 1, 2], [0], [0]>} : vector<2x8x8xf32>, vector<2x8x8xf32>, vector<2x8x8xf32> -> vector<2x8x8xf32>
    "tpu.trace_stop"() : () -> ()
    %65 = vector.shape_cast %64 : vector<2x8x8xf32> to vector<16x8xf32>
    %c0_32 = arith.constant 0 : index
    %c0_33 = arith.constant 0 : index
    %c0_34 = arith.constant 0 : index
    %66 = vector.load %arg8[%c0_32, %c0_33, %c0_34] : memref<1x32x32xf32, #tpu.memory_space<vmem>>, vector<1x8x32xf32>
    %67 = vector.shape_cast %66 : vector<1x8x32xf32> to vector<8x32xf32>
    %cst_35 = arith.constant dense<0.000000e+00> : vector<16x32xf32>
    %68 = tpu.matmul %65, %67, %cst_35 {dimension_numbers = #tpu.dot_dimension_numbers<[1], [0], [0], [1], [0, 0, 1, 1], [], []>} : vector<16x8xf32>, vector<8x32xf32>, vector<16x32xf32> -> vector<16x32xf32>
    %69 = arith.addf %41, %68 : vector<16x32xf32>
    %70 = vector.extract_strided_slice %40 {offsets = [0, 8], sizes = [16, 8], strides = [1, 1]} : vector<16x96xf32> to vector<16x8xf32>
    %71 = vector.shape_cast %70 : vector<16x8xf32> to vector<2x8x8xf32>
    %72 = vector.extract_strided_slice %40 {offsets = [0, 40], sizes = [16, 8], strides = [1, 1]} : vector<16x96xf32> to vector<16x8xf32>
    %73 = vector.shape_cast %72 : vector<16x8xf32> to vector<2x8x8xf32>
    %74 = vector.extract_strided_slice %40 {offsets = [0, 72], sizes = [16, 8], strides = [1, 1]} : vector<16x96xf32> to vector<16x8xf32>
    %75 = vector.shape_cast %74 : vector<16x8xf32> to vector<2x8x8xf32>
    "tpu.trace_start"() <{level = 10 : i32, message = "btd,bsd->bts"}> : () -> ()
    %cst_36 = arith.constant dense<0.000000e+00> : vector<2x8x8xf32>
    %76 = tpu.matmul %71, %73, %cst_36 {dimension_numbers = #tpu.dot_dimension_numbers<[2], [2], [1], [1], [0, 0, 0, 1, 1, 1], [0], [0]>} : vector<2x8x8xf32>, vector<2x8x8xf32>, vector<2x8x8xf32> -> vector<2x8x8xf32>
    "tpu.trace_stop"() : () -> ()
    %cst_37 = arith.constant 0.353553385 : f32
    %77 = vector.broadcast %cst_37 : f32 to vector<2x8x8xf32>
    %78 = arith.mulf %76, %77 : vector<2x8x8xf32>
    %cst_38 = arith.constant -3.40282347E+38 : f32
    %79 = vector.broadcast %cst_38 : f32 to vector<2x8x8xf32>
    %80 = arith.select %7, %78, %79 : vector<2x8x8xi1>, vector<2x8x8xf32>
    %cst_39 = arith.constant dense<0xFF800000> : vector<2x8xf32>
    %81 = vector.multi_reduction <maximumf>, %80, %cst_39 [2] : vector<2x8x8xf32> to vector<2x8xf32>
    %82 = vector.shape_cast %81 : vector<2x8xf32> to vector<2x8x1xf32>
    %83 = vector.broadcast %82 : vector<2x8x1xf32> to vector<2x8x8xf32>
    %84 = arith.subf %80, %83 : vector<2x8x8xf32>
    %85 = math.exp %84 : vector<2x8x8xf32>
    %cst_40 = arith.constant dense<0.000000e+00> : vector<2x8xf32>
    %86 = vector.multi_reduction <add>, %85, %cst_40 [2] : vector<2x8x8xf32> to vector<2x8xf32>
    %87 = vector.shape_cast %86 : vector<2x8xf32> to vector<2x8x1xf32>
    %88 = vector.broadcast %87 : vector<2x8x1xf32> to vector<2x8x8xf32>
    %89 = arith.divf %85, %88 : vector<2x8x8xf32>
    %cst_41 = arith.constant 0.000000e+00 : f32
    %90 = vector.broadcast %cst_41 : f32 to vector<2x8x8xf32>
    %91 = arith.select %7, %89, %90 : vector<2x8x8xi1>, vector<2x8x8xf32>
    "tpu.trace_start"() <{level = 10 : i32, message = "bts,bsd->btd"}> : () -> ()
    %cst_42 = arith.constant dense<0.000000e+00> : vector<2x8x8xf32>
    %92 = tpu.matmul %91, %75, %cst_42 {dimension_numbers = #tpu.dot_dimension_numbers<[2], [1], [1], [2], [0, 0, 0, 1, 1, 2], [0], [0]>} : vector<2x8x8xf32>, vector<2x8x8xf32>, vector<2x8x8xf32> -> vector<2x8x8xf32>
    "tpu.trace_stop"() : () -> ()
    %93 = vector.shape_cast %92 : vector<2x8x8xf32> to vector<16x8xf32>
    %c0_43 = arith.constant 0 : index
    %c8 = arith.constant 8 : index
    %c0_44 = arith.constant 0 : index
    %94 = vector.load %arg8[%c0_43, %c8, %c0_44] : memref<1x32x32xf32, #tpu.memory_space<vmem>>, vector<1x8x32xf32>
    %95 = vector.shape_cast %94 : vector<1x8x32xf32> to vector<8x32xf32>
    %cst_45 = arith.constant dense<0.000000e+00> : vector<16x32xf32>
    %96 = tpu.matmul %93, %95, %cst_45 {dimension_numbers = #tpu.dot_dimension_numbers<[1], [0], [0], [1], [0, 0, 1, 1], [], []>} : vector<16x8xf32>, vector<8x32xf32>, vector<16x32xf32> -> vector<16x32xf32>
    %97 = arith.addf %69, %96 : vector<16x32xf32>
    %98 = vector.extract_strided_slice %40 {offsets = [0, 16], sizes = [16, 8], strides = [1, 1]} : vector<16x96xf32> to vector<16x8xf32>
    %99 = vector.shape_cast %98 : vector<16x8xf32> to vector<2x8x8xf32>
    %100 = vector.extract_strided_slice %40 {offsets = [0, 48], sizes = [16, 8], strides = [1, 1]} : vector<16x96xf32> to vector<16x8xf32>
    %101 = vector.shape_cast %100 : vector<16x8xf32> to vector<2x8x8xf32>
    %102 = vector.extract_strided_slice %40 {offsets = [0, 80], sizes = [16, 8], strides = [1, 1]} : vector<16x96xf32> to vector<16x8xf32>
    %103 = vector.shape_cast %102 : vector<16x8xf32> to vector<2x8x8xf32>
    "tpu.trace_start"() <{level = 10 : i32, message = "btd,bsd->bts"}> : () -> ()
    %cst_46 = arith.constant dense<0.000000e+00> : vector<2x8x8xf32>
    %104 = tpu.matmul %99, %101, %cst_46 {dimension_numbers = #tpu.dot_dimension_numbers<[2], [2], [1], [1], [0, 0, 0, 1, 1, 1], [0], [0]>} : vector<2x8x8xf32>, vector<2x8x8xf32>, vector<2x8x8xf32> -> vector<2x8x8xf32>
    "tpu.trace_stop"() : () -> ()
    %cst_47 = arith.constant 0.353553385 : f32
    %105 = vector.broadcast %cst_47 : f32 to vector<2x8x8xf32>
    %106 = arith.mulf %104, %105 : vector<2x8x8xf32>
    %cst_48 = arith.constant -3.40282347E+38 : f32
    %107 = vector.broadcast %cst_48 : f32 to vector<2x8x8xf32>
    %108 = arith.select %7, %106, %107 : vector<2x8x8xi1>, vector<2x8x8xf32>
    %cst_49 = arith.constant dense<0xFF800000> : vector<2x8xf32>
    %109 = vector.multi_reduction <maximumf>, %108, %cst_49 [2] : vector<2x8x8xf32> to vector<2x8xf32>
    %110 = vector.shape_cast %109 : vector<2x8xf32> to vector<2x8x1xf32>
    %111 = vector.broadcast %110 : vector<2x8x1xf32> to vector<2x8x8xf32>
    %112 = arith.subf %108, %111 : vector<2x8x8xf32>
    %113 = math.exp %112 : vector<2x8x8xf32>
    %cst_50 = arith.constant dense<0.000000e+00> : vector<2x8xf32>
    %114 = vector.multi_reduction <add>, %113, %cst_50 [2] : vector<2x8x8xf32> to vector<2x8xf32>
    %115 = vector.shape_cast %114 : vector<2x8xf32> to vector<2x8x1xf32>
    %116 = vector.broadcast %115 : vector<2x8x1xf32> to vector<2x8x8xf32>
    %117 = arith.divf %113, %116 : vector<2x8x8xf32>
    %cst_51 = arith.constant 0.000000e+00 : f32
    %118 = vector.broadcast %cst_51 : f32 to vector<2x8x8xf32>
    %119 = arith.select %7, %117, %118 : vector<2x8x8xi1>, vector<2x8x8xf32>
    "tpu.trace_start"() <{level = 10 : i32, message = "bts,bsd->btd"}> : () -> ()
    %cst_52 = arith.constant dense<0.000000e+00> : vector<2x8x8xf32>
    %120 = tpu.matmul %119, %103, %cst_52 {dimension_numbers = #tpu.dot_dimension_numbers<[2], [1], [1], [2], [0, 0, 0, 1, 1, 2], [0], [0]>} : vector<2x8x8xf32>, vector<2x8x8xf32>, vector<2x8x8xf32> -> vector<2x8x8xf32>
    "tpu.trace_stop"() : () -> ()
    %121 = vector.shape_cast %120 : vector<2x8x8xf32> to vector<16x8xf32>
    %c0_53 = arith.constant 0 : index
    %c16 = arith.constant 16 : index
    %c0_54 = arith.constant 0 : index
    %122 = vector.load %arg8[%c0_53, %c16, %c0_54] : memref<1x32x32xf32, #tpu.memory_space<vmem>>, vector<1x8x32xf32>
    %123 = vector.shape_cast %122 : vector<1x8x32xf32> to vector<8x32xf32>
    %cst_55 = arith.constant dense<0.000000e+00> : vector<16x32xf32>
    %124 = tpu.matmul %121, %123, %cst_55 {dimension_numbers = #tpu.dot_dimension_numbers<[1], [0], [0], [1], [0, 0, 1, 1], [], []>} : vector<16x8xf32>, vector<8x32xf32>, vector<16x32xf32> -> vector<16x32xf32>
    %125 = arith.addf %97, %124 : vector<16x32xf32>
    %126 = vector.extract_strided_slice %40 {offsets = [0, 24], sizes = [16, 8], strides = [1, 1]} : vector<16x96xf32> to vector<16x8xf32>
    %127 = vector.shape_cast %126 : vector<16x8xf32> to vector<2x8x8xf32>
    %128 = vector.extract_strided_slice %40 {offsets = [0, 56], sizes = [16, 8], strides = [1, 1]} : vector<16x96xf32> to vector<16x8xf32>
    %129 = vector.shape_cast %128 : vector<16x8xf32> to vector<2x8x8xf32>
    %130 = vector.extract_strided_slice %40 {offsets = [0, 88], sizes = [16, 8], strides = [1, 1]} : vector<16x96xf32> to vector<16x8xf32>
    %131 = vector.shape_cast %130 : vector<16x8xf32> to vector<2x8x8xf32>
    "tpu.trace_start"() <{level = 10 : i32, message = "btd,bsd->bts"}> : () -> ()
    %cst_56 = arith.constant dense<0.000000e+00> : vector<2x8x8xf32>
    %132 = tpu.matmul %127, %129, %cst_56 {dimension_numbers = #tpu.dot_dimension_numbers<[2], [2], [1], [1], [0, 0, 0, 1, 1, 1], [0], [0]>} : vector<2x8x8xf32>, vector<2x8x8xf32>, vector<2x8x8xf32> -> vector<2x8x8xf32>
    "tpu.trace_stop"() : () -> ()
    %cst_57 = arith.constant 0.353553385 : f32
    %133 = vector.broadcast %cst_57 : f32 to vector<2x8x8xf32>
    %134 = arith.mulf %132, %133 : vector<2x8x8xf32>
    %cst_58 = arith.constant -3.40282347E+38 : f32
    %135 = vector.broadcast %cst_58 : f32 to vector<2x8x8xf32>
    %136 = arith.select %7, %134, %135 : vector<2x8x8xi1>, vector<2x8x8xf32>
    %cst_59 = arith.constant dense<0xFF800000> : vector<2x8xf32>
    %137 = vector.multi_reduction <maximumf>, %136, %cst_59 [2] : vector<2x8x8xf32> to vector<2x8xf32>
    %138 = vector.shape_cast %137 : vector<2x8xf32> to vector<2x8x1xf32>
    %139 = vector.broadcast %138 : vector<2x8x1xf32> to vector<2x8x8xf32>
    %140 = arith.subf %136, %139 : vector<2x8x8xf32>
    %141 = math.exp %140 : vector<2x8x8xf32>
    %cst_60 = arith.constant dense<0.000000e+00> : vector<2x8xf32>
    %142 = vector.multi_reduction <add>, %141, %cst_60 [2] : vector<2x8x8xf32> to vector<2x8xf32>
    %143 = vector.shape_cast %142 : vector<2x8xf32> to vector<2x8x1xf32>
    %144 = vector.broadcast %143 : vector<2x8x1xf32> to vector<2x8x8xf32>
    %145 = arith.divf %141, %144 : vector<2x8x8xf32>
    %cst_61 = arith.constant 0.000000e+00 : f32
    %146 = vector.broadcast %cst_61 : f32 to vector<2x8x8xf32>
    %147 = arith.select %7, %145, %146 : vector<2x8x8xi1>, vector<2x8x8xf32>
    "tpu.trace_start"() <{level = 10 : i32, message = "bts,bsd->btd"}> : () -> ()
    %cst_62 = arith.constant dense<0.000000e+00> : vector<2x8x8xf32>
    %148 = tpu.matmul %147, %131, %cst_62 {dimension_numbers = #tpu.dot_dimension_numbers<[2], [1], [1], [2], [0, 0, 0, 1, 1, 2], [0], [0]>} : vector<2x8x8xf32>, vector<2x8x8xf32>, vector<2x8x8xf32> -> vector<2x8x8xf32>
    "tpu.trace_stop"() : () -> ()
    %149 = vector.shape_cast %148 : vector<2x8x8xf32> to vector<16x8xf32>
    %c0_63 = arith.constant 0 : index
    %c24 = arith.constant 24 : index
    %c0_64 = arith.constant 0 : index
    %150 = vector.load %arg8[%c0_63, %c24, %c0_64] : memref<1x32x32xf32, #tpu.memory_space<vmem>>, vector<1x8x32xf32>
    %151 = vector.shape_cast %150 : vector<1x8x32xf32> to vector<8x32xf32>
    %cst_65 = arith.constant dense<0.000000e+00> : vector<16x32xf32>
    %152 = tpu.matmul %149, %151, %cst_65 {dimension_numbers = #tpu.dot_dimension_numbers<[1], [0], [0], [1], [0, 0, 1, 1], [], []>} : vector<16x8xf32>, vector<8x32xf32>, vector<16x32xf32> -> vector<16x32xf32>
    %153 = arith.addf %125, %152 : vector<16x32xf32>
    %154 = arith.addf %4, %153 : vector<16x32xf32>
    %c0_66 = arith.constant 0 : index
    %c0_67 = arith.constant 0 : index
    %c0_68 = arith.constant 0 : index
    %155 = vector.load %arg9[%c0_66, %c0_67, %c0_68] : memref<1x1x32xf32, #tpu.memory_space<vmem>>, vector<1x1x32xf32>
    %156 = vector.shape_cast %155 : vector<1x1x32xf32> to vector<1x32xf32>
    %157 = vector.broadcast %156 : vector<1x32xf32> to vector<16x32xf32>
    %158 = arith.addf %154, %157 : vector<16x32xf32>
    %c0_69 = arith.constant 0 : index
    %c0_70 = arith.constant 0 : index
    %c0_71 = arith.constant 0 : index
    %159 = vector.load %arg10[%c0_69, %c0_70, %c0_71] : memref<1x1x32xf32, #tpu.memory_space<vmem>>, vector<1x1x32xf32>
    %160 = vector.shape_cast %159 : vector<1x1x32xf32> to vector<1x32xf32>
    %c0_72 = arith.constant 0 : index
    %c0_73 = arith.constant 0 : index
    %c0_74 = arith.constant 0 : index
    %161 = vector.load %arg11[%c0_72, %c0_73, %c0_74] : memref<1x1x32xf32, #tpu.memory_space<vmem>>, vector<1x1x32xf32>
    %162 = vector.shape_cast %161 : vector<1x1x32xf32> to vector<1x32xf32>
    %cst_75 = arith.constant dense<0.000000e+00> : vector<16xf32>
    %163 = vector.multi_reduction <add>, %158, %cst_75 [1] : vector<16x32xf32> to vector<16xf32>
    %164 = vector.shape_cast %163 : vector<16xf32> to vector<16x1xf32>
    %cst_76 = arith.constant 3.200000e+01 : f32
    %165 = vector.broadcast %cst_76 : f32 to vector<16x1xf32>
    %166 = arith.divf %164, %165 : vector<16x1xf32>
    %167 = vector.broadcast %166 : vector<16x1xf32> to vector<16x32xf32>
    %168 = arith.subf %158, %167 : vector<16x32xf32>
    %169 = arith.mulf %168, %168 : vector<16x32xf32>
    %cst_77 = arith.constant dense<0.000000e+00> : vector<16xf32>
    %170 = vector.multi_reduction <add>, %169, %cst_77 [1] : vector<16x32xf32> to vector<16xf32>
    %171 = vector.shape_cast %170 : vector<16xf32> to vector<16x1xf32>
    %cst_78 = arith.constant 3.200000e+01 : f32
    %172 = vector.broadcast %cst_78 : f32 to vector<16x1xf32>
    %173 = arith.divf %171, %172 : vector<16x1xf32>
    %174 = vector.broadcast %166 : vector<16x1xf32> to vector<16x32xf32>
    %175 = arith.subf %158, %174 : vector<16x32xf32>
    %cst_79 = arith.constant 9.99999996E-13 : f32
    %176 = vector.broadcast %cst_79 : f32 to vector<16x1xf32>
    %177 = arith.addf %173, %176 : vector<16x1xf32>
    %178 = math.rsqrt %177 : vector<16x1xf32>
    %179 = vector.broadcast %178 : vector<16x1xf32> to vector<16x32xf32>
    %180 = arith.mulf %175, %179 : vector<16x32xf32>
    %181 = vector.broadcast %160 : vector<1x32xf32> to vector<16x32xf32>
    %182 = arith.mulf %180, %181 : vector<16x32xf32>
    %183 = vector.broadcast %162 : vector<1x32xf32> to vector<16x32xf32>
    %184 = arith.addf %182, %183 : vector<16x32xf32>
    %c0_80 = arith.constant 0 : index
    %c0_81 = arith.constant 0 : index
    %c0_82 = arith.constant 0 : index
    %185 = vector.load %arg12[%c0_80, %c0_81, %c0_82] : memref<1x32x64xf32, #tpu.memory_space<vmem>>, vector<1x32x64xf32>
    %186 = vector.shape_cast %185 : vector<1x32x64xf32> to vector<32x64xf32>
    %cst_83 = arith.constant dense<0.000000e+00> : vector<16x64xf32>
    %187 = tpu.matmul %184, %186, %cst_83 {dimension_numbers = #tpu.dot_dimension_numbers<[1], [0], [0], [1], [0, 0, 1, 1], [], []>} : vector<16x32xf32>, vector<32x64xf32>, vector<16x64xf32> -> vector<16x64xf32>
    %c0_84 = arith.constant 0 : index
    %c0_85 = arith.constant 0 : index
    %c0_86 = arith.constant 0 : index
    %188 = vector.load %arg13[%c0_84, %c0_85, %c0_86] : memref<1x1x64xf32, #tpu.memory_space<vmem>>, vector<1x1x64xf32>
    %189 = vector.shape_cast %188 : vector<1x1x64xf32> to vector<1x64xf32>
    %190 = vector.broadcast %189 : vector<1x64xf32> to vector<16x64xf32>
    %191 = arith.addf %187, %190 : vector<16x64xf32>
    %cst_87 = arith.constant 0.000000e+00 : f32
    %192 = vector.broadcast %cst_87 : f32 to vector<16x64xf32>
    %193 = arith.maximumf %191, %192 : vector<16x64xf32>
    %c0_88 = arith.constant 0 : index
    %c0_89 = arith.constant 0 : index
    %c0_90 = arith.constant 0 : index
    %194 = vector.load %arg14[%c0_88, %c0_89, %c0_90] : memref<1x64x32xf32, #tpu.memory_space<vmem>>, vector<1x64x32xf32>
    %195 = vector.shape_cast %194 : vector<1x64x32xf32> to vector<64x32xf32>
    %cst_91 = arith.constant dense<0.000000e+00> : vector<16x32xf32>
    %196 = tpu.matmul %193, %195, %cst_91 {dimension_numbers = #tpu.dot_dimension_numbers<[1], [0], [0], [1], [0, 0, 1, 1], [], []>} : vector<16x64xf32>, vector<64x32xf32>, vector<16x32xf32> -> vector<16x32xf32>
    %197 = arith.addf %158, %196 : vector<16x32xf32>
    %c0_92 = arith.constant 0 : index
    %c0_93 = arith.constant 0 : index
    %c0_94 = arith.constant 0 : index
    %198 = vector.load %arg15[%c0_92, %c0_93, %c0_94] : memref<1x1x32xf32, #tpu.memory_space<vmem>>, vector<1x1x32xf32>
    %199 = vector.shape_cast %198 : vector<1x1x32xf32> to vector<1x32xf32>
    %200 = vector.broadcast %199 : vector<1x32xf32> to vector<16x32xf32>
    %201 = arith.addf %197, %200 : vector<16x32xf32>
    %202 = vector.shape_cast %201 : vector<16x32xf32> to vector<2x8x32xf32>
    %c0_95 = arith.constant 0 : index
    %c0_96 = arith.constant 0 : index
    %c0_97 = arith.constant 0 : index
    %203 = vector.load %arg16[%c0_95, %c0_96, %c0_97] : memref<2x8x32xf32, #tpu.memory_space<vmem>>, vector<2x8x32xf32>
    tpu.vector_store %arg16[%c0_95, %c0_96, %c0_97], %202 {strides = array<i32>} : memref<2x8x32xf32, #tpu.memory_space<vmem>>, vector<2x8x32xf32>,
    return
  }
  func.func @transform_0(%arg0: i32, %arg1: i32) -> (i32, i32, i32) {
    %c0_i32 = arith.constant 0 : i32
    %c0_i32_0 = arith.constant 0 : i32
    %c0_i32_1 = arith.constant 0 : i32
    return %arg0, %c0_i32, %c0_i32_0 : i32, i32, i32
  }
  func.func @transform_1(%arg0: i32, %arg1: i32) -> (i32, i32, i32) {
    %c0_i32 = arith.constant 0 : i32
    %c0_i32_0 = arith.constant 0 : i32
    %c0_i32_1 = arith.constant 0 : i32
    return %arg0, %c0_i32, %c0_i32_0 : i32, i32, i32
  }
  func.func @transform_2(%arg0: i32, %arg1: i32) -> (i32, i32, i32) {
    %c0_i32 = arith.constant 0 : i32
    %c0_i32_0 = arith.constant 0 : i32
    %c0_i32_1 = arith.constant 0 : i32
    return %arg1, %c0_i32, %c0_i32_0 : i32, i32, i32
  }
  func.func @transform_3(%arg0: i32, %arg1: i32) -> (i32, i32, i32) {
    %c0_i32 = arith.constant 0 : i32
    %c0_i32_0 = arith.constant 0 : i32
    %c0_i32_1 = arith.constant 0 : i32
    return %arg1, %c0_i32, %c0_i32_0 : i32, i32, i32
  }
  func.func @transform_4(%arg0: i32, %arg1: i32) -> (i32, i32, i32) {
    %c0_i32 = arith.constant 0 : i32
    %c0_i32_0 = arith.constant 0 : i32
    %c0_i32_1 = arith.constant 0 : i32
    return %arg1, %c0_i32, %c0_i32_0 : i32, i32, i32
  }
  func.func @transform_5(%arg0: i32, %arg1: i32) -> (i32, i32, i32) {
    %c0_i32 = arith.constant 0 : i32
    %c0_i32_0 = arith.constant 0 : i32
    %c0_i32_1 = arith.constant 0 : i32
    return %arg1, %c0_i32, %c0_i32_0 : i32, i32, i32
  }
  func.func @transform_6(%arg0: i32, %arg1: i32) -> (i32, i32, i32) {
    %c0_i32 = arith.constant 0 : i32
    %c0_i32_0 = arith.constant 0 : i32
    %c0_i32_1 = arith.constant 0 : i32
    return %arg1, %c0_i32, %c0_i32_0 : i32, i32, i32
  }
  func.func @transform_7(%arg0: i32, %arg1: i32) -> (i32, i32, i32) {
    %c0_i32 = arith.constant 0 : i32
    %c0_i32_0 = arith.constant 0 : i32
    %c0_i32_1 = arith.constant 0 : i32
    return %arg1, %c0_i32, %c0_i32_0 : i32, i32, i32
  }
  func.func @transform_8(%arg0: i32, %arg1: i32) -> (i32, i32, i32) {
    %c0_i32 = arith.constant 0 : i32
    %c0_i32_0 = arith.constant 0 : i32
    %c0_i32_1 = arith.constant 0 : i32
    return %arg1, %c0_i32, %c0_i32_0 : i32, i32, i32
  }
  func.func @transform_9(%arg0: i32, %arg1: i32) -> (i32, i32, i32) {
    %c0_i32 = arith.constant 0 : i32
    %c0_i32_0 = arith.constant 0 : i32
    %c0_i32_1 = arith.constant 0 : i32
    return %arg1, %c0_i32, %c0_i32_0 : i32, i32, i32
  }
  func.func @transform_10(%arg0: i32, %arg1: i32) -> (i32, i32, i32) {
    %c0_i32 = arith.constant 0 : i32
    %c0_i32_0 = arith.constant 0 : i32
    %c0_i32_1 = arith.constant 0 : i32
    return %arg1, %c0_i32, %c0_i32_0 : i32, i32, i32
  }
  func.func @transform_11(%arg0: i32, %arg1: i32) -> (i32, i32, i32) {
    %c0_i32 = arith.constant 0 : i32
    %c0_i32_0 = arith.constant 0 : i32
    %c0_i32_1 = arith.constant 0 : i32
    return %arg1, %c0_i32, %c0_i32_0 : i32, i32, i32
  }
  func.func @transform_12(%arg0: i32, %arg1: i32) -> (i32, i32, i32) {
    %c0_i32 = arith.constant 0 : i32
    %c0_i32_0 = arith.constant 0 : i32
    %c0_i32_1 = arith.constant 0 : i32
    return %arg1, %c0_i32, %c0_i32_0 : i32, i32, i32
  }
  func.func @transform_13(%arg0: i32, %arg1: i32) -> (i32, i32, i32) {
    %c0_i32 = arith.constant 0 : i32
    %c0_i32_0 = arith.constant 0 : i32
    %c0_i32_1 = arith.constant 0 : i32
    return %arg1, %c0_i32, %c0_i32_0 : i32, i32, i32
  }
  func.func @transform_14(%arg0: i32, %arg1: i32) -> (i32, i32, i32) {
    %c0_i32 = arith.constant 0 : i32
    %c0_i32_0 = arith.constant 0 : i32
    %c0_i32_1 = arith.constant 0 : i32
    return %arg0, %c0_i32, %c0_i32_0 : i32, i32, i32
  }
}

</mosaic_0001>

<llo_original>
// kernel: decoder_forward.3
$region0: #{decoder_forward.3}
  #allocation0 [shape = 'u32[]', space=smem, size = 0x4, offset = 0x4, fixed_abs, tag = 'smem constant byte address 0x4 - core index']
  #allocation1 [shape = 'u32[72,128]{1,0:T(1,128)}', space=vmem, size = 0x9000, scoped, tag = 'internal scratch']
  %s0 = inlined_call_operand.vmem [shape: f32[2,8,32], index: 0, kind: input, shape index: {}]
  %s1 = inlined_call_operand.vmem [shape: f32[2,12,32], index: 1, kind: input, shape index: {}]
  %s2 = inlined_call_operand.vmem [shape: f32[1,32], index: 2, kind: input, shape index: {}]
  %s3 = inlined_call_operand.vmem [shape: f32[1,32], index: 3, kind: input, shape index: {}]
  %s4 = inlined_call_operand.vmem [shape: f32[32,16], index: 4, kind: input, shape index: {}]
  %s5 = inlined_call_operand.vmem [shape: f32[32,16], index: 5, kind: input, shape index: {}]
  %s6 = inlined_call_operand.vmem [shape: f32[1,16], index: 6, kind: input, shape index: {}]
  %s7 = inlined_call_operand.vmem [shape: f32[16,20], index: 7, kind: input, shape index: {}]
  %s8 = inlined_call_operand.vmem [shape: f32[1,20], index: 8, kind: input, shape index: {}]
  %s9 = inlined_call_operand.hbm [shape: f32[2,12,8,20], index: 9, kind: output, shape index: {}]
  %s10 = sld [smem:[#allocation0]]
  $region69: #{decoder_forward.3} parent=0
    _
  %s12 = ssub.s32 1, %s10
  %s13 = scalar_select 0, %s12, %s10
  $region1: #{decoder_forward.3} parent=0
    #allocation2 [shape = 'u8[98304]{0}', space=vmem, size = 0x18000, scoped, tag = 'output window, operand 0']
    #allocation3 [shape = 's32[2]{0}', space=sflag, size = 0x8, scoped, tag = 'scoped memory for decoder_forward.3']
    %14 = vsyncpa [#allocation3], 0
    %s15 = scalar_lea.sflag [#allocation3], 1
    %16 = vsyncpa %s15, 0
    loop: start=0, step=1, limit=4
    $region2: #{decoder_forward.3} parent=1 // loop_pre_header
      _
    $region3: #{decoder_forward.3} parent=1 // loop_header
      %s18 = sphi 0, %s22
      %p19 = scmp.ge.s32.totalorder %s18, 4
      %s25 = sphi 0, %s37
      %s26 = sphi 0, %s33
      %s27 = sphi 0, %s25
      %s28 = sphi 0, %s26
      %s29 = sphi 0, %s27
      %s30 = sphi 0, %s28
      %s40 = sphi 0, %s42
      %s43 = sphi 0, %s40
      %s44 = sphi 0, %s43
      %s60 = sphi 0, %s44
      %s68 = sphi 0, %s70
      %s71 = sphi 0, %s68
      %s72 = sphi 0, %s71
      %s88 = sphi 0, %s72
      %s92 = sphi 0, %s92
      %s94 = sphi 0, %s92
      %s95 = sphi 0, %s94
      %s109 = sphi 0, %s95
      %s113 = sphi 0, %s113
      %s115 = sphi 0, %s113
      %s116 = sphi 0, %s115
      %s130 = sphi 0, %s116
      %s134 = sphi 0, %s134
      %s136 = sphi 0, %s134
      %s137 = sphi 0, %s136
      %s151 = sphi 0, %s137
      %s155 = sphi 0, %s155
      %s157 = sphi 0, %s155
      %s158 = sphi 0, %s157
      %s172 = sphi 0, %s158
      %s176 = sphi 0, %s176
      %s178 = sphi 0, %s176
      %s179 = sphi 0, %s178
      %s193 = sphi 0, %s179
      %s197 = sphi 0, %s197
      %s199 = sphi 0, %s197
      %s200 = sphi 0, %s199
      %s214 = sphi 0, %s200
      %s218 = sphi 0, %s218
      %s220 = sphi 0, %s218
      %s221 = sphi 0, %s220
      %s235 = sphi 0, %s221
      %s243 = sphi 0, %s245
      %s246 = sphi 0, %s243
      %s247 = sphi 0, %s246
      %s263 = sphi 0, %s247
    $region4: #{decoder_forward.3} parent=1 // loop_header_branch
      %21 = sbr.rel (%p19) target = $region8
    $region5: #{decoder_forward.3} parent=1 // loop_body
      %s23 = ssub.s32 %s18, 1
      %s24 = ssub.s32 %s18, 2
      %s31 = sadd.s32 1, %s26
      %p32 = scmp.ge.s32.totalorder %s31, 1
      %s33 = scalar_select %p32, 0, %s31
      %s34 = sadd.s32 1, %s25
      %s35 = scalar_select %p32, %s34, %s25
      %p36 = scmp.ge.s32.totalorder %s35, 2
      %s37 = scalar_select %p36, 0, %s35
      %s38 = ssub.s32 %s25, %s37
      %p39 = scmp.eq.s32.totalorder %s38, 0
      %s41 = sadd.s32 %s40, 1
      %s42 = scalar_select %p39, %s40, %s41
      %p45 = pneg %p39
      %p46 = scmp.eq.s32.totalorder %s18, 1
      %p47 = por %p45, %p46
      %p48 = scmp.ne.s32.totalorder %s40, %s43
      %p49 = scmp.eq.s32.totalorder %s18, 0
      %p50 = por %p48, %p49
      %p51 = scmp.ne.s32.totalorder %s40, %s43
      %p52 = scmp.eq.s32.totalorder %s23, 1
      %p53 = por %p51, %p52
      %p54 = scmp.ne.s32.totalorder %s43, %s44
      %p55 = scmp.eq.s32.totalorder %s23, 0
      %p56 = por %p54, %p55
      %p57 = scmp.ne.s32.totalorder %s43, %s44
      %p58 = scmp.eq.s32.totalorder %s24, 1
      %p59 = por %p57, %p58
      %p61 = scmp.ne.s32.totalorder %s44, %s60
      %p62 = scmp.eq.s32.totalorder %s24, 0
      %p63 = por %p61, %p62
      %s64 = ssub.s32 %s25, %s37
      %s65 = ssub.s32 %s26, %s33
      %s66 = sor.u32 %s64, %s65
      %p67 = scmp.eq.s32.totalorder %s66, 0
      %s69 = sadd.s32 %s68, 1
      %s70 = scalar_select %p67, %s68, %s69
      %p73 = pneg %p67
      %p74 = scmp.eq.s32.totalorder %s18, 1
      %p75 = por %p73, %p74
      %p76 = scmp.ne.s32.totalorder %s68, %s71
      %p77 = scmp.eq.s32.totalorder %s18, 0
      %p78 = por %p76, %p77
      %p79 = scmp.ne.s32.totalorder %s68, %s71
      %p80 = scmp.eq.s32.totalorder %s23, 1
      %p81 = por %p79, %p80
      %p82 = scmp.ne.s32.totalorder %s71, %s72
      %p83 = scmp.eq.s32.totalorder %s23, 0
      %p84 = por %p82, %p83
      %p85 = scmp.ne.s32.totalorder %s71, %s72
      %p86 = scmp.eq.s32.totalorder %s24, 1
      %p87 = por %p85, %p86
      %p89 = scmp.ne.s32.totalorder %s72, %s88
      %p90 = scmp.eq.s32.totalorder %s24, 0
      %p91 = por %p89, %p90
      %s93 = sadd.s32 %s92, 1
      %p96 = scmp.eq.s32.totalorder %s18, 1
      %p97 = scmp.ne.s32.totalorder %s92, %s94
      %p98 = scmp.eq.s32.totalorder %s18, 0
      %p99 = por %p97, %p98
      %p100 = scmp.ne.s32.totalorder %s92, %s94
      %p101 = scmp.eq.s32.totalorder %s23, 1
      %p102 = por %p100, %p101
      %p103 = scmp.ne.s32.totalorder %s94, %s95
      %p104 = scmp.eq.s32.totalorder %s23, 0
      %p105 = por %p103, %p104
      %p106 = scmp.ne.s32.totalorder %s94, %s95
      %p107 = scmp.eq.s32.totalorder %s24, 1
      %p108 = por %p106, %p107
      %p110 = scmp.ne.s32.totalorder %s95, %s109
      %p111 = scmp.eq.s32.totalorder %s24, 0
      %p112 = por %p110, %p111
      %s114 = sadd.s32 %s113, 1
      %p117 = scmp.eq.s32.totalorder %s18, 1
      %p118 = scmp.ne.s32.totalorder %s113, %s115
      %p119 = scmp.eq.s32.totalorder %s18, 0
      %p120 = por %p118, %p119
      %p121 = scmp.ne.s32.totalorder %s113, %s115
      %p122 = scmp.eq.s32.totalorder %s23, 1
      %p123 = por %p121, %p122
      %p124 = scmp.ne.s32.totalorder %s115, %s116
      %p125 = scmp.eq.s32.totalorder %s23, 0
      %p126 = por %p124, %p125
      %p127 = scmp.ne.s32.totalorder %s115, %s116
      %p128 = scmp.eq.s32.totalorder %s24, 1
      %p129 = por %p127, %p128
      %p131 = scmp.ne.s32.totalorder %s116, %s130
      %p132 = scmp.eq.s32.totalorder %s24, 0
      %p133 = por %p131, %p132
      %s135 = sadd.s32 %s134, 1
      %p138 = scmp.eq.s32.totalorder %s18, 1
      %p139 = scmp.ne.s32.totalorder %s134, %s136
      %p140 = scmp.eq.s32.totalorder %s18, 0
      %p141 = por %p139, %p140
      %p142 = scmp.ne.s32.totalorder %s134, %s136
      %p143 = scmp.eq.s32.totalorder %s23, 1
      %p144 = por %p142, %p143
      %p145 = scmp.ne.s32.totalorder %s136, %s137
      %p146 = scmp.eq.s32.totalorder %s23, 0
      %p147 = por %p145, %p146
      %p148 = scmp.ne.s32.totalorder %s136, %s137
      %p149 = scmp.eq.s32.totalorder %s24, 1
      %p150 = por %p148, %p149
      %p152 = scmp.ne.s32.totalorder %s137, %s151
      %p153 = scmp.eq.s32.totalorder %s24, 0
      %p154 = por %p152, %p153
      %s156 = sadd.s32 %s155, 1
      %p159 = scmp.eq.s32.totalorder %s18, 1
      %p160 = scmp.ne.s32.totalorder %s155, %s157
      %p161 = scmp.eq.s32.totalorder %s18, 0
      %p162 = por %p160, %p161
      %p163 = scmp.ne.s32.totalorder %s155, %s157
      %p164 = scmp.eq.s32.totalorder %s23, 1
      %p165 = por %p163, %p164
      %p166 = scmp.ne.s32.totalorder %s157, %s158
      %p167 = scmp.eq.s32.totalorder %s23, 0
      %p168 = por %p166, %p167
      %p169 = scmp.ne.s32.totalorder %s157, %s158
      %p170 = scmp.eq.s32.totalorder %s24, 1
      %p171 = por %p169, %p170
      %p173 = scmp.ne.s32.totalorder %s158, %s172
      %p174 = scmp.eq.s32.totalorder %s24, 0
      %p175 = por %p173, %p174
      %s177 = sadd.s32 %s176, 1
      %p180 = scmp.eq.s32.totalorder %s18, 1
      %p181 = scmp.ne.s32.totalorder %s176, %s178
      %p182 = scmp.eq.s32.totalorder %s18, 0
      %p183 = por %p181, %p182
      %p184 = scmp.ne.s32.totalorder %s176, %s178
      %p185 = scmp.eq.s32.totalorder %s23, 1
      %p186 = por %p184, %p185
      %p187 = scmp.ne.s32.totalorder %s178, %s179
      %p188 = scmp.eq.s32.totalorder %s23, 0
      %p189 = por %p187, %p188
      %p190 = scmp.ne.s32.totalorder %s178, %s179
      %p191 = scmp.eq.s32.totalorder %s24, 1
      %p192 = por %p190, %p191
      %p194 = scmp.ne.s32.totalorder %s179, %s193
      %p195 = scmp.eq.s32.totalorder %s24, 0
      %p196 = por %p194, %p195
      %s198 = sadd.s32 %s197, 1
      %p201 = scmp.eq.s32.totalorder %s18, 1
      %p202 = scmp.ne.s32.totalorder %s197, %s199
      %p203 = scmp.eq.s32.totalorder %s18, 0
      %p204 = por %p202, %p203
      %p205 = scmp.ne.s32.totalorder %s197, %s199
      %p206 = scmp.eq.s32.totalorder %s23, 1
      %p207 = por %p205, %p206
      %p208 = scmp.ne.s32.totalorder %s199, %s200
      %p209 = scmp.eq.s32.totalorder %s23, 0
      %p210 = por %p208, %p209
      %p211 = scmp.ne.s32.totalorder %s199, %s200
      %p212 = scmp.eq.s32.totalorder %s24, 1
      %p213 = por %p211, %p212
      %p215 = scmp.ne.s32.totalorder %s200, %s214
      %p216 = scmp.eq.s32.totalorder %s24, 0
      %p217 = por %p215, %p216
      %s219 = sadd.s32 %s218, 1
      %p222 = scmp.eq.s32.totalorder %s18, 1
      %p223 = scmp.ne.s32.totalorder %s218, %s220
      %p224 = scmp.eq.s32.totalorder %s18, 0
      %p225 = por %p223, %p224
      %p226 = scmp.ne.s32.totalorder %s218, %s220
      %p227 = scmp.eq.s32.totalorder %s23, 1
      %p228 = por %p226, %p227
      %p229 = scmp.ne.s32.totalorder %s220, %s221
      %p230 = scmp.eq.s32.totalorder %s23, 0
      %p231 = por %p229, %p230
      %p232 = scmp.ne.s32.totalorder %s220, %s221
      %p233 = scmp.eq.s32.totalorder %s24, 1
      %p234 = por %p232, %p233
      %p236 = scmp.ne.s32.totalorder %s221, %s235
      %p237 = scmp.eq.s32.totalorder %s24, 0
      %p238 = por %p236, %p237
      %s239 = ssub.s32 %s25, %s37
      %s240 = ssub.s32 %s26, %s33
      %s241 = sor.u32 %s239, %s240
      %p242 = scmp.eq.s32.totalorder %s241, 0
      %s244 = sadd.s32 %s243, 1
      %s245 = scalar_select %p242, %s243, %s244
      %p248 = pneg %p242
      %p249 = scmp.eq.s32.totalorder %s18, 1
      %p250 = por %p248, %p249
      %p251 = scmp.ne.s32.totalorder %s243, %s246
      %p252 = scmp.eq.s32.totalorder %s18, 0
      %p253 = por %p251, %p252
      %p254 = scmp.ne.s32.totalorder %s243, %s246
      %p255 = scmp.eq.s32.totalorder %s23, 1
      %p256 = por %p254, %p255
      %p257 = scmp.ne.s32.totalorder %s246, %s247
      %p258 = scmp.eq.s32.totalorder %s23, 0
      %p259 = por %p257, %p258
      %p260 = scmp.ne.s32.totalorder %s246, %s247
      %p261 = scmp.eq.s32.totalorder %s24, 1
      %p262 = por %p260, %p261
      %p264 = scmp.ne.s32.totalorder %s247, %s263
      %p265 = scmp.eq.s32.totalorder %s24, 0
      %p266 = por %p264, %p265
      %p267 = scmp.le.s32.totalorder 1, %s18
      %p268 = scmp.lt.s32.totalorder %s18, 3
      %p269 = pnand %p267, %p268
      %p270 = pneg %p269
      // Predicated region
      $region9: #{decoder_forward.3} parent=5 // pred_check
        _
      $region10: #{decoder_forward.3} parent=5 // pred_check_branch
        %272 = sbr.rel (%p269) target = $region12
      $region11: #{decoder_forward.3} parent=5 // pred_region
        %s273 = ssub.s32 %s18, 1
        // Predicated region
        $region13: #{decoder_forward.3} parent=11 // pred_check
          %p274 = pneg %p105
        $region14: #{decoder_forward.3} parent=11 // pred_check_branch
          %276 = sbr.rel (%p274) target = $region16
        $region15: #{decoder_forward.3} parent=11 // pred_region
          _
        $region16: #{decoder_forward.3} parent=11 // pred_fallthru
          _
        // Predicated region
        $region17: #{decoder_forward.3} parent=11 // pred_check
          %p277 = pneg %p126
        $region18: #{decoder_forward.3} parent=11 // pred_check_branch
          %279 = sbr.rel (%p277) target = $region20
        $region19: #{decoder_forward.3} parent=11 // pred_region
          _
        $region20: #{decoder_forward.3} parent=11 // pred_fallthru
          _
        // Predicated region
        $region21: #{decoder_forward.3} parent=11 // pred_check
          %p280 = pneg %p147
        $region22: #{decoder_forward.3} parent=11 // pred_check_branch
          %282 = sbr.rel (%p280) target = $region24
        $region23: #{decoder_forward.3} parent=11 // pred_region
          _
        $region24: #{decoder_forward.3} parent=11 // pred_fallthru
          _
        // Predicated region
        $region25: #{decoder_forward.3} parent=11 // pred_check
          %p283 = pneg %p168
        $region26: #{decoder_forward.3} parent=11 // pred_check_branch
          %285 = sbr.rel (%p283) target = $region28
        $region27: #{decoder_forward.3} parent=11 // pred_region
          _
        $region28: #{decoder_forward.3} parent=11 // pred_fallthru
          _
        // Predicated region
        $region29: #{decoder_forward.3} parent=11 // pred_check
          %p286 = pneg %p189
        $region30: #{decoder_forward.3} parent=11 // pred_check_branch
          %288 = sbr.rel (%p286) target = $region32
        $region31: #{decoder_forward.3} parent=11 // pred_region
          _
        $region32: #{decoder_forward.3} parent=11 // pred_fallthru
          _
        // Predicated region
        $region33: #{decoder_forward.3} parent=11 // pred_check
          %p289 = pneg %p210
        $region34: #{decoder_forward.3} parent=11 // pred_check_branch
          %291 = sbr.rel (%p289) target = $region36
        $region35: #{decoder_forward.3} parent=11 // pred_region
          _
        $region36: #{decoder_forward.3} parent=11 // pred_fallthru
          _
        // Predicated region
        $region37: #{decoder_forward.3} parent=11 // pred_check
          %p292 = pneg %p231
        $region38: #{decoder_forward.3} parent=11 // pred_check_branch
          %294 = sbr.rel (%p292) target = $region40
        $region39: #{decoder_forward.3} parent=11 // pred_region
          _
        $region40: #{decoder_forward.3} parent=11 // pred_fallthru
          _
      $region12: #{decoder_forward.3} parent=5 // pred_fallthru
        _
      %p295 = scmp.lt.s32.totalorder %s18, 2
      // Predicated region
      $region41: #{decoder_forward.3} parent=5 // pred_check
        %p296 = pneg %p295
      $region42: #{decoder_forward.3} parent=5 // pred_check_branch
        %298 = sbr.rel (%p296) target = $region44
      $region43: #{decoder_forward.3} parent=5 // pred_region
        // Predicated region
        $region45: #{decoder_forward.3} parent=43 // pred_check
          %p299 = pneg %p50
        $region46: #{decoder_forward.3} parent=43 // pred_check_branch
          %301 = sbr.rel (%p299) target = $region48
        $region47: #{decoder_forward.3} parent=43 // pred_region
          %p302 = scmp.lt.s32.totalorder %s25, 1
          %s303 = scalar_select %p302, %s25, 1
          %s304 = smul.addr %s303, 8
          %s305 = scalar_lea.vmem %s0, %s304
        $region48: #{decoder_forward.3} parent=43 // pred_fallthru
          _
        // Predicated region
        $region49: #{decoder_forward.3} parent=43 // pred_check
          %p306 = pneg %p78
        $region50: #{decoder_forward.3} parent=43 // pred_check_branch
          %308 = sbr.rel (%p306) target = $region52
        $region51: #{decoder_forward.3} parent=43 // pred_region
          %s309 = smul.u32 2, %s26
          %p310 = scmp.lt.s32.totalorder %s25, 1
          %s311 = scalar_select %p310, %s25, 1
          %p312 = scmp.lt.s32.totalorder %s309, 1
          %s313 = scalar_select %p312, %s309, 1
          %s314 = smul.addr %s311, 2
          %s315 = sadd.s32 %s313, %s314
          %s316 = smul.addr %s315, 8
          %s317 = scalar_lea.vmem %s1, %s316
          %s318 = smul.u32 2, %s26
        $region52: #{decoder_forward.3} parent=43 // pred_fallthru
          _
      $region44: #{decoder_forward.3} parent=5 // pred_fallthru
        _
      %p319 = scmp.le.s32.totalorder 1, %s18
      %p320 = scmp.lt.s32.totalorder %s18, 3
      %p321 = pnand %p319, %p320
      %p322 = pneg %p321
      // Predicated region
      $region53: #{decoder_forward.3} parent=5 // pred_check
        _
      $region54: #{decoder_forward.3} parent=5 // pred_check_branch
        %324 = sbr.rel (%p321) target = $region56
      $region55: #{decoder_forward.3} parent=5 // pred_region
        %s325 = ssub.s32 %s18, 1
        %p326 = scmp.lt.s32.totalorder %s27, 1
        %s327 = scalar_select %p326, %s27, 1
        %s328 = smul.addr %s327, 8
        %s329 = scalar_lea.vmem %s0, %s328
        %p330 = pneg %p56
        %p331 = pneg %p53
        %s332 = smul.u32 2, %s28
        %p333 = scmp.lt.s32.totalorder %s27, 1
        %s334 = scalar_select %p333, %s27, 1
        %p335 = scmp.lt.s32.totalorder %s332, 1
        %s336 = scalar_select %p335, %s332, 1
        %s337 = smul.addr %s334, 2
        %s338 = sadd.s32 %s336, %s337
        %s339 = smul.addr %s338, 8
        %s340 = scalar_lea.vmem %s1, %s339
        %p341 = pneg %p84
        %p342 = pneg %p81
        %p343 = pneg %p105
        %p344 = pneg %p102
        %p345 = pneg %p126
        %p346 = pneg %p123
        %p347 = pneg %p147
        %p348 = pneg %p144
        %p349 = pneg %p168
        %p350 = pneg %p165
        %p351 = pneg %p189
        %p352 = pneg %p186
        %p353 = pneg %p210
        %p354 = pneg %p207
        %p355 = pneg %p231
        %p356 = pneg %p228
        %p357 = pneg %p259
        %p358 = pneg %p256
        %s359 = sand.u32 %s246, 1
        %s360 = scalar_lea.sflag [#allocation3], %s359
        %s361 = sand.u32 %s246, 1
        %s362 = smul.addr %s361, 96
        %s363 = scalar_lea.vmem [#allocation2], %s362
        %p364 = scmp.lt.s32.totalorder %s27, 1
        %s365 = scalar_select %p364, %s27, 1
        %s366 = smul.addr %s365, 8
        %s367 = scalar_lea.vmem %s0, %s366
        %s368 = smul.u32 2, %s28
        %p369 = scmp.lt.s32.totalorder %s27, 1
        %s370 = scalar_select %p369, %s27, 1
        %p371 = scmp.lt.s32.totalorder %s368, 1
        %s372 = scalar_select %p371, %s368, 1
        %s373 = smul.addr %s370, 2
        %s374 = sadd.s32 %s372, %s373
        %s375 = smul.addr %s374, 8
        %s376 = scalar_lea.vmem %s1, %s375
        %s377 = smul.u32 2, %s28
        %s378 = smul.u32 12, %s28
        %v379 = vld [vmem:[%s367] sm:$0xff]
        %v380 = vld [vmem:[%s376] sm:$0xff]
        %v381 = vld [vmem:[%s376 + $0x8] sm:$0xf]
        %v382 = vld [vmem:[%s2] sm:$0x1]
        %v383 = vld [vmem:[%s3] sm:$0x1]
        %vm384 = vcmask 261120
        %v385 = vsel %vm384, %v379, 0.0
        %386 = vadd.xlane.f32.xlu0 %v385
        %v387 = vpop.xlane.xlu0 %386
        %v388 = vrcp.pop 32.0
        %v389 = vmul.f32 32.0, %v388
        %v390 = vsub.f32 1.0, %v389
        %v391 = vmul.f32 %v388, %v390
        %v392 = vadd.f32 %v388, %v391
        %vm393 = vweird.f32 %v388
        %v394 = vsel %vm393, %v388, %v392
        %v395 = vmul.f32 %v387, %v394
        %v396 = vsub.f32 %v379, %v395
        %v397 = vmul.f32 %v396, %v396
        %v398 = vsel %vm384, %v397, 0.0
        %399 = vadd.xlane.f32.xlu0 %v398
        %v400 = vpop.xlane.xlu0 %399
        %v401 = vmul.f32 %v400, %v394
        %v402 = vadd.f32 %v401, 1e-12
        %v403 = vrsqrt.pop %v402
        %v404 = vmul.f32 %v403, %v402
        %v405 = vmul.f32 %v404, %v403
        %v406 = vmul.f32 0.5, %v405
        %v407 = vsub.f32 1.5, %v406
        %v408 = vmul.f32 %v403, %v407
        %vm409 = vweird.f32 %v402
        %vm410 = vweird.f32 %v403
        %vm411 = vmor %vm409, %vm410
        %v412 = vsel %vm411, %v403, %v408
        %v413 = vmul.f32 %v396, %v412
        %v415 = vperm.slane %v382, 0
        %v417 = vmul.f32 %v413, %v415
        %v419 = vperm.slane %v383, 0
        %v421 = vadd.f32 %v417, %v419
        %v422 = vld [vmem:[%s4] sm:$0xff]
        %v423 = vld [vmem:[%s4 + $0x8] sm:$0xff]
        %v424 = vld [vmem:[%s4 + $0x10] sm:$0xff]
        %v425 = vld [vmem:[%s4 + $0x18] sm:$0xff]
        %v427 = vsel %vm384, %v421, 0
        %429 = vmatpush.msra.mxu0 0.0
        %430 = vmatpush.msra.mxu0 0.0
        %431 = vmatpush.msra.mxu0 0.0
        %432 = vmatpush.msra.mxu0 0.0
        %433 = vmatpush.msra.mxu0 0.0
        %434 = vmatpush.msra.mxu0 0.0
        %435 = vmatpush.msra.mxu0 0.0
        %436 = vmatpush.msra.mxu0 0.0
        %437 = vmatpush.msra.mxu0 0.0
        %438 = vmatpush.msra.mxu0 0.0
        %439 = vmatpush.msra.mxu0 0.0
        %440 = vmatpush.msra.mxu0 0.0
        %441 = vmatpush.msra.mxu0 %v425
        %442 = vmatpush.msra.mxu0 %v424
        %443 = vmatpush.msra.mxu0 %v423
        %444 = vmatpush.msra.mxu0 %v422
        %445 = vmatmul.f32.gmra.mxu0 %v427
        %v446 = vpop.f32.mrf.mxu0
        %v447 = vadd.f32 0.0, %v446
        %448 = vdwg.mxu0
        %v449 = vld [vmem:[%s5] sm:$0xff]
        %v450 = vld [vmem:[%s5 + $0x8] sm:$0xff]
        %v451 = vld [vmem:[%s5 + $0x10] sm:$0xff]
        %v452 = vld [vmem:[%s5 + $0x18] sm:$0xff]
        %v453 = vld [vmem:[%s6] sm:$0x1]
        %v455 = vperm.slane %v453, 0
        %v458 = vsel %vm384, %v380, 0
        %v461 = vsel %vm384, %v381, 0
        %463 = vmatpush.msra.mxu0 0.0
        %464 = vmatpush.msra.mxu0 0.0
        %465 = vmatpush.msra.mxu0 0.0
        %466 = vmatpush.msra.mxu0 0.0
        %467 = vmatpush.msra.mxu0 0.0
        %468 = vmatpush.msra.mxu0 0.0
        %469 = vmatpush.msra.mxu0 0.0
        %470 = vmatpush.msra.mxu0 0.0
        %471 = vmatpush.msra.mxu0 0.0
        %472 = vmatpush.msra.mxu0 0.0
        %473 = vmatpush.msra.mxu0 0.0
        %474 = vmatpush.msra.mxu0 0.0
        %475 = vmatpush.msra.mxu0 %v452
        %476 = vmatpush.msra.mxu0 %v451
        %477 = vmatpush.msra.mxu0 %v450
        %478 = vmatpush.msra.mxu0 %v449
        %479 = vmatmul.f32.gmra.mxu0 %v458
        %v480 = vpop.f32.mrf.mxu0
        %v481 = vadd.f32 %v455, %v480
        %482 = vmatmul.f32.gmra.mxu0 %v461
        %v483 = vpop.f32.mrf.mxu0
        %v484 = vadd.f32 %v455, %v483
        %485 = vdwg.mxu0
        %v488 = vrot.slane %v481, 1
        %v489 = vrot.slane %v481, 2
        %v490 = vrot.slane %v481, 3
        %v491 = vrot.slane %v481, 4
        %v492 = vrot.slane %v481, 5
        %v493 = vrot.slane %v481, 6
        %v494 = vrot.slane %v481, 7
        %v495 = vrot.slane %v484, 1
        %v496 = vrot.slane %v484, 2
        %v497 = vrot.slane %v484, 3
        %v498 = vperm.slane %v481, 0
        %v499 = vperm.slane %v488, 0
        %v500 = vperm.slane %v489, 0
        %v501 = vperm.slane %v490, 0
        %v502 = vperm.slane %v491, 0
        %v503 = vperm.slane %v492, 0
        %v504 = vperm.slane %v493, 0
        %v505 = vperm.slane %v494, 0
        %v506 = vperm.slane %v484, 0
        %v507 = vperm.slane %v495, 0
        %v508 = vperm.slane %v496, 0
        %v509 = vperm.slane %v497, 0
        %v522 = vadd.f32 %v498, %v447
        %v523 = vadd.f32 %v499, %v447
        %v524 = vadd.f32 %v500, %v447
        %v525 = vadd.f32 %v501, %v447
        %v526 = vadd.f32 %v502, %v447
        %v527 = vadd.f32 %v503, %v447
        %v528 = vadd.f32 %v504, %v447
        %v529 = vadd.f32 %v505, %v447
        %v530 = vadd.f32 %v506, %v447
        %v531 = vadd.f32 %v507, %v447
        %v532 = vadd.f32 %v508, %v447
        %v533 = vadd.f32 %v509, %v447
        %v534 = vtanh.pop %v522
        %v535 = vtanh.pop %v523
        %v536 = vtanh.pop %v524
        %v537 = vtanh.pop %v525
        %v538 = vtanh.pop %v526
        %v539 = vtanh.pop %v527
        %v540 = vtanh.pop %v528
        %v541 = vtanh.pop %v529
        %v542 = vtanh.pop %v530
        %v543 = vtanh.pop %v531
        %v544 = vtanh.pop %v532
        %v545 = vtanh.pop %v533
        %v546 = vld [vmem:[%s7] sm:$0xff]
        %v547 = vld [vmem:[%s7 + $0x8] sm:$0xff]
        %v548 = vld [vmem:[%s8] sm:$0x1]
        %v550 = vperm.slane %v548, 0
        %vm552 = vcmask 130048
        %v554 = vsel %vm552, %v534, 0
        %v557 = vsel %vm552, %v535, 0
        %v560 = vsel %vm552, %v536, 0
        %v563 = vsel %vm552, %v537, 0
        %v566 = vsel %vm552, %v538, 0
        %v569 = vsel %vm552, %v539, 0
        %v572 = vsel %vm552, %v540, 0
        %v575 = vsel %vm552, %v541, 0
        %v578 = vsel %vm552, %v542, 0
        %v581 = vsel %vm552, %v543, 0
        %v584 = vsel %vm552, %v544, 0
        %v587 = vsel %vm552, %v545, 0
        %589 = vmatpush.msra.mxu0 0.0
        %590 = vmatpush.msra.mxu0 0.0
        %591 = vmatpush.msra.mxu0 0.0
        %592 = vmatpush.msra.mxu0 0.0
        %593 = vmatpush.msra.mxu0 0.0
        %594 = vmatpush.msra.mxu0 0.0
        %595 = vmatpush.msra.mxu0 0.0
        %596 = vmatpush.msra.mxu0 0.0
        %597 = vmatpush.msra.mxu0 0.0
        %598 = vmatpush.msra.mxu0 0.0
        %599 = vmatpush.msra.mxu0 0.0
        %600 = vmatpush.msra.mxu0 0.0
        %601 = vmatpush.msra.mxu0 0.0
        %602 = vmatpush.msra.mxu0 0.0
        %603 = vmatpush.msra.mxu0 %v547
        %604 = vmatpush.msra.mxu0 %v546
        %605 = vmatmul.f32.gmra.mxu0 %v554
        %v606 = vpop.f32.mrf.mxu0
        %v607 = vadd.f32 %v550, %v606
        %608 = vmatmul.f32.gmra.mxu0 %v557
        %v609 = vpop.f32.mrf.mxu0
        %v610 = vadd.f32 %v550, %v609
        %611 = vmatmul.f32.gmra.mxu0 %v560
        %v612 = vpop.f32.mrf.mxu0
        %v613 = vadd.f32 %v550, %v612
        %614 = vmatmul.f32.gmra.mxu0 %v563
        %v615 = vpop.f32.mrf.mxu0
        %v616 = vadd.f32 %v550, %v615
        %617 = vmatmul.f32.gmra.mxu0 %v566
        %v618 = vpop.f32.mrf.mxu0
        %v619 = vadd.f32 %v550, %v618
        %620 = vmatmul.f32.gmra.mxu0 %v569
        %v621 = vpop.f32.mrf.mxu0
        %v622 = vadd.f32 %v550, %v621
        %623 = vmatmul.f32.gmra.mxu0 %v572
        %v624 = vpop.f32.mrf.mxu0
        %v625 = vadd.f32 %v550, %v624
        %626 = vmatmul.f32.gmra.mxu0 %v575
        %v627 = vpop.f32.mrf.mxu0
        %v628 = vadd.f32 %v550, %v627
        %629 = vmatmul.f32.gmra.mxu0 %v578
        %v630 = vpop.f32.mrf.mxu0
        %v631 = vadd.f32 %v550, %v630
        %632 = vmatmul.f32.gmra.mxu0 %v581
        %v633 = vpop.f32.mrf.mxu0
        %v634 = vadd.f32 %v550, %v633
        %635 = vmatmul.f32.gmra.mxu0 %v584
        %v636 = vpop.f32.mrf.mxu0
        %v637 = vadd.f32 %v550, %v636
        %638 = vmatmul.f32.gmra.mxu0 %v587
        %v639 = vpop.f32.mrf.mxu0
        %v640 = vadd.f32 %v550, %v639
        %641 = vdwg.mxu0
        %vm642 = vcmask 162816
        %643 = vst.msk [vmem:[%s363] sm:$0xff] %vm642, %v607
        %644 = vst.msk [vmem:[%s363 + $0x8] sm:$0xff] %vm642, %v610
        %645 = vst.msk [vmem:[%s363 + $0x10] sm:$0xff] %vm642, %v613
        %646 = vst.msk [vmem:[%s363 + $0x18] sm:$0xff] %vm642, %v616
        %647 = vst.msk [vmem:[%s363 + $0x20] sm:$0xff] %vm642, %v619
        %648 = vst.msk [vmem:[%s363 + $0x28] sm:$0xff] %vm642, %v622
        %649 = vst.msk [vmem:[%s363 + $0x30] sm:$0xff] %vm642, %v625
        %650 = vst.msk [vmem:[%s363 + $0x38] sm:$0xff] %vm642, %v628
        %651 = vst.msk [vmem:[%s363 + $0x40] sm:$0xff] %vm642, %v631
        %652 = vst.msk [vmem:[%s363 + $0x48] sm:$0xff] %vm642, %v634
        %653 = vst.msk [vmem:[%s363 + $0x50] sm:$0xff] %vm642, %v637
        %654 = vst.msk [vmem:[%s363 + $0x58] sm:$0xff] %vm642, %v640
        %s655 = sand.u32 %s246, 1
        %s656 = scalar_lea.sflag [#allocation3], %s655
        %s657 = sand.u32 %s246, 1
        %s658 = smul.addr %s657, 96
        %s659 = scalar_lea.vmem [#allocation2], %s658
        // Predicated region
        $region57: #{decoder_forward.3} parent=55 // pred_check
          %p660 = pneg %p256
        $region58: #{decoder_forward.3} parent=55 // pred_check_branch
          %662 = sbr.rel (%p660) target = $region60
        $region59: #{decoder_forward.3} parent=55 // pred_region
          %s663 = smul.u32 12, %s28
          %665 = vsyncadd %s656, 0
          %s666 = smul.addr %s27, 12
          %s667 = sadd.s32 %s663, %s666
          %s668 = smul.addr %s667, 8
          %s669 = scalar_lea.hbm %s9, %s668
          %s670 = sshll.u32 %s659, 4
          %s671 = int_to_ptr.vmem [resolvable:$true] %s670
          %s672 = sshll.u32 %s669, 4
          %s673 = int_to_ptr.hbm [resolvable:$true] %s672
          %678 = dma.vmem_to_hbm [thread:$0]  %s671, 1536, %s673, %s656, 128, 128, 8
        $region60: #{decoder_forward.3} parent=55 // pred_fallthru
          _
      $region56: #{decoder_forward.3} parent=5 // pred_fallthru
        _
      %p679 = scmp.le.s32.totalorder 2, %s18
      // Predicated region
      $region61: #{decoder_forward.3} parent=5 // pred_check
        %p680 = pneg %p679
      $region62: #{decoder_forward.3} parent=5 // pred_check_branch
        %682 = sbr.rel (%p680) target = $region64
      $region63: #{decoder_forward.3} parent=5 // pred_region
        %s683 = ssub.s32 %s18, 2
        // Predicated region
        $region65: #{decoder_forward.3} parent=63 // pred_check
          %p684 = pneg %p262
        $region66: #{decoder_forward.3} parent=63 // pred_check_branch
          %686 = sbr.rel (%p684) target = $region68
        $region67: #{decoder_forward.3} parent=63 // pred_region
          %s687 = sand.u32 %s247, 1
          %s688 = scalar_lea.sflag [#allocation3], %s687
          %s689 = sand.u32 %s247, 1
          %s690 = smul.addr %s689, 96
          %s691 = scalar_lea.vmem [#allocation2], %s690
          %693 = dma.done %s688, 1536
        $region68: #{decoder_forward.3} parent=63 // pred_fallthru
          _
      $region64: #{decoder_forward.3} parent=5 // pred_fallthru
        _
    $region6: #{decoder_forward.3} parent=1 // loop_footer
      %s22 = sadd.s32 1, %s18
    $region7: #{decoder_forward.3} parent=1 // loop_footer_branch
      %17 = sbr.rel target = $region3
    $region8: #{decoder_forward.3} parent=1 // loop_exit
      _
    %694 = vsyncpa [#allocation3], 1
    %s695 = scalar_lea.sflag [#allocation3], 1
    %696 = vsyncpa %s695, 1

// kernel: decoder_forward.2
$region0: #{decoder_forward.2}
  #allocation0 [shape = 'u32[]', space=smem, size = 0x4, offset = 0x4, fixed_abs, tag = 'smem constant byte address 0x4 - core index']
  #allocation1 [shape = 'u32[72,128]{1,0:T(1,128)}', space=vmem, size = 0x9000, scoped, tag = 'internal scratch']
  %s0 = inlined_call_operand.vmem [shape: f32[2,8,32], index: 0, kind: input, shape index: {}]
  %s1 = inlined_call_operand.vmem [shape: f32[2,8,8], index: 1, kind: input, shape index: {}]
  %s2 = inlined_call_operand.vmem [shape: f32[2,1,32], index: 2, kind: input, shape index: {}]
  %s3 = inlined_call_operand.vmem [shape: f32[2,1,32], index: 3, kind: input, shape index: {}]
  %s4 = inlined_call_operand.vmem [shape: f32[2,32,96], index: 4, kind: input, shape index: {}]
  %s5 = inlined_call_operand.vmem [shape: f32[2,1,96], index: 5, kind: input, shape index: {}]
  %s6 = inlined_call_operand.vmem [shape: f32[2,32,32], index: 6, kind: input, shape index: {}]
  %s7 = inlined_call_operand.vmem [shape: f32[2,1,32], index: 7, kind: input, shape index: {}]
  %s8 = inlined_call_operand.vmem [shape: f32[2,1,32], index: 8, kind: input, shape index: {}]
  %s9 = inlined_call_operand.vmem [shape: f32[2,1,32], index: 9, kind: input, shape index: {}]
  %s10 = inlined_call_operand.vmem [shape: f32[2,32,64], index: 10, kind: input, shape index: {}]
  %s11 = inlined_call_operand.vmem [shape: f32[2,1,64], index: 11, kind: input, shape index: {}]
  %s12 = inlined_call_operand.vmem [shape: f32[2,64,32], index: 12, kind: input, shape index: {}]
  %s13 = inlined_call_operand.vmem [shape: f32[2,1,32], index: 13, kind: input, shape index: {}]
  %s14 = inlined_call_operand.vmem [shape: f32[2,8,32], index: 14, kind: output, shape index: {}]
  %s15 = sld [smem:[#allocation0]]
  $region93: #{decoder_forward.2} parent=0
    _
  %s17 = ssub.s32 1, %s15
  %s18 = scalar_select 0, %s17, %s15
  loop: start=0, step=1, limit=4
  $region2: #{decoder_forward.2} parent=0 // loop_pre_header
    _
  $region3: #{decoder_forward.2} parent=0 // loop_header
    %s20 = sphi 0, %s24
    %p21 = scmp.ge.s32.totalorder %s20, 4
    %s27 = sphi 0, %s39
    %s28 = sphi 0, %s35
    %s29 = sphi 0, %s27
    %s30 = sphi 0, %s28
    %s31 = sphi 0, %s29
    %s32 = sphi 0, %s30
    %s42 = sphi 0, %s44
    %s45 = sphi 0, %s42
    %s46 = sphi 0, %s45
    %s62 = sphi 0, %s46
    %s68 = sphi 0, %s70
    %s71 = sphi 0, %s68
    %s72 = sphi 0, %s71
    %s88 = sphi 0, %s72
    %s94 = sphi 0, %s96
    %s97 = sphi 0, %s94
    %s98 = sphi 0, %s97
    %s114 = sphi 0, %s98
    %s120 = sphi 0, %s122
    %s123 = sphi 0, %s120
    %s124 = sphi 0, %s123
    %s140 = sphi 0, %s124
    %s146 = sphi 0, %s148
    %s149 = sphi 0, %s146
    %s150 = sphi 0, %s149
    %s166 = sphi 0, %s150
    %s172 = sphi 0, %s174
    %s175 = sphi 0, %s172
    %s176 = sphi 0, %s175
    %s192 = sphi 0, %s176
    %s198 = sphi 0, %s200
    %s201 = sphi 0, %s198
    %s202 = sphi 0, %s201
    %s218 = sphi 0, %s202
    %s224 = sphi 0, %s226
    %s227 = sphi 0, %s224
    %s228 = sphi 0, %s227
    %s244 = sphi 0, %s228
    %s250 = sphi 0, %s252
    %s253 = sphi 0, %s250
    %s254 = sphi 0, %s253
    %s270 = sphi 0, %s254
    %s276 = sphi 0, %s278
    %s279 = sphi 0, %s276
    %s280 = sphi 0, %s279
    %s296 = sphi 0, %s280
    %s302 = sphi 0, %s304
    %s305 = sphi 0, %s302
    %s306 = sphi 0, %s305
    %s322 = sphi 0, %s306
    %s328 = sphi 0, %s330
    %s331 = sphi 0, %s328
    %s332 = sphi 0, %s331
    %s348 = sphi 0, %s332
    %s354 = sphi 0, %s356
    %s357 = sphi 0, %s354
    %s358 = sphi 0, %s357
    %s374 = sphi 0, %s358
    %s380 = sphi 0, %s382
    %s383 = sphi 0, %s380
    %s384 = sphi 0, %s383
    %s400 = sphi 0, %s384
    %s406 = sphi 0, %s408
    %s409 = sphi 0, %s406
    %s410 = sphi 0, %s409
    %s426 = sphi 0, %s410
  $region4: #{decoder_forward.2} parent=0 // loop_header_branch
    %23 = sbr.rel (%p21) target = $region8
  $region5: #{decoder_forward.2} parent=0 // loop_body
    %s25 = ssub.s32 %s20, 1
    %s26 = ssub.s32 %s20, 2
    %s33 = sadd.s32 1, %s28
    %p34 = scmp.ge.s32.totalorder %s33, 2
    %s35 = scalar_select %p34, 0, %s33
    %s36 = sadd.s32 1, %s27
    %s37 = scalar_select %p34, %s36, %s27
    %p38 = scmp.ge.s32.totalorder %s37, 1
    %s39 = scalar_select %p38, 0, %s37
    %s40 = ssub.s32 %s27, %s39
    %p41 = scmp.eq.s32.totalorder %s40, 0
    %s43 = sadd.s32 %s42, 1
    %s44 = scalar_select %p41, %s42, %s43
    %p47 = pneg %p41
    %p48 = scmp.eq.s32.totalorder %s20, 1
    %p49 = por %p47, %p48
    %p50 = scmp.ne.s32.totalorder %s42, %s45
    %p51 = scmp.eq.s32.totalorder %s20, 0
    %p52 = por %p50, %p51
    %p53 = scmp.ne.s32.totalorder %s42, %s45
    %p54 = scmp.eq.s32.totalorder %s25, 1
    %p55 = por %p53, %p54
    %p56 = scmp.ne.s32.totalorder %s45, %s46
    %p57 = scmp.eq.s32.totalorder %s25, 0
    %p58 = por %p56, %p57
    %p59 = scmp.ne.s32.totalorder %s45, %s46
    %p60 = scmp.eq.s32.totalorder %s26, 1
    %p61 = por %p59, %p60
    %p63 = scmp.ne.s32.totalorder %s46, %s62
    %p64 = scmp.eq.s32.totalorder %s26, 0
    %p65 = por %p63, %p64
    %s66 = ssub.s32 %s27, %s39
    %p67 = scmp.eq.s32.totalorder %s66, 0
    %s69 = sadd.s32 %s68, 1
    %s70 = scalar_select %p67, %s68, %s69
    %p73 = pneg %p67
    %p74 = scmp.eq.s32.totalorder %s20, 1
    %p75 = por %p73, %p74
    %p76 = scmp.ne.s32.totalorder %s68, %s71
    %p77 = scmp.eq.s32.totalorder %s20, 0
    %p78 = por %p76, %p77
    %p79 = scmp.ne.s32.totalorder %s68, %s71
    %p80 = scmp.eq.s32.totalorder %s25, 1
    %p81 = por %p79, %p80
    %p82 = scmp.ne.s32.totalorder %s71, %s72
    %p83 = scmp.eq.s32.totalorder %s25, 0
    %p84 = por %p82, %p83
    %p85 = scmp.ne.s32.totalorder %s71, %s72
    %p86 = scmp.eq.s32.totalorder %s26, 1
    %p87 = por %p85, %p86
    %p89 = scmp.ne.s32.totalorder %s72, %s88
    %p90 = scmp.eq.s32.totalorder %s26, 0
    %p91 = por %p89, %p90
    %s92 = ssub.s32 %s28, %s35
    %p93 = scmp.eq.s32.totalorder %s92, 0
    %s95 = sadd.s32 %s94, 1
    %s96 = scalar_select %p93, %s94, %s95
    %p99 = pneg %p93
    %p100 = scmp.eq.s32.totalorder %s20, 1
    %p101 = por %p99, %p100
    %p102 = scmp.ne.s32.totalorder %s94, %s97
    %p103 = scmp.eq.s32.totalorder %s20, 0
    %p104 = por %p102, %p103
    %p105 = scmp.ne.s32.totalorder %s94, %s97
    %p106 = scmp.eq.s32.totalorder %s25, 1
    %p107 = por %p105, %p106
    %p108 = scmp.ne.s32.totalorder %s97, %s98
    %p109 = scmp.eq.s32.totalorder %s25, 0
    %p110 = por %p108, %p109
    %p111 = scmp.ne.s32.totalorder %s97, %s98
    %p112 = scmp.eq.s32.totalorder %s26, 1
    %p113 = por %p111, %p112
    %p115 = scmp.ne.s32.totalorder %s98, %s114
    %p116 = scmp.eq.s32.totalorder %s26, 0
    %p117 = por %p115, %p116
    %s118 = ssub.s32 %s28, %s35
    %p119 = scmp.eq.s32.totalorder %s118, 0
    %s121 = sadd.s32 %s120, 1
    %s122 = scalar_select %p119, %s120, %s121
    %p125 = pneg %p119
    %p126 = scmp.eq.s32.totalorder %s20, 1
    %p127 = por %p125, %p126
    %p128 = scmp.ne.s32.totalorder %s120, %s123
    %p129 = scmp.eq.s32.totalorder %s20, 0
    %p130 = por %p128, %p129
    %p131 = scmp.ne.s32.totalorder %s120, %s123
    %p132 = scmp.eq.s32.totalorder %s25, 1
    %p133 = por %p131, %p132
    %p134 = scmp.ne.s32.totalorder %s123, %s124
    %p135 = scmp.eq.s32.totalorder %s25, 0
    %p136 = por %p134, %p135
    %p137 = scmp.ne.s32.totalorder %s123, %s124
    %p138 = scmp.eq.s32.totalorder %s26, 1
    %p139 = por %p137, %p138
    %p141 = scmp.ne.s32.totalorder %s124, %s140
    %p142 = scmp.eq.s32.totalorder %s26, 0
    %p143 = por %p141, %p142
    %s144 = ssub.s32 %s28, %s35
    %p145 = scmp.eq.s32.totalorder %s144, 0
    %s147 = sadd.s32 %s146, 1
    %s148 = scalar_select %p145, %s146, %s147
    %p151 = pneg %p145
    %p152 = scmp.eq.s32.totalorder %s20, 1
    %p153 = por %p151, %p152
    %p154 = scmp.ne.s32.totalorder %s146, %s149
    %p155 = scmp.eq.s32.totalorder %s20, 0
    %p156 = por %p154, %p155
    %p157 = scmp.ne.s32.totalorder %s146, %s149
    %p158 = scmp.eq.s32.totalorder %s25, 1
    %p159 = por %p157, %p158
    %p160 = scmp.ne.s32.totalorder %s149, %s150
    %p161 = scmp.eq.s32.totalorder %s25, 0
    %p162 = por %p160, %p161
    %p163 = scmp.ne.s32.totalorder %s149, %s150
    %p164 = scmp.eq.s32.totalorder %s26, 1
    %p165 = por %p163, %p164
    %p167 = scmp.ne.s32.totalorder %s150, %s166
    %p168 = scmp.eq.s32.totalorder %s26, 0
    %p169 = por %p167, %p168
    %s170 = ssub.s32 %s28, %s35
    %p171 = scmp.eq.s32.totalorder %s170, 0
    %s173 = sadd.s32 %s172, 1
    %s174 = scalar_select %p171, %s172, %s173
    %p177 = pneg %p171
    %p178 = scmp.eq.s32.totalorder %s20, 1
    %p179 = por %p177, %p178
    %p180 = scmp.ne.s32.totalorder %s172, %s175
    %p181 = scmp.eq.s32.totalorder %s20, 0
    %p182 = por %p180, %p181
    %p183 = scmp.ne.s32.totalorder %s172, %s175
    %p184 = scmp.eq.s32.totalorder %s25, 1
    %p185 = por %p183, %p184
    %p186 = scmp.ne.s32.totalorder %s175, %s176
    %p187 = scmp.eq.s32.totalorder %s25, 0
    %p188 = por %p186, %p187
    %p189 = scmp.ne.s32.totalorder %s175, %s176
    %p190 = scmp.eq.s32.totalorder %s26, 1
    %p191 = por %p189, %p190
    %p193 = scmp.ne.s32.totalorder %s176, %s192
    %p194 = scmp.eq.s32.totalorder %s26, 0
    %p195 = por %p193, %p194
    %s196 = ssub.s32 %s28, %s35
    %p197 = scmp.eq.s32.totalorder %s196, 0
    %s199 = sadd.s32 %s198, 1
    %s200 = scalar_select %p197, %s198, %s199
    %p203 = pneg %p197
    %p204 = scmp.eq.s32.totalorder %s20, 1
    %p205 = por %p203, %p204
    %p206 = scmp.ne.s32.totalorder %s198, %s201
    %p207 = scmp.eq.s32.totalorder %s20, 0
    %p208 = por %p206, %p207
    %p209 = scmp.ne.s32.totalorder %s198, %s201
    %p210 = scmp.eq.s32.totalorder %s25, 1
    %p211 = por %p209, %p210
    %p212 = scmp.ne.s32.totalorder %s201, %s202
    %p213 = scmp.eq.s32.totalorder %s25, 0
    %p214 = por %p212, %p213
    %p215 = scmp.ne.s32.totalorder %s201, %s202
    %p216 = scmp.eq.s32.totalorder %s26, 1
    %p217 = por %p215, %p216
    %p219 = scmp.ne.s32.totalorder %s202, %s218
    %p220 = scmp.eq.s32.totalorder %s26, 0
    %p221 = por %p219, %p220
    %s222 = ssub.s32 %s28, %s35
    %p223 = scmp.eq.s32.totalorder %s222, 0
    %s225 = sadd.s32 %s224, 1
    %s226 = scalar_select %p223, %s224, %s225
    %p229 = pneg %p223
    %p230 = scmp.eq.s32.totalorder %s20, 1
    %p231 = por %p229, %p230
    %p232 = scmp.ne.s32.totalorder %s224, %s227
    %p233 = scmp.eq.s32.totalorder %s20, 0
    %p234 = por %p232, %p233
    %p235 = scmp.ne.s32.totalorder %s224, %s227
    %p236 = scmp.eq.s32.totalorder %s25, 1
    %p237 = por %p235, %p236
    %p238 = scmp.ne.s32.totalorder %s227, %s228
    %p239 = scmp.eq.s32.totalorder %s25, 0
    %p240 = por %p238, %p239
    %p241 = scmp.ne.s32.totalorder %s227, %s228
    %p242 = scmp.eq.s32.totalorder %s26, 1
    %p243 = por %p241, %p242
    %p245 = scmp.ne.s32.totalorder %s228, %s244
    %p246 = scmp.eq.s32.totalorder %s26, 0
    %p247 = por %p245, %p246
    %s248 = ssub.s32 %s28, %s35
    %p249 = scmp.eq.s32.totalorder %s248, 0
    %s251 = sadd.s32 %s250, 1
    %s252 = scalar_select %p249, %s250, %s251
    %p255 = pneg %p249
    %p256 = scmp.eq.s32.totalorder %s20, 1
    %p257 = por %p255, %p256
    %p258 = scmp.ne.s32.totalorder %s250, %s253
    %p259 = scmp.eq.s32.totalorder %s20, 0
    %p260 = por %p258, %p259
    %p261 = scmp.ne.s32.totalorder %s250, %s253
    %p262 = scmp.eq.s32.totalorder %s25, 1
    %p263 = por %p261, %p262
    %p264 = scmp.ne.s32.totalorder %s253, %s254
    %p265 = scmp.eq.s32.totalorder %s25, 0
    %p266 = por %p264, %p265
    %p267 = scmp.ne.s32.totalorder %s253, %s254
    %p268 = scmp.eq.s32.totalorder %s26, 1
    %p269 = por %p267, %p268
    %p271 = scmp.ne.s32.totalorder %s254, %s270
    %p272 = scmp.eq.s32.totalorder %s26, 0
    %p273 = por %p271, %p272
    %s274 = ssub.s32 %s28, %s35
    %p275 = scmp.eq.s32.totalorder %s274, 0
    %s277 = sadd.s32 %s276, 1
    %s278 = scalar_select %p275, %s276, %s277
    %p281 = pneg %p275
    %p282 = scmp.eq.s32.totalorder %s20, 1
    %p283 = por %p281, %p282
    %p284 = scmp.ne.s32.totalorder %s276, %s279
    %p285 = scmp.eq.s32.totalorder %s20, 0
    %p286 = por %p284, %p285
    %p287 = scmp.ne.s32.totalorder %s276, %s279
    %p288 = scmp.eq.s32.totalorder %s25, 1
    %p289 = por %p287, %p288
    %p290 = scmp.ne.s32.totalorder %s279, %s280
    %p291 = scmp.eq.s32.totalorder %s25, 0
    %p292 = por %p290, %p291
    %p293 = scmp.ne.s32.totalorder %s279, %s280
    %p294 = scmp.eq.s32.totalorder %s26, 1
    %p295 = por %p293, %p294
    %p297 = scmp.ne.s32.totalorder %s280, %s296
    %p298 = scmp.eq.s32.totalorder %s26, 0
    %p299 = por %p297, %p298
    %s300 = ssub.s32 %s28, %s35
    %p301 = scmp.eq.s32.totalorder %s300, 0
    %s303 = sadd.s32 %s302, 1
    %s304 = scalar_select %p301, %s302, %s303
    %p307 = pneg %p301
    %p308 = scmp.eq.s32.totalorder %s20, 1
    %p309 = por %p307, %p308
    %p310 = scmp.ne.s32.totalorder %s302, %s305
    %p311 = scmp.eq.s32.totalorder %s20, 0
    %p312 = por %p310, %p311
    %p313 = scmp.ne.s32.totalorder %s302, %s305
    %p314 = scmp.eq.s32.totalorder %s25, 1
    %p315 = por %p313, %p314
    %p316 = scmp.ne.s32.totalorder %s305, %s306
    %p317 = scmp.eq.s32.totalorder %s25, 0
    %p318 = por %p316, %p317
    %p319 = scmp.ne.s32.totalorder %s305, %s306
    %p320 = scmp.eq.s32.totalorder %s26, 1
    %p321 = por %p319, %p320
    %p323 = scmp.ne.s32.totalorder %s306, %s322
    %p324 = scmp.eq.s32.totalorder %s26, 0
    %p325 = por %p323, %p324
    %s326 = ssub.s32 %s28, %s35
    %p327 = scmp.eq.s32.totalorder %s326, 0
    %s329 = sadd.s32 %s328, 1
    %s330 = scalar_select %p327, %s328, %s329
    %p333 = pneg %p327
    %p334 = scmp.eq.s32.totalorder %s20, 1
    %p335 = por %p333, %p334
    %p336 = scmp.ne.s32.totalorder %s328, %s331
    %p337 = scmp.eq.s32.totalorder %s20, 0
    %p338 = por %p336, %p337
    %p339 = scmp.ne.s32.totalorder %s328, %s331
    %p340 = scmp.eq.s32.totalorder %s25, 1
    %p341 = por %p339, %p340
    %p342 = scmp.ne.s32.totalorder %s331, %s332
    %p343 = scmp.eq.s32.totalorder %s25, 0
    %p344 = por %p342, %p343
    %p345 = scmp.ne.s32.totalorder %s331, %s332
    %p346 = scmp.eq.s32.totalorder %s26, 1
    %p347 = por %p345, %p346
    %p349 = scmp.ne.s32.totalorder %s332, %s348
    %p350 = scmp.eq.s32.totalorder %s26, 0
    %p351 = por %p349, %p350
    %s352 = ssub.s32 %s28, %s35
    %p353 = scmp.eq.s32.totalorder %s352, 0
    %s355 = sadd.s32 %s354, 1
    %s356 = scalar_select %p353, %s354, %s355
    %p359 = pneg %p353
    %p360 = scmp.eq.s32.totalorder %s20, 1
    %p361 = por %p359, %p360
    %p362 = scmp.ne.s32.totalorder %s354, %s357
    %p363 = scmp.eq.s32.totalorder %s20, 0
    %p364 = por %p362, %p363
    %p365 = scmp.ne.s32.totalorder %s354, %s357
    %p366 = scmp.eq.s32.totalorder %s25, 1
    %p367 = por %p365, %p366
    %p368 = scmp.ne.s32.totalorder %s357, %s358
    %p369 = scmp.eq.s32.totalorder %s25, 0
    %p370 = por %p368, %p369
    %p371 = scmp.ne.s32.totalorder %s357, %s358
    %p372 = scmp.eq.s32.totalorder %s26, 1
    %p373 = por %p371, %p372
    %p375 = scmp.ne.s32.totalorder %s358, %s374
    %p376 = scmp.eq.s32.totalorder %s26, 0
    %p377 = por %p375, %p376
    %s378 = ssub.s32 %s28, %s35
    %p379 = scmp.eq.s32.totalorder %s378, 0
    %s381 = sadd.s32 %s380, 1
    %s382 = scalar_select %p379, %s380, %s381
    %p385 = pneg %p379
    %p386 = scmp.eq.s32.totalorder %s20, 1
    %p387 = por %p385, %p386
    %p388 = scmp.ne.s32.totalorder %s380, %s383
    %p389 = scmp.eq.s32.totalorder %s20, 0
    %p390 = por %p388, %p389
    %p391 = scmp.ne.s32.totalorder %s380, %s383
    %p392 = scmp.eq.s32.totalorder %s25, 1
    %p393 = por %p391, %p392
    %p394 = scmp.ne.s32.totalorder %s383, %s384
    %p395 = scmp.eq.s32.totalorder %s25, 0
    %p396 = por %p394, %p395
    %p397 = scmp.ne.s32.totalorder %s383, %s384
    %p398 = scmp.eq.s32.totalorder %s26, 1
    %p399 = por %p397, %p398
    %p401 = scmp.ne.s32.totalorder %s384, %s400
    %p402 = scmp.eq.s32.totalorder %s26, 0
    %p403 = por %p401, %p402
    %s404 = ssub.s32 %s27, %s39
    %p405 = scmp.eq.s32.totalorder %s404, 0
    %s407 = sadd.s32 %s406, 1
    %s408 = scalar_select %p405, %s406, %s407
    %p411 = pneg %p405
    %p412 = scmp.eq.s32.totalorder %s20, 1
    %p413 = por %p411, %p412
    %p414 = scmp.ne.s32.totalorder %s406, %s409
    %p415 = scmp.eq.s32.totalorder %s20, 0
    %p416 = por %p414, %p415
    %p417 = scmp.ne.s32.totalorder %s406, %s409
    %p418 = scmp.eq.s32.totalorder %s25, 1
    %p419 = por %p417, %p418
    %p420 = scmp.ne.s32.totalorder %s409, %s410
    %p421 = scmp.eq.s32.totalorder %s25, 0
    %p422 = por %p420, %p421
    %p423 = scmp.ne.s32.totalorder %s409, %s410
    %p424 = scmp.eq.s32.totalorder %s26, 1
    %p425 = por %p423, %p424
    %p427 = scmp.ne.s32.totalorder %s410, %s426
    %p428 = scmp.eq.s32.totalorder %s26, 0
    %p429 = por %p427, %p428
    %p430 = scmp.le.s32.totalorder 1, %s20
    %p431 = scmp.lt.s32.totalorder %s20, 3
    %p432 = pnand %p430, %p431
    %p433 = pneg %p432
    // Predicated region
    $region9: #{decoder_forward.2} parent=5 // pred_check
      _
    $region10: #{decoder_forward.2} parent=5 // pred_check_branch
      %435 = sbr.rel (%p432) target = $region12
    $region11: #{decoder_forward.2} parent=5 // pred_region
      %s436 = ssub.s32 %s20, 1
      // Predicated region
      $region13: #{decoder_forward.2} parent=11 // pred_check
        %p437 = pneg %p58
      $region14: #{decoder_forward.2} parent=11 // pred_check_branch
        %439 = sbr.rel (%p437) target = $region16
      $region15: #{decoder_forward.2} parent=11 // pred_region
        %s440 = smul.u32 2, %s29
        %p441 = scmp.lt.s32.totalorder %s440, 1
        %s442 = scalar_select %p441, %s440, 1
        %s443 = smul.addr %s442, 8
        %s444 = scalar_lea.vmem %s0, %s443
        %s445 = smul.u32 2, %s29
      $region16: #{decoder_forward.2} parent=11 // pred_fallthru
        _
      // Predicated region
      $region17: #{decoder_forward.2} parent=11 // pred_check
        %p446 = pneg %p84
      $region18: #{decoder_forward.2} parent=11 // pred_check_branch
        %448 = sbr.rel (%p446) target = $region20
      $region19: #{decoder_forward.2} parent=11 // pred_region
        %s449 = smul.u32 2, %s29
        %p450 = scmp.lt.s32.totalorder %s449, 1
        %s451 = scalar_select %p450, %s449, 1
        %s452 = smul.addr %s451, 8
        %s453 = scalar_lea.vmem %s1, %s452
        %s454 = smul.u32 2, %s29
      $region20: #{decoder_forward.2} parent=11 // pred_fallthru
        _
    $region12: #{decoder_forward.2} parent=5 // pred_fallthru
      _
    %p455 = scmp.lt.s32.totalorder %s20, 2
    // Predicated region
    $region21: #{decoder_forward.2} parent=5 // pred_check
      %p456 = pneg %p455
    $region22: #{decoder_forward.2} parent=5 // pred_check_branch
      %458 = sbr.rel (%p456) target = $region24
    $region23: #{decoder_forward.2} parent=5 // pred_region
      // Predicated region
      $region25: #{decoder_forward.2} parent=23 // pred_check
        %p459 = pneg %p104
      $region26: #{decoder_forward.2} parent=23 // pred_check_branch
        %461 = sbr.rel (%p459) target = $region28
      $region27: #{decoder_forward.2} parent=23 // pred_region
        %p462 = scmp.lt.s32.totalorder %s28, 1
        %s463 = scalar_select %p462, %s28, 1
        %s464 = scalar_lea.vmem %s2, %s463
      $region28: #{decoder_forward.2} parent=23 // pred_fallthru
        _
      // Predicated region
      $region29: #{decoder_forward.2} parent=23 // pred_check
        %p465 = pneg %p130
      $region30: #{decoder_forward.2} parent=23 // pred_check_branch
        %467 = sbr.rel (%p465) target = $region32
      $region31: #{decoder_forward.2} parent=23 // pred_region
        %p468 = scmp.lt.s32.totalorder %s28, 1
        %s469 = scalar_select %p468, %s28, 1
        %s470 = scalar_lea.vmem %s3, %s469
      $region32: #{decoder_forward.2} parent=23 // pred_fallthru
        _
      // Predicated region
      $region33: #{decoder_forward.2} parent=23 // pred_check
        %p471 = pneg %p156
      $region34: #{decoder_forward.2} parent=23 // pred_check_branch
        %473 = sbr.rel (%p471) target = $region36
      $region35: #{decoder_forward.2} parent=23 // pred_region
        %p474 = scmp.lt.s32.totalorder %s28, 1
        %s475 = scalar_select %p474, %s28, 1
        %s476 = smul.addr %s475, 4
        %s477 = smul.addr %s476, 8
        %s478 = scalar_lea.vmem %s4, %s477
      $region36: #{decoder_forward.2} parent=23 // pred_fallthru
        _
      // Predicated region
      $region37: #{decoder_forward.2} parent=23 // pred_check
        %p479 = pneg %p182
      $region38: #{decoder_forward.2} parent=23 // pred_check_branch
        %481 = sbr.rel (%p479) target = $region40
      $region39: #{decoder_forward.2} parent=23 // pred_region
        %p482 = scmp.lt.s32.totalorder %s28, 1
        %s483 = scalar_select %p482, %s28, 1
        %s484 = scalar_lea.vmem %s5, %s483
      $region40: #{decoder_forward.2} parent=23 // pred_fallthru
        _
      // Predicated region
      $region41: #{decoder_forward.2} parent=23 // pred_check
        %p485 = pneg %p208
      $region42: #{decoder_forward.2} parent=23 // pred_check_branch
        %487 = sbr.rel (%p485) target = $region44
      $region43: #{decoder_forward.2} parent=23 // pred_region
        %p488 = scmp.lt.s32.totalorder %s28, 1
        %s489 = scalar_select %p488, %s28, 1
        %s490 = smul.addr %s489, 4
        %s491 = smul.addr %s490, 8
        %s492 = scalar_lea.vmem %s6, %s491
      $region44: #{decoder_forward.2} parent=23 // pred_fallthru
        _
      // Predicated region
      $region45: #{decoder_forward.2} parent=23 // pred_check
        %p493 = pneg %p234
      $region46: #{decoder_forward.2} parent=23 // pred_check_branch
        %495 = sbr.rel (%p493) target = $region48
      $region47: #{decoder_forward.2} parent=23 // pred_region
        %p496 = scmp.lt.s32.totalorder %s28, 1
        %s497 = scalar_select %p496, %s28, 1
        %s498 = scalar_lea.vmem %s7, %s497
      $region48: #{decoder_forward.2} parent=23 // pred_fallthru
        _
      // Predicated region
      $region49: #{decoder_forward.2} parent=23 // pred_check
        %p499 = pneg %p260
      $region50: #{decoder_forward.2} parent=23 // pred_check_branch
        %501 = sbr.rel (%p499) target = $region52
      $region51: #{decoder_forward.2} parent=23 // pred_region
        %p502 = scmp.lt.s32.totalorder %s28, 1
        %s503 = scalar_select %p502, %s28, 1
        %s504 = scalar_lea.vmem %s8, %s503
      $region52: #{decoder_forward.2} parent=23 // pred_fallthru
        _
      // Predicated region
      $region53: #{decoder_forward.2} parent=23 // pred_check
        %p505 = pneg %p286
      $region54: #{decoder_forward.2} parent=23 // pred_check_branch
        %507 = sbr.rel (%p505) target = $region56
      $region55: #{decoder_forward.2} parent=23 // pred_region
        %p508 = scmp.lt.s32.totalorder %s28, 1
        %s509 = scalar_select %p508, %s28, 1
        %s510 = scalar_lea.vmem %s9, %s509
      $region56: #{decoder_forward.2} parent=23 // pred_fallthru
        _
      // Predicated region
      $region57: #{decoder_forward.2} parent=23 // pred_check
        %p511 = pneg %p312
      $region58: #{decoder_forward.2} parent=23 // pred_check_branch
        %513 = sbr.rel (%p511) target = $region60
      $region59: #{decoder_forward.2} parent=23 // pred_region
        %p514 = scmp.lt.s32.totalorder %s28, 1
        %s515 = scalar_select %p514, %s28, 1
        %s516 = smul.addr %s515, 4
        %s517 = smul.addr %s516, 8
        %s518 = scalar_lea.vmem %s10, %s517
      $region60: #{decoder_forward.2} parent=23 // pred_fallthru
        _
      // Predicated region
      $region61: #{decoder_forward.2} parent=23 // pred_check
        %p519 = pneg %p338
      $region62: #{decoder_forward.2} parent=23 // pred_check_branch
        %521 = sbr.rel (%p519) target = $region64
      $region63: #{decoder_forward.2} parent=23 // pred_region
        %p522 = scmp.lt.s32.totalorder %s28, 1
        %s523 = scalar_select %p522, %s28, 1
        %s524 = scalar_lea.vmem %s11, %s523
      $region64: #{decoder_forward.2} parent=23 // pred_fallthru
        _
      // Predicated region
      $region65: #{decoder_forward.2} parent=23 // pred_check
        %p525 = pneg %p364
      $region66: #{decoder_forward.2} parent=23 // pred_check_branch
        %527 = sbr.rel (%p525) target = $region68
      $region67: #{decoder_forward.2} parent=23 // pred_region
        %p528 = scmp.lt.s32.totalorder %s28, 1
        %s529 = scalar_select %p528, %s28, 1
        %s530 = smul.addr %s529, 8
        %s531 = smul.addr %s530, 8
        %s532 = scalar_lea.vmem %s12, %s531
      $region68: #{decoder_forward.2} parent=23 // pred_fallthru
        _
      // Predicated region
      $region69: #{decoder_forward.2} parent=23 // pred_check
        %p533 = pneg %p390
      $region70: #{decoder_forward.2} parent=23 // pred_check_branch
        %535 = sbr.rel (%p533) target = $region72
      $region71: #{decoder_forward.2} parent=23 // pred_region
        %p536 = scmp.lt.s32.totalorder %s28, 1
        %s537 = scalar_select %p536, %s28, 1
        %s538 = scalar_lea.vmem %s13, %s537
      $region72: #{decoder_forward.2} parent=23 // pred_fallthru
        _
    $region24: #{decoder_forward.2} parent=5 // pred_fallthru
      _
    %p539 = scmp.le.s32.totalorder 1, %s20
    %p540 = scmp.lt.s32.totalorder %s20, 3
    %p541 = pnand %p539, %p540
    %p542 = pneg %p541
    // Predicated region
    $region73: #{decoder_forward.2} parent=5 // pred_check
      _
    $region74: #{decoder_forward.2} parent=5 // pred_check_branch
      %544 = sbr.rel (%p541) target = $region76
    $region75: #{decoder_forward.2} parent=5 // pred_region
      %s545 = ssub.s32 %s20, 1
      %s546 = smul.u32 2, %s29
      %p547 = scmp.lt.s32.totalorder %s546, 1
      %s548 = scalar_select %p547, %s546, 1
      %s549 = smul.addr %s548, 8
      %s550 = scalar_lea.vmem %s0, %s549
      %p551 = pneg %p58
      %p552 = pneg %p55
      %s553 = smul.u32 2, %s29
      %p554 = scmp.lt.s32.totalorder %s553, 1
      %s555 = scalar_select %p554, %s553, 1
      %s556 = smul.addr %s555, 8
      %s557 = scalar_lea.vmem %s1, %s556
      %p558 = pneg %p84
      %p559 = pneg %p81
      %p560 = scmp.lt.s32.totalorder %s30, 1
      %s561 = scalar_select %p560, %s30, 1
      %s562 = scalar_lea.vmem %s2, %s561
      %p563 = pneg %p110
      %p564 = pneg %p107
      %p565 = scmp.lt.s32.totalorder %s30, 1
      %s566 = scalar_select %p565, %s30, 1
      %s567 = scalar_lea.vmem %s3, %s566
      %p568 = pneg %p136
      %p569 = pneg %p133
      %p570 = scmp.lt.s32.totalorder %s30, 1
      %s571 = scalar_select %p570, %s30, 1
      %s572 = smul.addr %s571, 4
      %s573 = smul.addr %s572, 8
      %s574 = scalar_lea.vmem %s4, %s573
      %p575 = pneg %p162
      %p576 = pneg %p159
      %p577 = scmp.lt.s32.totalorder %s30, 1
      %s578 = scalar_select %p577, %s30, 1
      %s579 = scalar_lea.vmem %s5, %s578
      %p580 = pneg %p188
      %p581 = pneg %p185
      %p582 = scmp.lt.s32.totalorder %s30, 1
      %s583 = scalar_select %p582, %s30, 1
      %s584 = smul.addr %s583, 4
      %s585 = smul.addr %s584, 8
      %s586 = scalar_lea.vmem %s6, %s585
      %p587 = pneg %p214
      %p588 = pneg %p211
      %p589 = scmp.lt.s32.totalorder %s30, 1
      %s590 = scalar_select %p589, %s30, 1
      %s591 = scalar_lea.vmem %s7, %s590
      %p592 = pneg %p240
      %p593 = pneg %p237
      %p594 = scmp.lt.s32.totalorder %s30, 1
      %s595 = scalar_select %p594, %s30, 1
      %s596 = scalar_lea.vmem %s8, %s595
      %p597 = pneg %p266
      %p598 = pneg %p263
      %p599 = scmp.lt.s32.totalorder %s30, 1
      %s600 = scalar_select %p599, %s30, 1
      %s601 = scalar_lea.vmem %s9, %s600
      %p602 = pneg %p292
      %p603 = pneg %p289
      %p604 = scmp.lt.s32.totalorder %s30, 1
      %s605 = scalar_select %p604, %s30, 1
      %s606 = smul.addr %s605, 4
      %s607 = smul.addr %s606, 8
      %s608 = scalar_lea.vmem %s10, %s607
      %p609 = pneg %p318
      %p610 = pneg %p315
      %p611 = scmp.lt.s32.totalorder %s30, 1
      %s612 = scalar_select %p611, %s30, 1
      %s613 = scalar_lea.vmem %s11, %s612
      %p614 = pneg %p344
      %p615 = pneg %p341
      %p616 = scmp.lt.s32.totalorder %s30, 1
      %s617 = scalar_select %p616, %s30, 1
      %s618 = smul.addr %s617, 8
      %s619 = smul.addr %s618, 8
      %s620 = scalar_lea.vmem %s12, %s619
      %p621 = pneg %p370
      %p622 = pneg %p367
      %p623 = scmp.lt.s32.totalorder %s30, 1
      %s624 = scalar_select %p623, %s30, 1
      %s625 = scalar_lea.vmem %s13, %s624
      %p626 = pneg %p396
      %p627 = pneg %p393
      %p628 = pneg %p422
      %p629 = pneg %p419
      %s630 = smul.u32 2, %s29
      %p631 = scmp.lt.s32.totalorder %s630, 1
      %s632 = scalar_select %p631, %s630, 1
      %s633 = smul.addr %s632, 8
      %s634 = scalar_lea.vmem %s14, %s633
      %s635 = smul.u32 2, %s29
      %p636 = scmp.lt.s32.totalorder %s635, 1
      %s637 = scalar_select %p636, %s635, 1
      %s638 = smul.addr %s637, 8
      %s639 = scalar_lea.vmem %s0, %s638
      %s640 = smul.u32 2, %s29
      %s641 = smul.u32 2, %s29
      %p642 = scmp.lt.s32.totalorder %s641, 1
      %s643 = scalar_select %p642, %s641, 1
      %s644 = smul.addr %s643, 8
      %s645 = scalar_lea.vmem %s1, %s644
      %s646 = smul.u32 2, %s29
      %p647 = scmp.lt.s32.totalorder %s30, 1
      %s648 = scalar_select %p647, %s30, 1
      %s649 = scalar_lea.vmem %s2, %s648
      %p650 = scmp.lt.s32.totalorder %s30, 1
      %s651 = scalar_select %p650, %s30, 1
      %s652 = scalar_lea.vmem %s3, %s651
      %p653 = scmp.lt.s32.totalorder %s30, 1
      %s654 = scalar_select %p653, %s30, 1
      %s655 = smul.addr %s654, 4
      %s656 = smul.addr %s655, 8
      %s657 = scalar_lea.vmem %s4, %s656
      %p658 = scmp.lt.s32.totalorder %s30, 1
      %s659 = scalar_select %p658, %s30, 1
      %s660 = scalar_lea.vmem %s5, %s659
      %p661 = scmp.lt.s32.totalorder %s30, 1
      %s662 = scalar_select %p661, %s30, 1
      %s663 = smul.addr %s662, 4
      %s664 = smul.addr %s663, 8
      %s665 = scalar_lea.vmem %s6, %s664
      %p666 = scmp.lt.s32.totalorder %s30, 1
      %s667 = scalar_select %p666, %s30, 1
      %s668 = scalar_lea.vmem %s7, %s667
      %p669 = scmp.lt.s32.totalorder %s30, 1
      %s670 = scalar_select %p669, %s30, 1
      %s671 = scalar_lea.vmem %s8, %s670
      %p672 = scmp.lt.s32.totalorder %s30, 1
      %s673 = scalar_select %p672, %s30, 1
      %s674 = scalar_lea.vmem %s9, %s673
      %p675 = scmp.lt.s32.totalorder %s30, 1
      %s676 = scalar_select %p675, %s30, 1
      %s677 = smul.addr %s676, 4
      %s678 = smul.addr %s677, 8
      %s679 = scalar_lea.vmem %s10, %s678
      %p680 = scmp.lt.s32.totalorder %s30, 1
      %s681 = scalar_select %p680, %s30, 1
      %s682 = scalar_lea.vmem %s11, %s681
      %p683 = scmp.lt.s32.totalorder %s30, 1
      %s684 = scalar_select %p683, %s30, 1
      %s685 = smul.addr %s684, 8
      %s686 = smul.addr %s685, 8
      %s687 = scalar_lea.vmem %s12, %s686
      %p688 = scmp.lt.s32.totalorder %s30, 1
      %s689 = scalar_select %p688, %s30, 1
      %s690 = scalar_lea.vmem %s13, %s689
      %s691 = smul.u32 2, %s29
      %p692 = scmp.lt.s32.totalorder %s691, 1
      %s693 = scalar_select %p692, %s691, 1
      %s694 = smul.addr %s693, 8
      %s695 = scalar_lea.vmem %s14, %s694
      %s696 = smul.u32 2, %s29
      %p697 = scmp.eq.s32.totalorder %s30, 0
      // Predicated region
      $region77: #{decoder_forward.2} parent=75 // pred_check
        %p698 = pneg %p697
      $region78: #{decoder_forward.2} parent=75 // pred_check_branch
        %700 = sbr.rel (%p698) target = $region80
      $region79: #{decoder_forward.2} parent=75 // pred_region
        %v701 = vld [vmem:[%s639] sm:$0xff]
        %v702 = vld [vmem:[%s639 + $0x8] sm:$0xff]
        %vm703 = vcmask 261120
        %704 = vst.msk [vmem:[%s695] sm:$0xff] %vm703, %v701
        %705 = vst.msk [vmem:[%s695 + $0x8] sm:$0xff] %vm703, %v702
      $region80: #{decoder_forward.2} parent=75 // pred_fallthru
        _
      %v706 = vld [vmem:[%s695] sm:$0xff]
      %v707 = vld [vmem:[%s695 + $0x8] sm:$0xff]
      %v708 = vld [vmem:[%s645] sm:$0xff]
      %v709 = vld [vmem:[%s645 + $0x8] sm:$0xff]
      %vm710 = vcmp.gt.f32.partialorder %v708, 0.0
      %vm711 = vcmp.gt.f32.partialorder %v709, 0.0
      %v712 = vld [vmem:[%s649] sm:$0x1]
      %v713 = vld [vmem:[%s652] sm:$0x1]
      %vm714 = vcmask 261120
      %v715 = vsel %vm714, %v706, 0.0
      %716 = vadd.xlane.f32.xlu0 %v715
      %v717 = vpop.xlane.xlu0 %716
      %v718 = vsel %vm714, %v707, 0.0
      %719 = vadd.xlane.f32.xlu0 %v718
      %v720 = vpop.xlane.xlu0 %719
      %v721 = vrcp.pop 32.0
      %v722 = vmul.f32 32.0, %v721
      %v723 = vsub.f32 1.0, %v722
      %v724 = vmul.f32 %v721, %v723
      %v725 = vadd.f32 %v721, %v724
      %vm726 = vweird.f32 %v721
      %v727 = vsel %vm726, %v721, %v725
      %v728 = vmul.f32 %v717, %v727
      %v729 = vmul.f32 %v720, %v727
      %v730 = vsub.f32 %v706, %v728
      %v731 = vsub.f32 %v707, %v729
      %v732 = vmul.f32 %v730, %v730
      %v733 = vmul.f32 %v731, %v731
      %v734 = vsel %vm714, %v732, 0.0
      %735 = vadd.xlane.f32.xlu0 %v734
      %v736 = vpop.xlane.xlu0 %735
      %v737 = vsel %vm714, %v733, 0.0
      %738 = vadd.xlane.f32.xlu0 %v737
      %v739 = vpop.xlane.xlu0 %738
      %v740 = vmul.f32 %v736, %v727
      %v741 = vmul.f32 %v739, %v727
      %v742 = vadd.f32 %v740, 1e-12
      %v743 = vadd.f32 %v741, 1e-12
      %v744 = vrsqrt.pop %v742
      %v745 = vmul.f32 %v744, %v742
      %v746 = vmul.f32 %v745, %v744
      %v747 = vmul.f32 0.5, %v746
      %v748 = vsub.f32 1.5, %v747
      %v749 = vmul.f32 %v744, %v748
      %vm750 = vweird.f32 %v742
      %vm751 = vweird.f32 %v744
      %vm752 = vmor %vm750, %vm751
      %v753 = vsel %vm752, %v744, %v749
      %v754 = vrsqrt.pop %v743
      %v755 = vmul.f32 %v754, %v743
      %v756 = vmul.f32 %v755, %v754
      %v757 = vmul.f32 0.5, %v756
      %v758 = vsub.f32 1.5, %v757
      %v759 = vmul.f32 %v754, %v758
      %vm760 = vweird.f32 %v743
      %vm761 = vweird.f32 %v754
      %vm762 = vmor %vm760, %vm761
      %v763 = vsel %vm762, %v754, %v759
      %v764 = vmul.f32 %v730, %v753
      %v765 = vmul.f32 %v731, %v763
      %v767 = vperm.slane %v712, 0
      %v769 = vmul.f32 %v764, %v767
      %v770 = vmul.f32 %v765, %v767
      %v772 = vperm.slane %v713, 0
      %v774 = vadd.f32 %v769, %v772
      %v775 = vadd.f32 %v770, %v772
      %v776 = vld [vmem:[%s657] sm:$0xff]
      %v777 = vld [vmem:[%s657 + $0x8] sm:$0xff]
      %v778 = vld [vmem:[%s657 + $0x10] sm:$0xff]
      %v779 = vld [vmem:[%s657 + $0x18] sm:$0xff]
      %v780 = vld [vmem:[%s660] sm:$0x1]
      %v782 = vperm.slane %v780, 0
      %v785 = vsel %vm714, %v774, 0
      %v788 = vsel %vm714, %v775, 0
      %790 = vmatpush.msra.mxu0 0.0
      %791 = vmatpush.msra.mxu0 0.0
      %792 = vmatpush.msra.mxu0 0.0
      %793 = vmatpush.msra.mxu0 0.0
      %794 = vmatpush.msra.mxu0 0.0
      %795 = vmatpush.msra.mxu0 0.0
      %796 = vmatpush.msra.mxu0 0.0
      %797 = vmatpush.msra.mxu0 0.0
      %798 = vmatpush.msra.mxu0 0.0
      %799 = vmatpush.msra.mxu0 0.0
      %800 = vmatpush.msra.mxu0 0.0
      %801 = vmatpush.msra.mxu0 0.0
      %802 = vmatpush.msra.mxu0 %v779
      %803 = vmatpush.msra.mxu0 %v778
      %804 = vmatpush.msra.mxu0 %v777
      %805 = vmatpush.msra.mxu0 %v776
      %806 = vmatmul.f32.gmra.mxu0 %v785
      %v807 = vpop.f32.mrf.mxu0
      %v808 = vadd.f32 %v782, %v807
      %809 = vmatmul.f32.gmra.mxu0 %v788
      %v810 = vpop.f32.mrf.mxu0
      %v811 = vadd.f32 %v782, %v810
      %812 = vdwg.mxu0
      %814 = vrot.lane.b32.xlu0 %v808, 96
      %v815 = vpop.permute.xlu0 %814
      %vm816 = vcmask 64512
      %v817 = vsel %vm816, %v808, 0
      %v819 = vsel %vm816, %v815, 0
      %821 = vmatpush.xpose.msra.mxu0 0.0
      %822 = vmatpush.xpose.msra.mxu0 0.0
      %823 = vmatpush.xpose.msra.mxu0 0.0
      %824 = vmatpush.xpose.msra.mxu0 0.0
      %825 = vmatpush.xpose.msra.mxu0 0.0
      %826 = vmatpush.xpose.msra.mxu0 0.0
      %827 = vmatpush.xpose.msra.mxu0 0.0
      %828 = vmatpush.xpose.msra.mxu0 0.0
      %829 = vmatpush.xpose.msra.mxu0 0.0
      %830 = vmatpush.xpose.msra.mxu0 0.0
      %831 = vmatpush.xpose.msra.mxu0 0.0
      %832 = vmatpush.xpose.msra.mxu0 0.0
      %833 = vmatpush.xpose.msra.mxu0 0.0
      %834 = vmatpush.xpose.msra.mxu0 0.0
      %835 = vmatpush.xpose.msra.mxu0 0.0
      %836 = vmatpush.xpose.msra.mxu0 %v819
      %837 = vmatmul.f32.gmra.mxu0 %v817
      %v838 = vpop.f32.mrf.mxu0
      %v839 = vadd.f32 0.0, %v838
      %840 = vdwg.mxu0
      %842 = vrot.lane.b32.xlu0 %v811, 96
      %v843 = vpop.permute.xlu0 %842
      %v844 = vsel %vm816, %v811, 0
      %v846 = vsel %vm816, %v843, 0
      %848 = vmatpush.xpose.msra.mxu0 0.0
      %849 = vmatpush.xpose.msra.mxu0 0.0
      %850 = vmatpush.xpose.msra.mxu0 0.0
      %851 = vmatpush.xpose.msra.mxu0 0.0
      %852 = vmatpush.xpose.msra.mxu0 0.0
      %853 = vmatpush.xpose.msra.mxu0 0.0
      %854 = vmatpush.xpose.msra.mxu0 0.0
      %855 = vmatpush.xpose.msra.mxu0 0.0
      %856 = vmatpush.xpose.msra.mxu0 0.0
      %857 = vmatpush.xpose.msra.mxu0 0.0
      %858 = vmatpush.xpose.msra.mxu0 0.0
      %859 = vmatpush.xpose.msra.mxu0 0.0
      %860 = vmatpush.xpose.msra.mxu0 0.0
      %861 = vmatpush.xpose.msra.mxu0 0.0
      %862 = vmatpush.xpose.msra.mxu0 0.0
      %863 = vmatpush.xpose.msra.mxu0 %v846
      %864 = vmatmul.f32.gmra.mxu0 %v844
      %v865 = vpop.f32.mrf.mxu0
      %v866 = vadd.f32 0.0, %v865
      %867 = vdwg.mxu0
      %v868 = vmul.f32 %v839, 0.35355338
      %v869 = vmul.f32 %v866, 0.35355338
      %v870 = vsel %vm710, %v868, -3.4028235e+38
      %v871 = vsel %vm711, %v869, -3.4028235e+38
      %v872 = vsel %vm816, %v870, -inf
      %873 = vmax.xlane.f32.xlu0 %v872
      %v874 = vpop.xlane.xlu0 %873
      %v875 = vsel %vm816, %v871, -inf
      %876 = vmax.xlane.f32.xlu0 %v875
      %v877 = vpop.xlane.xlu0 %876
      %v878 = vsub.f32 %v870, %v874
      %v879 = vsub.f32 %v871, %v877
      %v880 = vmul.f32 %v878, 1.442695
      %v881 = vpow.pop %v880
      %v882 = vmul.f32 %v879, 1.442695
      %v883 = vpow.pop %v882
      %v884 = vsel %vm816, %v881, 0.0
      %885 = vadd.xlane.f32.xlu0 %v884
      %v886 = vpop.xlane.xlu0 %885
      %v887 = vsel %vm816, %v883, 0.0
      %888 = vadd.xlane.f32.xlu0 %v887
      %v889 = vpop.xlane.xlu0 %888
      %v890 = vrcp.pop %v886
      %v891 = vmul.f32 %v886, %v890
      %v892 = vsub.f32 1.0, %v891
      %v893 = vmul.f32 %v890, %v892
      %v894 = vadd.f32 %v890, %v893
      %vm895 = vweird.f32 %v886
      %vm896 = vweird.f32 %v890
      %vm897 = vmor %vm895, %vm896
      %v898 = vsel %vm897, %v890, %v894
      %v899 = vand.u32 2147483647, %v886
      %vm900 = vcmp.eq.f32.partialorder %v899, 8.507059e+37
      %v901 = vand.u32 %v886, 2147483648
      %v902 = vor.u32 1.1754944e-38, %v901
      %v903 = vsel %vm900, %v902, %v898
      %v904 = vmul.f32 %v881, %v903
      %v905 = vrcp.pop %v889
      %v906 = vmul.f32 %v889, %v905
      %v907 = vsub.f32 1.0, %v906
      %v908 = vmul.f32 %v905, %v907
      %v909 = vadd.f32 %v905, %v908
      %vm910 = vweird.f32 %v889
      %vm911 = vweird.f32 %v905
      %vm912 = vmor %vm910, %vm911
      %v913 = vsel %vm912, %v905, %v909
      %v914 = vand.u32 2147483647, %v889
      %vm915 = vcmp.eq.f32.partialorder %v914, 8.507059e+37
      %v916 = vand.u32 %v889, 2147483648
      %v917 = vor.u32 1.1754944e-38, %v916
      %v918 = vsel %vm915, %v917, %v913
      %v919 = vmul.f32 %v883, %v918
      %v920 = vsel %vm710, %v904, 0.0
      %v921 = vsel %vm711, %v919, 0.0
      %922 = vrot.lane.b32.xlu0 %v808, 64
      %v923 = vpop.permute.xlu0 %922
      %v926 = vsel %vm816, %v920, 0
      %928 = vmatpush.msra.mxu0 0.0
      %929 = vmatpush.msra.mxu0 0.0
      %930 = vmatpush.msra.mxu0 0.0
      %931 = vmatpush.msra.mxu0 0.0
      %932 = vmatpush.msra.mxu0 0.0
      %933 = vmatpush.msra.mxu0 0.0
      %934 = vmatpush.msra.mxu0 0.0
      %935 = vmatpush.msra.mxu0 0.0
      %936 = vmatpush.msra.mxu0 0.0
      %937 = vmatpush.msra.mxu0 0.0
      %938 = vmatpush.msra.mxu0 0.0
      %939 = vmatpush.msra.mxu0 0.0
      %940 = vmatpush.msra.mxu0 0.0
      %941 = vmatpush.msra.mxu0 0.0
      %942 = vmatpush.msra.mxu0 0.0
      %943 = vmatpush.msra.mxu0 %v923
      %944 = vmatmul.f32.gmra.mxu0 %v926
      %v945 = vpop.f32.mrf.mxu0
      %v946 = vadd.f32 0.0, %v945
      %947 = vdwg.mxu0
      %948 = vrot.lane.b32.xlu0 %v811, 64
      %v949 = vpop.permute.xlu0 %948
      %v952 = vsel %vm816, %v921, 0
      %954 = vmatpush.msra.mxu0 0.0
      %955 = vmatpush.msra.mxu0 0.0
      %956 = vmatpush.msra.mxu0 0.0
      %957 = vmatpush.msra.mxu0 0.0
      %958 = vmatpush.msra.mxu0 0.0
      %959 = vmatpush.msra.mxu0 0.0
      %960 = vmatpush.msra.mxu0 0.0
      %961 = vmatpush.msra.mxu0 0.0
      %962 = vmatpush.msra.mxu0 0.0
      %963 = vmatpush.msra.mxu0 0.0
      %964 = vmatpush.msra.mxu0 0.0
      %965 = vmatpush.msra.mxu0 0.0
      %966 = vmatpush.msra.mxu0 0.0
      %967 = vmatpush.msra.mxu0 0.0
      %968 = vmatpush.msra.mxu0 0.0
      %969 = vmatpush.msra.mxu0 %v949
      %970 = vmatmul.f32.gmra.mxu0 %v952
      %v971 = vpop.f32.mrf.mxu0
      %v972 = vadd.f32 0.0, %v971
      %973 = vdwg.mxu0
      %v974 = vld [vmem:[%s665] sm:$0xff]
      %975 = vrot.lane.b32.xlu0 %v808, 120
      %v976 = vpop.permute.xlu0 %975
      %977 = vrot.lane.b32.xlu0 %v808, 88
      %v978 = vpop.permute.xlu0 %977
      %v979 = vsel %vm816, %v976, 0
      %v981 = vsel %vm816, %v978, 0
      %983 = vmatpush.xpose.msra.mxu0 0.0
      %984 = vmatpush.xpose.msra.mxu0 0.0
      %985 = vmatpush.xpose.msra.mxu0 0.0
      %986 = vmatpush.xpose.msra.mxu0 0.0
      %987 = vmatpush.xpose.msra.mxu0 0.0
      %988 = vmatpush.xpose.msra.mxu0 0.0
      %989 = vmatpush.xpose.msra.mxu0 0.0
      %990 = vmatpush.xpose.msra.mxu0 0.0
      %991 = vmatpush.xpose.msra.mxu0 0.0
      %992 = vmatpush.xpose.msra.mxu0 0.0
      %993 = vmatpush.xpose.msra.mxu0 0.0
      %994 = vmatpush.xpose.msra.mxu0 0.0
      %995 = vmatpush.xpose.msra.mxu0 0.0
      %996 = vmatpush.xpose.msra.mxu0 0.0
      %997 = vmatpush.xpose.msra.mxu0 0.0
      %998 = vmatpush.xpose.msra.mxu0 %v981
      %999 = vmatmul.f32.gmra.mxu0 %v979
      %v1000 = vpop.f32.mrf.mxu0
      %v1001 = vadd.f32 0.0, %v1000
      %1002 = vdwg.mxu0
      %1003 = vrot.lane.b32.xlu0 %v811, 120
      %v1004 = vpop.permute.xlu0 %1003
      %1005 = vrot.lane.b32.xlu0 %v811, 88
      %v1006 = vpop.permute.xlu0 %1005
      %v1007 = vsel %vm816, %v1004, 0
      %v1009 = vsel %vm816, %v1006, 0
      %1011 = vmatpush.xpose.msra.mxu0 0.0
      %1012 = vmatpush.xpose.msra.mxu0 0.0
      %1013 = vmatpush.xpose.msra.mxu0 0.0
      %1014 = vmatpush.xpose.msra.mxu0 0.0
      %1015 = vmatpush.xpose.msra.mxu0 0.0
      %1016 = vmatpush.xpose.msra.mxu0 0.0
      %1017 = vmatpush.xpose.msra.mxu0 0.0
      %1018 = vmatpush.xpose.msra.mxu0 0.0
      %1019 = vmatpush.xpose.msra.mxu0 0.0
      %1020 = vmatpush.xpose.msra.mxu0 0.0
      %1021 = vmatpush.xpose.msra.mxu0 0.0
      %1022 = vmatpush.xpose.msra.mxu0 0.0
      %1023 = vmatpush.xpose.msra.mxu0 0.0
      %1024 = vmatpush.xpose.msra.mxu0 0.0
      %1025 = vmatpush.xpose.msra.mxu0 0.0
      %1026 = vmatpush.xpose.msra.mxu0 %v1009
      %1027 = vmatmul.f32.gmra.mxu0 %v1007
      %v1028 = vpop.f32.mrf.mxu0
      %v1029 = vadd.f32 0.0, %v1028
      %1030 = vdwg.mxu0
      %v1031 = vmul.f32 %v1001, 0.35355338
      %v1032 = vmul.f32 %v1029, 0.35355338
      %v1033 = vsel %vm710, %v1031, -3.4028235e+38
      %v1034 = vsel %vm711, %v1032, -3.4028235e+38
      %v1035 = vsel %vm816, %v1033, -inf
      %1036 = vmax.xlane.f32.xlu0 %v1035
      %v1037 = vpop.xlane.xlu0 %1036
      %v1038 = vsel %vm816, %v1034, -inf
      %1039 = vmax.xlane.f32.xlu0 %v1038
      %v1040 = vpop.xlane.xlu0 %1039
      %v1041 = vsub.f32 %v1033, %v1037
      %v1042 = vsub.f32 %v1034, %v1040
      %v1043 = vmul.f32 %v1041, 1.442695
      %v1044 = vpow.pop %v1043
      %v1045 = vmul.f32 %v1042, 1.442695
      %v1046 = vpow.pop %v1045
      %v1047 = vsel %vm816, %v1044, 0.0
      %1048 = vadd.xlane.f32.xlu0 %v1047
      %v1049 = vpop.xlane.xlu0 %1048
      %v1050 = vsel %vm816, %v1046, 0.0
      %1051 = vadd.xlane.f32.xlu0 %v1050
      %v1052 = vpop.xlane.xlu0 %1051
      %v1053 = vrcp.pop %v1049
      %v1054 = vmul.f32 %v1049, %v1053
      %v1055 = vsub.f32 1.0, %v1054
      %v1056 = vmul.f32 %v1053, %v1055
      %v1057 = vadd.f32 %v1053, %v1056
      %vm1058 = vweird.f32 %v1049
      %vm1059 = vweird.f32 %v1053
      %vm1060 = vmor %vm1058, %vm1059
      %v1061 = vsel %vm1060, %v1053, %v1057
      %v1062 = vand.u32 2147483647, %v1049
      %vm1063 = vcmp.eq.f32.partialorder %v1062, 8.507059e+37
      %v1064 = vand.u32 %v1049, 2147483648
      %v1065 = vor.u32 1.1754944e-38, %v1064
      %v1066 = vsel %vm1063, %v1065, %v1061
      %v1067 = vmul.f32 %v1044, %v1066
      %v1068 = vrcp.pop %v1052
      %v1069 = vmul.f32 %v1052, %v1068
      %v1070 = vsub.f32 1.0, %v1069
      %v1071 = vmul.f32 %v1068, %v1070
      %v1072 = vadd.f32 %v1068, %v1071
      %vm1073 = vweird.f32 %v1052
      %vm1074 = vweird.f32 %v1068
      %vm1075 = vmor %vm1073, %vm1074
      %v1076 = vsel %vm1075, %v1068, %v1072
      %v1077 = vand.u32 2147483647, %v1052
      %vm1078 = vcmp.eq.f32.partialorder %v1077, 8.507059e+37
      %v1079 = vand.u32 %v1052, 2147483648
      %v1080 = vor.u32 1.1754944e-38, %v1079
      %v1081 = vsel %vm1078, %v1080, %v1076
      %v1082 = vmul.f32 %v1046, %v1081
      %v1083 = vsel %vm710, %v1067, 0.0
      %v1084 = vsel %vm711, %v1082, 0.0
      %1085 = vrot.lane.b32.xlu0 %v808, 56
      %v1086 = vpop.permute.xlu0 %1085
      %v1089 = vsel %vm816, %v1083, 0
      %1091 = vmatpush.msra.mxu0 0.0
      %1092 = vmatpush.msra.mxu0 0.0
      %1093 = vmatpush.msra.mxu0 0.0
      %1094 = vmatpush.msra.mxu0 0.0
      %1095 = vmatpush.msra.mxu0 0.0
      %1096 = vmatpush.msra.mxu0 0.0
      %1097 = vmatpush.msra.mxu0 0.0
      %1098 = vmatpush.msra.mxu0 0.0
      %1099 = vmatpush.msra.mxu0 0.0
      %1100 = vmatpush.msra.mxu0 0.0
      %1101 = vmatpush.msra.mxu0 0.0
      %1102 = vmatpush.msra.mxu0 0.0
      %1103 = vmatpush.msra.mxu0 0.0
      %1104 = vmatpush.msra.mxu0 0.0
      %1105 = vmatpush.msra.mxu0 0.0
      %1106 = vmatpush.msra.mxu0 %v1086
      %1107 = vmatmul.f32.gmra.mxu0 %v1089
      %v1108 = vpop.f32.mrf.mxu0
      %v1109 = vadd.f32 0.0, %v1108
      %1110 = vdwg.mxu0
      %1111 = vrot.lane.b32.xlu0 %v811, 56
      %v1112 = vpop.permute.xlu0 %1111
      %v1115 = vsel %vm816, %v1084, 0
      %1117 = vmatpush.msra.mxu0 0.0
      %1118 = vmatpush.msra.mxu0 0.0
      %1119 = vmatpush.msra.mxu0 0.0
      %1120 = vmatpush.msra.mxu0 0.0
      %1121 = vmatpush.msra.mxu0 0.0
      %1122 = vmatpush.msra.mxu0 0.0
      %1123 = vmatpush.msra.mxu0 0.0
      %1124 = vmatpush.msra.mxu0 0.0
      %1125 = vmatpush.msra.mxu0 0.0
      %1126 = vmatpush.msra.mxu0 0.0
      %1127 = vmatpush.msra.mxu0 0.0
      %1128 = vmatpush.msra.mxu0 0.0
      %1129 = vmatpush.msra.mxu0 0.0
      %1130 = vmatpush.msra.mxu0 0.0
      %1131 = vmatpush.msra.mxu0 0.0
      %1132 = vmatpush.msra.mxu0 %v1112
      %1133 = vmatmul.f32.gmra.mxu0 %v1115
      %v1134 = vpop.f32.mrf.mxu0
      %v1135 = vadd.f32 0.0, %v1134
      %1136 = vdwg.mxu0
      %v1137 = vld [vmem:[%s665 + $0x8] sm:$0xff]
      %v1139 = vsel %vm816, %v1109, 0
      %v1142 = vsel %vm816, %v1135, 0
      %1144 = vmatpush.msra.mxu0 0.0
      %1145 = vmatpush.msra.mxu0 0.0
      %1146 = vmatpush.msra.mxu0 0.0
      %1147 = vmatpush.msra.mxu0 0.0
      %1148 = vmatpush.msra.mxu0 0.0
      %1149 = vmatpush.msra.mxu0 0.0
      %1150 = vmatpush.msra.mxu0 0.0
      %1151 = vmatpush.msra.mxu0 0.0
      %1152 = vmatpush.msra.mxu0 0.0
      %1153 = vmatpush.msra.mxu0 0.0
      %1154 = vmatpush.msra.mxu0 0.0
      %1155 = vmatpush.msra.mxu0 0.0
      %1156 = vmatpush.msra.mxu0 0.0
      %1157 = vmatpush.msra.mxu0 0.0
      %1158 = vmatpush.msra.mxu0 0.0
      %1159 = vmatpush.msra.mxu0 %v1137
      %1160 = vmatmul.f32.gmra.mxu0 %v1139
      %v1161 = vpop.f32.mrf.mxu0
      %v1162 = vadd.f32 0.0, %v1161
      %1163 = vmatmul.f32.gmra.mxu0 %v1142
      %v1164 = vpop.f32.mrf.mxu0
      %v1165 = vadd.f32 0.0, %v1164
      %1166 = vdwg.mxu0
      %v1168 = vsel %vm816, %v946, 0
      %v1171 = vsel %vm816, %v972, 0
      %1173 = vmatpush.msra.mxu0 0.0
      %1174 = vmatpush.msra.mxu0 0.0
      %1175 = vmatpush.msra.mxu0 0.0
      %1176 = vmatpush.msra.mxu0 0.0
      %1177 = vmatpush.msra.mxu0 0.0
      %1178 = vmatpush.msra.mxu0 0.0
      %1179 = vmatpush.msra.mxu0 0.0
      %1180 = vmatpush.msra.mxu0 0.0
      %1181 = vmatpush.msra.mxu0 0.0
      %1182 = vmatpush.msra.mxu0 0.0
      %1183 = vmatpush.msra.mxu0 0.0
      %1184 = vmatpush.msra.mxu0 0.0
      %1185 = vmatpush.msra.mxu0 0.0
      %1186 = vmatpush.msra.mxu0 0.0
      %1187 = vmatpush.msra.mxu0 0.0
      %1188 = vmatpush.msra.mxu0 %v974
      %1189 = vmatmul.f32.gmra.mxu0 %v1168
      %v1190 = vpop.f32.mrf.mxu0
      %v1191 = vadd.f32 %v1162, %v1190
      %1192 = vmatmul.f32.gmra.mxu0 %v1171
      %v1193 = vpop.f32.mrf.mxu0
      %v1194 = vadd.f32 %v1165, %v1193
      %1195 = vdwg.mxu0
      %1196 = vrot.lane.b32.xlu0 %v808, 112
      %v1197 = vpop.permute.xlu0 %1196
      %1198 = vrot.lane.b32.xlu0 %v808, 80
      %v1199 = vpop.permute.xlu0 %1198
      %v1200 = vsel %vm816, %v1197, 0
      %v1202 = vsel %vm816, %v1199, 0
      %1204 = vmatpush.xpose.msra.mxu0 0.0
      %1205 = vmatpush.xpose.msra.mxu0 0.0
      %1206 = vmatpush.xpose.msra.mxu0 0.0
      %1207 = vmatpush.xpose.msra.mxu0 0.0
      %1208 = vmatpush.xpose.msra.mxu0 0.0
      %1209 = vmatpush.xpose.msra.mxu0 0.0
      %1210 = vmatpush.xpose.msra.mxu0 0.0
      %1211 = vmatpush.xpose.msra.mxu0 0.0
      %1212 = vmatpush.xpose.msra.mxu0 0.0
      %1213 = vmatpush.xpose.msra.mxu0 0.0
      %1214 = vmatpush.xpose.msra.mxu0 0.0
      %1215 = vmatpush.xpose.msra.mxu0 0.0
      %1216 = vmatpush.xpose.msra.mxu0 0.0
      %1217 = vmatpush.xpose.msra.mxu0 0.0
      %1218 = vmatpush.xpose.msra.mxu0 0.0
      %1219 = vmatpush.xpose.msra.mxu0 %v1202
      %1220 = vmatmul.f32.gmra.mxu0 %v1200
      %v1221 = vpop.f32.mrf.mxu0
      %v1222 = vadd.f32 0.0, %v1221
      %1223 = vdwg.mxu0
      %1224 = vrot.lane.b32.xlu0 %v811, 112
      %v1225 = vpop.permute.xlu0 %1224
      %1226 = vrot.lane.b32.xlu0 %v811, 80
      %v1227 = vpop.permute.xlu0 %1226
      %v1228 = vsel %vm816, %v1225, 0
      %v1230 = vsel %vm816, %v1227, 0
      %1232 = vmatpush.xpose.msra.mxu0 0.0
      %1233 = vmatpush.xpose.msra.mxu0 0.0
      %1234 = vmatpush.xpose.msra.mxu0 0.0
      %1235 = vmatpush.xpose.msra.mxu0 0.0
      %1236 = vmatpush.xpose.msra.mxu0 0.0
      %1237 = vmatpush.xpose.msra.mxu0 0.0
      %1238 = vmatpush.xpose.msra.mxu0 0.0
      %1239 = vmatpush.xpose.msra.mxu0 0.0
      %1240 = vmatpush.xpose.msra.mxu0 0.0
      %1241 = vmatpush.xpose.msra.mxu0 0.0
      %1242 = vmatpush.xpose.msra.mxu0 0.0
      %1243 = vmatpush.xpose.msra.mxu0 0.0
      %1244 = vmatpush.xpose.msra.mxu0 0.0
      %1245 = vmatpush.xpose.msra.mxu0 0.0
      %1246 = vmatpush.xpose.msra.mxu0 0.0
      %1247 = vmatpush.xpose.msra.mxu0 %v1230
      %1248 = vmatmul.f32.gmra.mxu0 %v1228
      %v1249 = vpop.f32.mrf.mxu0
      %v1250 = vadd.f32 0.0, %v1249
      %1251 = vdwg.mxu0
      %v1252 = vmul.f32 %v1222, 0.35355338
      %v1253 = vmul.f32 %v1250, 0.35355338
      %v1254 = vsel %vm710, %v1252, -3.4028235e+38
      %v1255 = vsel %vm711, %v1253, -3.4028235e+38
      %v1256 = vsel %vm816, %v1254, -inf
      %1257 = vmax.xlane.f32.xlu0 %v1256
      %v1258 = vpop.xlane.xlu0 %1257
      %v1259 = vsel %vm816, %v1255, -inf
      %1260 = vmax.xlane.f32.xlu0 %v1259
      %v1261 = vpop.xlane.xlu0 %1260
      %v1262 = vsub.f32 %v1254, %v1258
      %v1263 = vsub.f32 %v1255, %v1261
      %v1264 = vmul.f32 %v1262, 1.442695
      %v1265 = vpow.pop %v1264
      %v1266 = vmul.f32 %v1263, 1.442695
      %v1267 = vpow.pop %v1266
      %v1268 = vsel %vm816, %v1265, 0.0
      %1269 = vadd.xlane.f32.xlu0 %v1268
      %v1270 = vpop.xlane.xlu0 %1269
      %v1271 = vsel %vm816, %v1267, 0.0
      %1272 = vadd.xlane.f32.xlu0 %v1271
      %v1273 = vpop.xlane.xlu0 %1272
      %v1274 = vrcp.pop %v1270
      %v1275 = vmul.f32 %v1270, %v1274
      %v1276 = vsub.f32 1.0, %v1275
      %v1277 = vmul.f32 %v1274, %v1276
      %v1278 = vadd.f32 %v1274, %v1277
      %vm1279 = vweird.f32 %v1270
      %vm1280 = vweird.f32 %v1274
      %vm1281 = vmor %vm1279, %vm1280
      %v1282 = vsel %vm1281, %v1274, %v1278
      %v1283 = vand.u32 2147483647, %v1270
      %vm1284 = vcmp.eq.f32.partialorder %v1283, 8.507059e+37
      %v1285 = vand.u32 %v1270, 2147483648
      %v1286 = vor.u32 1.1754944e-38, %v1285
      %v1287 = vsel %vm1284, %v1286, %v1282
      %v1288 = vmul.f32 %v1265, %v1287
      %v1289 = vrcp.pop %v1273
      %v1290 = vmul.f32 %v1273, %v1289
      %v1291 = vsub.f32 1.0, %v1290
      %v1292 = vmul.f32 %v1289, %v1291
      %v1293 = vadd.f32 %v1289, %v1292
      %vm1294 = vweird.f32 %v1273
      %vm1295 = vweird.f32 %v1289
      %vm1296 = vmor %vm1294, %vm1295
      %v1297 = vsel %vm1296, %v1289, %v1293
      %v1298 = vand.u32 2147483647, %v1273
      %vm1299 = vcmp.eq.f32.partialorder %v1298, 8.507059e+37
      %v1300 = vand.u32 %v1273, 2147483648
      %v1301 = vor.u32 1.1754944e-38, %v1300
      %v1302 = vsel %vm1299, %v1301, %v1297
      %v1303 = vmul.f32 %v1267, %v1302
      %v1304 = vsel %vm710, %v1288, 0.0
      %v1305 = vsel %vm711, %v1303, 0.0
      %1306 = vrot.lane.b32.xlu0 %v808, 48
      %v1307 = vpop.permute.xlu0 %1306
      %v1310 = vsel %vm816, %v1304, 0
      %1312 = vmatpush.msra.mxu0 0.0
      %1313 = vmatpush.msra.mxu0 0.0
      %1314 = vmatpush.msra.mxu0 0.0
      %1315 = vmatpush.msra.mxu0 0.0
      %1316 = vmatpush.msra.mxu0 0.0
      %1317 = vmatpush.msra.mxu0 0.0
      %1318 = vmatpush.msra.mxu0 0.0
      %1319 = vmatpush.msra.mxu0 0.0
      %1320 = vmatpush.msra.mxu0 0.0
      %1321 = vmatpush.msra.mxu0 0.0
      %1322 = vmatpush.msra.mxu0 0.0
      %1323 = vmatpush.msra.mxu0 0.0
      %1324 = vmatpush.msra.mxu0 0.0
      %1325 = vmatpush.msra.mxu0 0.0
      %1326 = vmatpush.msra.mxu0 0.0
      %1327 = vmatpush.msra.mxu0 %v1307
      %1328 = vmatmul.f32.gmra.mxu0 %v1310
      %v1329 = vpop.f32.mrf.mxu0
      %v1330 = vadd.f32 0.0, %v1329
      %1331 = vdwg.mxu0
      %1332 = vrot.lane.b32.xlu0 %v811, 48
      %v1333 = vpop.permute.xlu0 %1332
      %v1336 = vsel %vm816, %v1305, 0
      %1338 = vmatpush.msra.mxu0 0.0
      %1339 = vmatpush.msra.mxu0 0.0
      %1340 = vmatpush.msra.mxu0 0.0
      %1341 = vmatpush.msra.mxu0 0.0
      %1342 = vmatpush.msra.mxu0 0.0
      %1343 = vmatpush.msra.mxu0 0.0
      %1344 = vmatpush.msra.mxu0 0.0
      %1345 = vmatpush.msra.mxu0 0.0
      %1346 = vmatpush.msra.mxu0 0.0
      %1347 = vmatpush.msra.mxu0 0.0
      %1348 = vmatpush.msra.mxu0 0.0
      %1349 = vmatpush.msra.mxu0 0.0
      %1350 = vmatpush.msra.mxu0 0.0
      %1351 = vmatpush.msra.mxu0 0.0
      %1352 = vmatpush.msra.mxu0 0.0
      %1353 = vmatpush.msra.mxu0 %v1333
      %1354 = vmatmul.f32.gmra.mxu0 %v1336
      %v1355 = vpop.f32.mrf.mxu0
      %v1356 = vadd.f32 0.0, %v1355
      %1357 = vdwg.mxu0
      %v1358 = vld [vmem:[%s665 + $0x10] sm:$0xff]
      %v1360 = vsel %vm816, %v1330, 0
      %v1363 = vsel %vm816, %v1356, 0
      %1365 = vmatpush.msra.mxu0 0.0
      %1366 = vmatpush.msra.mxu0 0.0
      %1367 = vmatpush.msra.mxu0 0.0
      %1368 = vmatpush.msra.mxu0 0.0
      %1369 = vmatpush.msra.mxu0 0.0
      %1370 = vmatpush.msra.mxu0 0.0
      %1371 = vmatpush.msra.mxu0 0.0
      %1372 = vmatpush.msra.mxu0 0.0
      %1373 = vmatpush.msra.mxu0 0.0
      %1374 = vmatpush.msra.mxu0 0.0
      %1375 = vmatpush.msra.mxu0 0.0
      %1376 = vmatpush.msra.mxu0 0.0
      %1377 = vmatpush.msra.mxu0 0.0
      %1378 = vmatpush.msra.mxu0 0.0
      %1379 = vmatpush.msra.mxu0 0.0
      %1380 = vmatpush.msra.mxu0 %v1358
      %1381 = vmatmul.f32.gmra.mxu0 %v1360
      %v1382 = vpop.f32.mrf.mxu0
      %v1383 = vadd.f32 0.0, %v1382
      %1384 = vmatmul.f32.gmra.mxu0 %v1363
      %v1385 = vpop.f32.mrf.mxu0
      %v1386 = vadd.f32 0.0, %v1385
      %1387 = vdwg.mxu0
      %v1388 = vadd.f32 %v1191, %v1383
      %v1389 = vadd.f32 %v1194, %v1386
      %1390 = vrot.lane.b32.xlu0 %v808, 104
      %v1391 = vpop.permute.xlu0 %1390
      %1392 = vrot.lane.b32.xlu0 %v808, 72
      %v1393 = vpop.permute.xlu0 %1392
      %v1394 = vsel %vm816, %v1391, 0
      %v1396 = vsel %vm816, %v1393, 0
      %1398 = vmatpush.xpose.msra.mxu0 0.0
      %1399 = vmatpush.xpose.msra.mxu0 0.0
      %1400 = vmatpush.xpose.msra.mxu0 0.0
      %1401 = vmatpush.xpose.msra.mxu0 0.0
      %1402 = vmatpush.xpose.msra.mxu0 0.0
      %1403 = vmatpush.xpose.msra.mxu0 0.0
      %1404 = vmatpush.xpose.msra.mxu0 0.0
      %1405 = vmatpush.xpose.msra.mxu0 0.0
      %1406 = vmatpush.xpose.msra.mxu0 0.0
      %1407 = vmatpush.xpose.msra.mxu0 0.0
      %1408 = vmatpush.xpose.msra.mxu0 0.0
      %1409 = vmatpush.xpose.msra.mxu0 0.0
      %1410 = vmatpush.xpose.msra.mxu0 0.0
      %1411 = vmatpush.xpose.msra.mxu0 0.0
      %1412 = vmatpush.xpose.msra.mxu0 0.0
      %1413 = vmatpush.xpose.msra.mxu0 %v1396
      %1414 = vmatmul.f32.gmra.mxu0 %v1394
      %v1415 = vpop.f32.mrf.mxu0
      %v1416 = vadd.f32 0.0, %v1415
      %1417 = vdwg.mxu0
      %1418 = vrot.lane.b32.xlu0 %v811, 104
      %v1419 = vpop.permute.xlu0 %1418
      %1420 = vrot.lane.b32.xlu0 %v811, 72
      %v1421 = vpop.permute.xlu0 %1420
      %v1422 = vsel %vm816, %v1419, 0
      %v1424 = vsel %vm816, %v1421, 0
      %1426 = vmatpush.xpose.msra.mxu0 0.0
      %1427 = vmatpush.xpose.msra.mxu0 0.0
      %1428 = vmatpush.xpose.msra.mxu0 0.0
      %1429 = vmatpush.xpose.msra.mxu0 0.0
      %1430 = vmatpush.xpose.msra.mxu0 0.0
      %1431 = vmatpush.xpose.msra.mxu0 0.0
      %1432 = vmatpush.xpose.msra.mxu0 0.0
      %1433 = vmatpush.xpose.msra.mxu0 0.0
      %1434 = vmatpush.xpose.msra.mxu0 0.0
      %1435 = vmatpush.xpose.msra.mxu0 0.0
      %1436 = vmatpush.xpose.msra.mxu0 0.0
      %1437 = vmatpush.xpose.msra.mxu0 0.0
      %1438 = vmatpush.xpose.msra.mxu0 0.0
      %1439 = vmatpush.xpose.msra.mxu0 0.0
      %1440 = vmatpush.xpose.msra.mxu0 0.0
      %1441 = vmatpush.xpose.msra.mxu0 %v1424
      %1442 = vmatmul.f32.gmra.mxu0 %v1422
      %v1443 = vpop.f32.mrf.mxu0
      %v1444 = vadd.f32 0.0, %v1443
      %1445 = vdwg.mxu0
      %v1446 = vmul.f32 %v1416, 0.35355338
      %v1447 = vmul.f32 %v1444, 0.35355338
      %v1448 = vsel %vm710, %v1446, -3.4028235e+38
      %v1449 = vsel %vm711, %v1447, -3.4028235e+38
      %v1450 = vsel %vm816, %v1448, -inf
      %1451 = vmax.xlane.f32.xlu0 %v1450
      %v1452 = vpop.xlane.xlu0 %1451
      %v1453 = vsel %vm816, %v1449, -inf
      %1454 = vmax.xlane.f32.xlu0 %v1453
      %v1455 = vpop.xlane.xlu0 %1454
      %v1456 = vsub.f32 %v1448, %v1452
      %v1457 = vsub.f32 %v1449, %v1455
      %v1458 = vmul.f32 %v1456, 1.442695
      %v1459 = vpow.pop %v1458
      %v1460 = vmul.f32 %v1457, 1.442695
      %v1461 = vpow.pop %v1460
      %v1462 = vsel %vm816, %v1459, 0.0
      %1463 = vadd.xlane.f32.xlu0 %v1462
      %v1464 = vpop.xlane.xlu0 %1463
      %v1465 = vsel %vm816, %v1461, 0.0
      %1466 = vadd.xlane.f32.xlu0 %v1465
      %v1467 = vpop.xlane.xlu0 %1466
      %v1468 = vrcp.pop %v1464
      %v1469 = vmul.f32 %v1464, %v1468
      %v1470 = vsub.f32 1.0, %v1469
      %v1471 = vmul.f32 %v1468, %v1470
      %v1472 = vadd.f32 %v1468, %v1471
      %vm1473 = vweird.f32 %v1464
      %vm1474 = vweird.f32 %v1468
      %vm1475 = vmor %vm1473, %vm1474
      %v1476 = vsel %vm1475, %v1468, %v1472
      %v1477 = vand.u32 2147483647, %v1464
      %vm1478 = vcmp.eq.f32.partialorder %v1477, 8.507059e+37
      %v1479 = vand.u32 %v1464, 2147483648
      %v1480 = vor.u32 1.1754944e-38, %v1479
      %v1481 = vsel %vm1478, %v1480, %v1476
      %v1482 = vmul.f32 %v1459, %v1481
      %v1483 = vrcp.pop %v1467
      %v1484 = vmul.f32 %v1467, %v1483
      %v1485 = vsub.f32 1.0, %v1484
      %v1486 = vmul.f32 %v1483, %v1485
      %v1487 = vadd.f32 %v1483, %v1486
      %vm1488 = vweird.f32 %v1467
      %vm1489 = vweird.f32 %v1483
      %vm1490 = vmor %vm1488, %vm1489
      %v1491 = vsel %vm1490, %v1483, %v1487
      %v1492 = vand.u32 2147483647, %v1467
      %vm1493 = vcmp.eq.f32.partialorder %v1492, 8.507059e+37
      %v1494 = vand.u32 %v1467, 2147483648
      %v1495 = vor.u32 1.1754944e-38, %v1494
      %v1496 = vsel %vm1493, %v1495, %v1491
      %v1497 = vmul.f32 %v1461, %v1496
      %v1498 = vsel %vm710, %v1482, 0.0
      %v1499 = vsel %vm711, %v1497, 0.0
      %1500 = vrot.lane.b32.xlu0 %v808, 40
      %v1501 = vpop.permute.xlu0 %1500
      %v1504 = vsel %vm816, %v1498, 0
      %1506 = vmatpush.msra.mxu0 0.0
      %1507 = vmatpush.msra.mxu0 0.0
      %1508 = vmatpush.msra.mxu0 0.0
      %1509 = vmatpush.msra.mxu0 0.0
      %1510 = vmatpush.msra.mxu0 0.0
      %1511 = vmatpush.msra.mxu0 0.0
      %1512 = vmatpush.msra.mxu0 0.0
      %1513 = vmatpush.msra.mxu0 0.0
      %1514 = vmatpush.msra.mxu0 0.0
      %1515 = vmatpush.msra.mxu0 0.0
      %1516 = vmatpush.msra.mxu0 0.0
      %1517 = vmatpush.msra.mxu0 0.0
      %1518 = vmatpush.msra.mxu0 0.0
      %1519 = vmatpush.msra.mxu0 0.0
      %1520 = vmatpush.msra.mxu0 0.0
      %1521 = vmatpush.msra.mxu0 %v1501
      %1522 = vmatmul.f32.gmra.mxu0 %v1504
      %v1523 = vpop.f32.mrf.mxu0
      %v1524 = vadd.f32 0.0, %v1523
      %1525 = vdwg.mxu0
      %1526 = vrot.lane.b32.xlu0 %v811, 40
      %v1527 = vpop.permute.xlu0 %1526
      %v1530 = vsel %vm816, %v1499, 0
      %1532 = vmatpush.msra.mxu0 0.0
      %1533 = vmatpush.msra.mxu0 0.0
      %1534 = vmatpush.msra.mxu0 0.0
      %1535 = vmatpush.msra.mxu0 0.0
      %1536 = vmatpush.msra.mxu0 0.0
      %1537 = vmatpush.msra.mxu0 0.0
      %1538 = vmatpush.msra.mxu0 0.0
      %1539 = vmatpush.msra.mxu0 0.0
      %1540 = vmatpush.msra.mxu0 0.0
      %1541 = vmatpush.msra.mxu0 0.0
      %1542 = vmatpush.msra.mxu0 0.0
      %1543 = vmatpush.msra.mxu0 0.0
      %1544 = vmatpush.msra.mxu0 0.0
      %1545 = vmatpush.msra.mxu0 0.0
      %1546 = vmatpush.msra.mxu0 0.0
      %1547 = vmatpush.msra.mxu0 %v1527
      %1548 = vmatmul.f32.gmra.mxu0 %v1530
      %v1549 = vpop.f32.mrf.mxu0
      %v1550 = vadd.f32 0.0, %v1549
      %1551 = vdwg.mxu0
      %v1552 = vld [vmem:[%s665 + $0x18] sm:$0xff]
      %v1554 = vsel %vm816, %v1524, 0
      %v1557 = vsel %vm816, %v1550, 0
      %1559 = vmatpush.msra.mxu0 0.0
      %1560 = vmatpush.msra.mxu0 0.0
      %1561 = vmatpush.msra.mxu0 0.0
      %1562 = vmatpush.msra.mxu0 0.0
      %1563 = vmatpush.msra.mxu0 0.0
      %1564 = vmatpush.msra.mxu0 0.0
      %1565 = vmatpush.msra.mxu0 0.0
      %1566 = vmatpush.msra.mxu0 0.0
      %1567 = vmatpush.msra.mxu0 0.0
      %1568 = vmatpush.msra.mxu0 0.0
      %1569 = vmatpush.msra.mxu0 0.0
      %1570 = vmatpush.msra.mxu0 0.0
      %1571 = vmatpush.msra.mxu0 0.0
      %1572 = vmatpush.msra.mxu0 0.0
      %1573 = vmatpush.msra.mxu0 0.0
      %1574 = vmatpush.msra.mxu0 %v1552
      %1575 = vmatmul.f32.gmra.mxu0 %v1554
      %v1576 = vpop.f32.mrf.mxu0
      %v1577 = vadd.f32 0.0, %v1576
      %1578 = vmatmul.f32.gmra.mxu0 %v1557
      %v1579 = vpop.f32.mrf.mxu0
      %v1580 = vadd.f32 0.0, %v1579
      %1581 = vdwg.mxu0
      %v1582 = vadd.f32 %v1388, %v1577
      %v1583 = vadd.f32 %v1389, %v1580
      %v1584 = vadd.f32 %v706, %v1582
      %v1585 = vadd.f32 %v707, %v1583
      %v1586 = vld [vmem:[%s668] sm:$0x1]
      %v1588 = vperm.slane %v1586, 0
      %v1590 = vadd.f32 %v1584, %v1588
      %v1591 = vadd.f32 %v1585, %v1588
      %v1592 = vld [vmem:[%s671] sm:$0x1]
      %v1593 = vld [vmem:[%s674] sm:$0x1]
      %v1594 = vsel %vm714, %v1590, 0.0
      %1595 = vadd.xlane.f32.xlu0 %v1594
      %v1596 = vpop.xlane.xlu0 %1595
      %v1597 = vsel %vm714, %v1591, 0.0
      %1598 = vadd.xlane.f32.xlu0 %v1597
      %v1599 = vpop.xlane.xlu0 %1598
      %v1600 = vmul.f32 %v1596, %v727
      %v1601 = vmul.f32 %v1599, %v727
      %v1602 = vsub.f32 %v1590, %v1600
      %v1603 = vsub.f32 %v1591, %v1601
      %v1604 = vmul.f32 %v1602, %v1602
      %v1605 = vmul.f32 %v1603, %v1603
      %v1606 = vsel %vm714, %v1604, 0.0
      %1607 = vadd.xlane.f32.xlu0 %v1606
      %v1608 = vpop.xlane.xlu0 %1607
      %v1609 = vsel %vm714, %v1605, 0.0
      %1610 = vadd.xlane.f32.xlu0 %v1609
      %v1611 = vpop.xlane.xlu0 %1610
      %v1612 = vmul.f32 %v1608, %v727
      %v1613 = vmul.f32 %v1611, %v727
      %v1614 = vadd.f32 %v1612, 1e-12
      %v1615 = vadd.f32 %v1613, 1e-12
      %v1616 = vrsqrt.pop %v1614
      %v1617 = vmul.f32 %v1616, %v1614
      %v1618 = vmul.f32 %v1617, %v1616
      %v1619 = vmul.f32 0.5, %v1618
      %v1620 = vsub.f32 1.5, %v1619
      %v1621 = vmul.f32 %v1616, %v1620
      %vm1622 = vweird.f32 %v1614
      %vm1623 = vweird.f32 %v1616
      %vm1624 = vmor %vm1622, %vm1623
      %v1625 = vsel %vm1624, %v1616, %v1621
      %v1626 = vrsqrt.pop %v1615
      %v1627 = vmul.f32 %v1626, %v1615
      %v1628 = vmul.f32 %v1627, %v1626
      %v1629 = vmul.f32 0.5, %v1628
      %v1630 = vsub.f32 1.5, %v1629
      %v1631 = vmul.f32 %v1626, %v1630
      %vm1632 = vweird.f32 %v1615
      %vm1633 = vweird.f32 %v1626
      %vm1634 = vmor %vm1632, %vm1633
      %v1635 = vsel %vm1634, %v1626, %v1631
      %v1636 = vmul.f32 %v1602, %v1625
      %v1637 = vmul.f32 %v1603, %v1635
      %v1639 = vperm.slane %v1592, 0
      %v1641 = vmul.f32 %v1636, %v1639
      %v1642 = vmul.f32 %v1637, %v1639
      %v1644 = vperm.slane %v1593, 0
      %v1646 = vadd.f32 %v1641, %v1644
      %v1647 = vadd.f32 %v1642, %v1644
      %v1648 = vld [vmem:[%s679] sm:$0xff]
      %v1649 = vld [vmem:[%s679 + $0x8] sm:$0xff]
      %v1650 = vld [vmem:[%s679 + $0x10] sm:$0xff]
      %v1651 = vld [vmem:[%s679 + $0x18] sm:$0xff]
      %v1652 = vld [vmem:[%s682] sm:$0x1]
      %v1654 = vperm.slane %v1652, 0
      %v1657 = vsel %vm714, %v1646, 0
      %v1660 = vsel %vm714, %v1647, 0
      %1662 = vmatpush.msra.mxu0 0.0
      %1663 = vmatpush.msra.mxu0 0.0
      %1664 = vmatpush.msra.mxu0 0.0
      %1665 = vmatpush.msra.mxu0 0.0
      %1666 = vmatpush.msra.mxu0 0.0
      %1667 = vmatpush.msra.mxu0 0.0
      %1668 = vmatpush.msra.mxu0 0.0
      %1669 = vmatpush.msra.mxu0 0.0
      %1670 = vmatpush.msra.mxu0 0.0
      %1671 = vmatpush.msra.mxu0 0.0
      %1672 = vmatpush.msra.mxu0 0.0
      %1673 = vmatpush.msra.mxu0 0.0
      %1674 = vmatpush.msra.mxu0 %v1651
      %1675 = vmatpush.msra.mxu0 %v1650
      %1676 = vmatpush.msra.mxu0 %v1649
      %1677 = vmatpush.msra.mxu0 %v1648
      %1678 = vmatmul.f32.gmra.mxu0 %v1657
      %v1679 = vpop.f32.mrf.mxu0
      %v1680 = vadd.f32 %v1654, %v1679
      %1681 = vmatmul.f32.gmra.mxu0 %v1660
      %v1682 = vpop.f32.mrf.mxu0
      %v1683 = vadd.f32 %v1654, %v1682
      %1684 = vdwg.mxu0
      %v1685 = vmax.f32 %v1680, 0.0
      %v1686 = vmax.f32 %v1683, 0.0
      %v1687 = vld [vmem:[%s687] sm:$0xff]
      %v1688 = vld [vmem:[%s687 + $0x8] sm:$0xff]
      %v1689 = vld [vmem:[%s687 + $0x10] sm:$0xff]
      %v1690 = vld [vmem:[%s687 + $0x18] sm:$0xff]
      %v1691 = vld [vmem:[%s687 + $0x20] sm:$0xff]
      %v1692 = vld [vmem:[%s687 + $0x28] sm:$0xff]
      %v1693 = vld [vmem:[%s687 + $0x30] sm:$0xff]
      %v1694 = vld [vmem:[%s687 + $0x38] sm:$0xff]
      %vm1695 = vcmask 523264
      %v1697 = vsel %vm1695, %v1685, 0
      %v1700 = vsel %vm1695, %v1686, 0
      %1702 = vmatpush.msra.mxu0 0.0
      %1703 = vmatpush.msra.mxu0 0.0
      %1704 = vmatpush.msra.mxu0 0.0
      %1705 = vmatpush.msra.mxu0 0.0
      %1706 = vmatpush.msra.mxu0 0.0
      %1707 = vmatpush.msra.mxu0 0.0
      %1708 = vmatpush.msra.mxu0 0.0
      %1709 = vmatpush.msra.mxu0 0.0
      %1710 = vmatpush.msra.mxu0 %v1694
      %1711 = vmatpush.msra.mxu0 %v1693
      %1712 = vmatpush.msra.mxu0 %v1692
      %1713 = vmatpush.msra.mxu0 %v1691
      %1714 = vmatpush.msra.mxu0 %v1690
      %1715 = vmatpush.msra.mxu0 %v1689
      %1716 = vmatpush.msra.mxu0 %v1688
      %1717 = vmatpush.msra.mxu0 %v1687
      %1718 = vmatmul.f32.gmra.mxu0 %v1697
      %v1719 = vpop.f32.mrf.mxu0
      %v1720 = vadd.f32 0.0, %v1719
      %1721 = vmatmul.f32.gmra.mxu0 %v1700
      %v1722 = vpop.f32.mrf.mxu0
      %v1723 = vadd.f32 0.0, %v1722
      %1724 = vdwg.mxu0
      %v1725 = vadd.f32 %v1590, %v1720
      %v1726 = vadd.f32 %v1591, %v1723
      %v1727 = vld [vmem:[%s690] sm:$0x1]
      %v1729 = vperm.slane %v1727, 0
      %v1731 = vadd.f32 %v1725, %v1729
      %v1732 = vadd.f32 %v1726, %v1729
      %1733 = vst.msk [vmem:[%s695] sm:$0xff] %vm714, %v1731
      %1734 = vst.msk [vmem:[%s695 + $0x8] sm:$0xff] %vm714, %v1732
      %s1735 = smul.u32 2, %s29
      %p1736 = scmp.lt.s32.totalorder %s1735, 1
      %s1737 = scalar_select %p1736, %s1735, 1
      %s1738 = smul.addr %s1737, 8
      %s1739 = scalar_lea.vmem %s14, %s1738
      // Predicated region
      $region81: #{decoder_forward.2} parent=75 // pred_check
        %p1740 = pneg %p419
      $region82: #{decoder_forward.2} parent=75 // pred_check_branch
        %1742 = sbr.rel (%p1740) target = $region84
      $region83: #{decoder_forward.2} parent=75 // pred_region
        %s1743 = smul.u32 2, %s29
      $region84: #{decoder_forward.2} parent=75 // pred_fallthru
        _
      // Predicated region
      $region85: #{decoder_forward.2} parent=75 // pred_check
        %p1744 = pneg %p419
      $region86: #{decoder_forward.2} parent=75 // pred_check_branch
        %1746 = sbr.rel (%p1744) target = $region88
      $region87: #{decoder_forward.2} parent=75 // pred_region
        %s1747 = smul.u32 2, %s29
        %p1748 = scmp.lt.s32.totalorder %s1747, 1
        %s1749 = scalar_select %p1748, %s1747, 1
        %s1750 = smul.addr %s1749, 8
        %s1751 = scalar_lea.vmem %s14, %s1750
      $region88: #{decoder_forward.2} parent=75 // pred_fallthru
        _
    $region76: #{decoder_forward.2} parent=5 // pred_fallthru
      _
    %p1752 = scmp.le.s32.totalorder 2, %s20
    // Predicated region
    $region89: #{decoder_forward.2} parent=5 // pred_check
      %p1753 = pneg %p1752
    $region90: #{decoder_forward.2} parent=5 // pred_check_branch
      %1755 = sbr.rel (%p1753) target = $region92
    $region91: #{decoder_forward.2} parent=5 // pred_region
      %s1756 = ssub.s32 %s20, 2
    $region92: #{decoder_forward.2} parent=5 // pred_fallthru
      _
  $region6: #{decoder_forward.2} parent=0 // loop_footer
    %s24 = sadd.s32 1, %s20
  $region7: #{decoder_forward.2} parent=0 // loop_footer_branch
    %19 = sbr.rel target = $region3
  $region8: #{decoder_forward.2} parent=0 // loop_exit
    _

</llo_original>
